<compile_context>
chip_gen: v7x
topology: tpu7x:2x2x1
jax: 0.10.0
libtpu: 0.0.40
codegen_flags: <defaults>
</compile_context>

<pallas_src>
import jax
import jax.numpy as jnp
from jax import lax
from jax.experimental import pallas as pl
from jax.experimental.pallas import tpu as pltpu

# ----------------------------- configuration -------------------------------
B = 2              # batch
C = 3              # image channels (PyTorch forward contract)
IMG = 16           # image height/width (scaled down from 384)
PATCH = 8          # patch size (scaled down from 16)
HIDDEN = 32        # ViT hidden size (scaled down from 768)
HEADS = 4
HEAD_DIM = HIDDEN // HEADS
LAYERS = 2         # scaled down from 12
MLP = 4 * HIDDEN
GRID_HW = IMG // PATCH
NUM_PATCHES = GRID_HW * GRID_HW
SEQ = NUM_PATCHES + 1          # 5 real tokens (patches + [CLS])
SEQ_PAD = 8                    # padded to a sublane boundary (perf review item 2)
ROWS = B * SEQ_PAD             # activation slab rows (16)
CPP = C * PATCH * PATCH        # flattened patch length (192)
LN_EPS = 1e-6
NUM_CLASSES = 2
OUT_PAD = 128                  # lane-dense padded logits width (cols 0:2 real)
HEAD_ROWS = 8                  # sublane-aligned row count for the cull head/output
LOG2_SEQ_PAD = 3

BF16 = jnp.bfloat16
F32 = jnp.float32

# packed small-vector (vecs32) row layout: per layer stride 6, then final-LN rows.
_V_LN1_G, _V_LN1_B, _V_BO, _V_LN2_G, _V_LN2_B, _V_B2 = range(6)
_V_PER_LAYER = 6
_V_FLN_G = LAYERS * _V_PER_LAYER
_V_FLN_B = _V_FLN_G + 1
_V_ROWS = _V_FLN_B + 1


# ----------------------------- in-kernel helpers ----------------------------

def _ln(x, g, b):
    """Row-wise LayerNorm, f32 statistics (biased variance, matches PyTorch)."""
    mean = jnp.mean(x, axis=-1, keepdims=True)
    cent = x - mean
    var = jnp.mean(cent * cent, axis=-1, keepdims=True)
    return cent * lax.rsqrt(var + LN_EPS) * g + b


def _gelu(x):
    # tanh-approx GELU (HF ViT uses exact erf GELU; difference < 1e-3); EUP tanh.
    return 0.5 * x * (1.0 + jnp.tanh(0.7978845608028654 * (x + 0.044715 * x * x * x)))


def _dot(x_f32, w_bf16):
    """bf16 MXU matmul with f32 accumulation."""
    return jnp.dot(x_f32.astype(BF16), w_bf16, preferred_element_type=F32)


# ------------------------------- fused kernel -------------------------------

def _vit_cull_kernel(
    patches_ref, patch_w_ref, cls_pos_ref, vecs_ref,
    bqkv_ref, b1_ref, wqkv_ref, wo_ref, w1_ref, w2_ref,
    hw1_ref, hw2_ref, hw3_ref, hb_ref,
    out_ref,
):
    def vrow(i):                      # (1, HIDDEN) packed small vector
        return vecs_ref[i:i + 1, :]

    # --- patch embedding + [CLS] + positional embeddings (no scatter) --------
    # CLS/pad rows of `patches` are zero; cls_pos carries cls_token+pos[0] on CLS
    # rows, pos[1:]+patch_bias on patch rows, zeros on pad rows.
    x = _dot(patches_ref[...], patch_w_ref[...]) + cls_pos_ref[...]    # (ROWS, H) f32

    # Additive attention bias, built once: a key is visible iff it belongs to the
    # same image as the query AND is a real (non-pad) token. This both masks the
    # 3 pad rows per image and makes one (ROWS, ROWS) matmul equivalent to batched
    # per-image attention (cross-image blocks are -inf'd).
    q_idx = lax.broadcasted_iota(jnp.int32, (ROWS, ROWS), 0)
    k_idx = lax.broadcasted_iota(jnp.int32, (ROWS, ROWS), 1)
    same_img = jnp.right_shift(q_idx, LOG2_SEQ_PAD) == jnp.right_shift(k_idx, LOG2_SEQ_PAD)
    key_real = jnp.bitwise_and(k_idx, SEQ_PAD - 1) < SEQ
    attn_bias = jnp.where(same_img & key_real, 0.0, -1e30).astype(F32)  # (ROWS, ROWS)

    for l in range(LAYERS):
        base = l * _V_PER_LAYER
        # ---- multi-head self-attention (pre-LN) ----
        hln = _ln(x, vrow(base + _V_LN1_G), vrow(base + _V_LN1_B))
        # fused QKV projection; 1/sqrt(head_dim) is folded into the Q weight columns
        qkv = _dot(hln, wqkv_ref[l]) + bqkv_ref[l:l + 1, :]            # (ROWS, 3H)
        head_outs = []
        for hh in range(HEADS):
            c = hh * HEAD_DIM
            qh = qkv[:, c:c + HEAD_DIM].astype(BF16)                   # (ROWS, D)
            kh = qkv[:, HIDDEN + c:HIDDEN + c + HEAD_DIM].astype(BF16)
            vh = qkv[:, 2 * HIDDEN + c:2 * HIDDEN + c + HEAD_DIM].astype(BF16)
            s = jnp.einsum("qd,kd->qk", qh, kh,
                           preferred_element_type=F32) + attn_bias     # (ROWS, ROWS)
            s = s - jnp.max(s, axis=-1, keepdims=True)
            p = jnp.exp(s)
            p = p * pl.reciprocal(jnp.sum(p, axis=-1, keepdims=True), approx=True)
            head_outs.append(jnp.dot(p.astype(BF16), vh,
                                     preferred_element_type=F32))      # (ROWS, D)
        attn = jnp.concatenate(head_outs, axis=-1)                     # (ROWS, H) value
        x = x + _dot(attn, wo_ref[l]) + vrow(base + _V_BO)   # residual (dropout=id)

        # ---- MLP (pre-LN) ----
        hln = _ln(x, vrow(base + _V_LN2_G), vrow(base + _V_LN2_B))
        m = _gelu(_dot(hln, w1_ref[l]) + b1_ref[l:l + 1, :])
        x = x + _dot(m, w2_ref[l]) + vrow(base + _V_B2)      # residual

    # ---- gather CLS rows (sublane-aligned at b*SEQ_PAD), final LN, cull head ----
    # Everything below is strictly row-wise, so operating on the gathered CLS rows
    # is exactly equivalent to the PyTorch "head(last_hidden_state[:, 0])".
    cls = jnp.concatenate(
        [x[b * SEQ_PAD:b * SEQ_PAD + 1, :] for b in range(B)]
        + [jnp.zeros((HEAD_ROWS - B, HIDDEN), F32)], axis=0)           # (8, H)
    xf = _ln(cls, vrow(_V_FLN_G), vrow(_V_FLN_B))
    y = jnp.maximum(_dot(xf, hw1_ref[...]) + hb_ref[:, 0:512], 0.0)
    y = jnp.maximum(_dot(y, hw2_ref[...]) + hb_ref[:, 512:768], 0.0)
    logits = _dot(y, hw3_ref[...]) + hb_ref[:, 768:768 + OUT_PAD]      # (8, 128)
    out_ref[...] = logits.astype(out_ref.dtype)


# --------------------------- parameter construction --------------------------

def init_params(key):
    keys = iter(jax.random.split(key, 32))

    def nrm(shape, std=0.02):
        return jax.random.normal(next(keys), shape, F32) * std

    def zeros(shape):
        return jnp.zeros(shape, F32)

    cls_token = nrm((HIDDEN,))
    pos_embed = nrm((SEQ, HIDDEN))
    patch_b = zeros((HIDDEN,))

    # Pre-expanded (ROWS, HIDDEN) slab: CLS rows = cls_token + pos[0];
    # patch rows = pos[1:] + conv bias; pad rows = 0 (no in-kernel scatter).
    cls_pos_full = jnp.zeros((B, SEQ_PAD, HIDDEN), F32)
    cls_pos_full = cls_pos_full.at[:, 0, :].set(cls_token + pos_embed[0])
    cls_pos_full = cls_pos_full.at[:, 1:SEQ, :].set(pos_embed[1:SEQ] + patch_b)
    cls_pos_full = cls_pos_full.reshape(ROWS, HIDDEN)

    # Fused QKV weight with 1/sqrt(head_dim) folded into the Q columns.
    scale = 1.0 / float(HEAD_DIM) ** 0.5
    wq = nrm((LAYERS, HIDDEN, HIDDEN)) * scale
    wk = nrm((LAYERS, HIDDEN, HIDDEN))
    wv = nrm((LAYERS, HIDDEN, HIDDEN))
    wqkv = jnp.concatenate([wq, wk, wv], axis=-1)                  # (L, H, 3H)

    # Small per-layer vectors packed into one (14, HIDDEN) slab (fewer launch DMAs).
    vecs = jnp.zeros((_V_ROWS, HIDDEN), F32)
    for l in range(LAYERS):
        base = l * _V_PER_LAYER
        vecs = vecs.at[base + _V_LN1_G].set(1.0)     # LN gammas = 1
        vecs = vecs.at[base + _V_LN2_G].set(1.0)
        # bo / b2 / LN betas stay 0
    vecs = vecs.at[_V_FLN_G].set(1.0)                # final LN gamma

    # Final head layer zero-padded to 128 output lanes (only cols 0:2 are real).
    hw3 = jnp.zeros((256, OUT_PAD), F32).at[:, :NUM_CLASSES].set(nrm((256, NUM_CLASSES)))

    return {
        # patch embedding: Conv2d(C, HIDDEN, PATCH, stride=PATCH) as a matmul
        "patch_w": nrm((CPP, HIDDEN)).astype(BF16),
        "cls_pos_full": cls_pos_full,
        "vecs32": vecs,                                   # packed small vectors
        "bqkv": zeros((LAYERS, 3 * HIDDEN)),              # fused QKV bias
        "b1": zeros((LAYERS, MLP)),                       # MLP intermediate bias
        "wqkv": wqkv.astype(BF16),
        "wo": nrm((LAYERS, HIDDEN, HIDDEN)).astype(BF16),
        "w1": nrm((LAYERS, HIDDEN, MLP)).astype(BF16),
        "w2": nrm((LAYERS, MLP, HIDDEN)).astype(BF16),
        # cull head: Linear(H,512) ReLU Linear(512,256) ReLU Linear(256,2)
        "hw1": nrm((HIDDEN, 512)).astype(BF16),
        "hw2": nrm((512, 256)).astype(BF16),
        "hw3": hw3.astype(BF16),
        "head_b": zeros((1, 512 + 256 + OUT_PAD)),        # 128-aligned packed biases
    }


# ------------------------------ forward pass --------------------------------

def _full_spec(arr):
    nd = arr.ndim
    return pl.BlockSpec(arr.shape, lambda i, _nd=nd: (0,) * _nd)


@jax.jit
def forward(params, pixel_values):
    """pixel_values: (B, C, IMG, IMG) NCHW float32 -> logits (B, 2)."""
    assert pixel_values.shape == (B, C, IMG, IMG), pixel_values.shape

    # Patch extraction (Conv2d stride=PATCH semantics) and placement into a
    # (ROWS, C*P*P) slab with zero rows at CLS/pad positions — tiny XLA prologue.
    x = pixel_values.reshape(B, C, GRID_HW, PATCH, GRID_HW, PATCH)
    x = x.transpose(0, 2, 4, 1, 3, 5).reshape(B, NUM_PATCHES, CPP)
    patches = jnp.zeros((B, SEQ_PAD, CPP), F32).at[:, 1:SEQ, :].set(x)
    patches = patches.reshape(ROWS, CPP)

    args = (
        patches, params["patch_w"], params["cls_pos_full"], params["vecs32"],
        params["bqkv"], params["b1"], params["wqkv"], params["wo"],
        params["w1"], params["w2"], params["hw1"], params["hw2"],
        params["hw3"], params["head_b"],
    )

    # Single fused launch; everything resident in VMEM/vregs (~0.2 MiB total).
    # TODO(synk): at real ViT-Base scale, stream weights per layer (grid axis /
    # emit_pipeline) instead of keeping them all resident (v7x has 64 MiB VMEM),
    # and shard a larger batch over TensorCores with a 'parallel' grid axis.
    out = pl.pallas_call(
        _vit_cull_kernel,
        grid=(1,),
        in_specs=[_full_spec(a) for a in args],
        out_specs=pl.BlockSpec((HEAD_ROWS, OUT_PAD), lambda i: (0, 0)),
        out_shape=jax.ShapeDtypeStruct((HEAD_ROWS, OUT_PAD), jnp.float32),
        compiler_params=pltpu.CompilerParams(dimension_semantics=("arbitrary",)),
    )(*args)

    # Rows 0..B-1 are the per-image CLS logits; cols 0:2 are the real classes.
    return out[:B, :NUM_CLASSES]


# ---------------------------------- main -------------------------------------

if __name__ == "__main__":
    key = jax.random.PRNGKey(0)
    pkey, xkey = jax.random.split(key)

    params = init_params(pkey)
    pixel_values = jax.random.normal(xkey, (B, C, IMG, IMG), jnp.float32)

    logits = jax.block_until_ready(forward(params, pixel_values))

    assert logits.shape == (B, NUM_CLASSES), logits.shape
    assert bool(jnp.all(jnp.isfinite(logits)))
    print("KERNEL_OK")
</pallas_src>

<mosaic_0001>
module attributes {stable_mosaic.version = 11 : i64} {
  func.func @_vit_cull_kernel(%arg0: i32, %arg1: memref<16x192xf32, #tpu.memory_space<vmem>>, %arg2: memref<192x32xbf16, #tpu.memory_space<vmem>>, %arg3: memref<16x32xf32, #tpu.memory_space<vmem>>, %arg4: memref<14x32xf32, #tpu.memory_space<vmem>>, %arg5: memref<2x96xf32, #tpu.memory_space<vmem>>, %arg6: memref<2x128xf32, #tpu.memory_space<vmem>>, %arg7: memref<2x32x96xbf16, #tpu.memory_space<vmem>>, %arg8: memref<2x32x32xbf16, #tpu.memory_space<vmem>>, %arg9: memref<2x32x128xbf16, #tpu.memory_space<vmem>>, %arg10: memref<2x128x32xbf16, #tpu.memory_space<vmem>>, %arg11: memref<32x512xbf16, #tpu.memory_space<vmem>>, %arg12: memref<512x256xbf16, #tpu.memory_space<vmem>>, %arg13: memref<256x128xbf16, #tpu.memory_space<vmem>>, %arg14: memref<1x896xf32, #tpu.memory_space<vmem>>, %arg15: memref<8x128xf32, #tpu.memory_space<vmem>>) attributes {dimension_semantics = [#tpu.dimension_semantics<arbitrary>], iteration_bounds = array<i64: 1>, scalar_prefetch = 0 : i64, scratch_operands = 0 : i64, tpu.core_type = #tpu.core_type<tc>, window_params = [{pipeline_mode = #tpu.pipeline_mode<synchronous>, transform_indices = @transform_0, window_bounds = array<i64: 16, 192>}, {pipeline_mode = #tpu.pipeline_mode<synchronous>, transform_indices = @transform_1, window_bounds = array<i64: 192, 32>}, {pipeline_mode = #tpu.pipeline_mode<synchronous>, transform_indices = @transform_2, window_bounds = array<i64: 16, 32>}, {pipeline_mode = #tpu.pipeline_mode<synchronous>, transform_indices = @transform_3, window_bounds = array<i64: 14, 32>}, {pipeline_mode = #tpu.pipeline_mode<synchronous>, transform_indices = @transform_4, window_bounds = array<i64: 2, 96>}, {pipeline_mode = #tpu.pipeline_mode<synchronous>, transform_indices = @transform_5, window_bounds = array<i64: 2, 128>}, {pipeline_mode = #tpu.pipeline_mode<synchronous>, transform_indices = @transform_6, window_bounds = array<i64: 2, 32, 96>}, {pipeline_mode = #tpu.pipeline_mode<synchronous>, transform_indices = @transform_7, window_bounds = array<i64: 2, 32, 32>}, {pipeline_mode = #tpu.pipeline_mode<synchronous>, transform_indices = @transform_8, window_bounds = array<i64: 2, 32, 128>}, {pipeline_mode = #tpu.pipeline_mode<synchronous>, transform_indices = @transform_9, window_bounds = array<i64: 2, 128, 32>}, {pipeline_mode = #tpu.pipeline_mode<synchronous>, transform_indices = @transform_10, window_bounds = array<i64: 32, 512>}, {pipeline_mode = #tpu.pipeline_mode<synchronous>, transform_indices = @transform_11, window_bounds = array<i64: 512, 256>}, {pipeline_mode = #tpu.pipeline_mode<synchronous>, transform_indices = @transform_12, window_bounds = array<i64: 256, 128>}, {pipeline_mode = #tpu.pipeline_mode<synchronous>, transform_indices = @transform_13, window_bounds = array<i64: 1, 896>}, {pipeline_mode = #tpu.pipeline_mode<synchronous>, transform_indices = @transform_14, window_bounds = array<i64: 8, 128>}]} {
    %c0 = arith.constant 0 : index
    %c0_0 = arith.constant 0 : index
    %0 = vector.load %arg1[%c0, %c0_0] : memref<16x192xf32, #tpu.memory_space<vmem>>, vector<16x192xf32>
    %c0_1 = arith.constant 0 : index
    %c0_2 = arith.constant 0 : index
    %1 = vector.load %arg2[%c0_1, %c0_2] : memref<192x32xbf16, #tpu.memory_space<vmem>>, vector<192x32xbf16>
    %2 = arith.truncf %0 : vector<16x192xf32> to vector<16x192xbf16>
    %cst = arith.constant dense<0.000000e+00> : vector<16x32xf32>
    %3 = tpu.matmul %2, %1, %cst {dimension_numbers = #tpu.dot_dimension_numbers<[1], [0], [0], [1], [0, 0, 1, 1], [], []>} : vector<16x192xbf16>, vector<192x32xbf16>, vector<16x32xf32> -> vector<16x32xf32>
    %c0_3 = arith.constant 0 : index
    %c0_4 = arith.constant 0 : index
    %4 = vector.load %arg3[%c0_3, %c0_4] : memref<16x32xf32, #tpu.memory_space<vmem>>, vector<16x32xf32>
    %5 = arith.addf %3, %4 : vector<16x32xf32>
    %6 = tpu.iota {dimensions = array<i32: 0>} : vector<16x16xi32>
    %7 = tpu.iota {dimensions = array<i32: 1>} : vector<16x16xi32>
    %c3_i32 = arith.constant 3 : i32
    %8 = vector.broadcast %c3_i32 : i32 to vector<16x16xi32>
    %9 = arith.shrsi %6, %8 : vector<16x16xi32>
    %c3_i32_5 = arith.constant 3 : i32
    %10 = vector.broadcast %c3_i32_5 : i32 to vector<16x16xi32>
    %11 = arith.shrsi %7, %10 : vector<16x16xi32>
    %12 = arith.cmpi eq, %9, %11 : vector<16x16xi32>
    %c7_i32 = arith.constant 7 : i32
    %13 = vector.broadcast %c7_i32 : i32 to vector<16x16xi32>
    %14 = arith.andi %7, %13 : vector<16x16xi32>
    %c5_i32 = arith.constant 5 : i32
    %15 = vector.broadcast %c5_i32 : i32 to vector<16x16xi32>
    %16 = arith.cmpi slt, %14, %15 : vector<16x16xi32>
    %17 = arith.andi %12, %16 : vector<16x16xi1>
    %cst_6 = arith.constant 0.000000e+00 : f32
    %cst_7 = arith.constant -1.000000e+30 : f32
    %18 = vector.broadcast %cst_6 : f32 to vector<16x16xf32>
    %19 = vector.broadcast %cst_7 : f32 to vector<16x16xf32>
    %20 = arith.select %17, %18, %19 : vector<16x16xi1>, vector<16x16xf32>
    %c0_8 = arith.constant 0 : index
    %c0_9 = arith.constant 0 : index
    %21 = vector.load %arg4[%c0_8, %c0_9] : memref<14x32xf32, #tpu.memory_space<vmem>>, vector<1x32xf32>
    %c1 = arith.constant 1 : index
    %c0_10 = arith.constant 0 : index
    %22 = vector.load %arg4[%c1, %c0_10] : memref<14x32xf32, #tpu.memory_space<vmem>>, vector<1x32xf32>
    %cst_11 = arith.constant dense<0.000000e+00> : vector<16xf32>
    %23 = vector.multi_reduction <add>, %5, %cst_11 [1] : vector<16x32xf32> to vector<16xf32>
    %24 = vector.shape_cast %23 : vector<16xf32> to vector<16x1xf32>
    %cst_12 = arith.constant 3.200000e+01 : f32
    %25 = vector.broadcast %cst_12 : f32 to vector<16x1xf32>
    %26 = arith.divf %24, %25 : vector<16x1xf32>
    %27 = vector.broadcast %26 : vector<16x1xf32> to vector<16x32xf32>
    %28 = arith.subf %5, %27 : vector<16x32xf32>
    %29 = arith.mulf %28, %28 : vector<16x32xf32>
    %cst_13 = arith.constant dense<0.000000e+00> : vector<16xf32>
    %30 = vector.multi_reduction <add>, %29, %cst_13 [1] : vector<16x32xf32> to vector<16xf32>
    %31 = vector.shape_cast %30 : vector<16xf32> to vector<16x1xf32>
    %cst_14 = arith.constant 3.200000e+01 : f32
    %32 = vector.broadcast %cst_14 : f32 to vector<16x1xf32>
    %33 = arith.divf %31, %32 : vector<16x1xf32>
    %cst_15 = arith.constant 9.99999997E-7 : f32
    %34 = vector.broadcast %cst_15 : f32 to vector<16x1xf32>
    %35 = arith.addf %33, %34 : vector<16x1xf32>
    %36 = math.rsqrt %35 : vector<16x1xf32>
    %37 = vector.broadcast %36 : vector<16x1xf32> to vector<16x32xf32>
    %38 = arith.mulf %28, %37 : vector<16x32xf32>
    %39 = vector.broadcast %21 : vector<1x32xf32> to vector<16x32xf32>
    %40 = arith.mulf %38, %39 : vector<16x32xf32>
    %41 = vector.broadcast %22 : vector<1x32xf32> to vector<16x32xf32>
    %42 = arith.addf %40, %41 : vector<16x32xf32>
    %c0_16 = arith.constant 0 : index
    %c0_17 = arith.constant 0 : index
    %c0_18 = arith.constant 0 : index
    %43 = vector.load %arg7[%c0_16, %c0_17, %c0_18] : memref<2x32x96xbf16, #tpu.memory_space<vmem>>, vector<1x32x96xbf16>
    %44 = vector.shape_cast %43 : vector<1x32x96xbf16> to vector<32x96xbf16>
    %45 = arith.truncf %42 : vector<16x32xf32> to vector<16x32xbf16>
    %cst_19 = arith.constant dense<0.000000e+00> : vector<16x96xf32>
    %46 = tpu.matmul %45, %44, %cst_19 {dimension_numbers = #tpu.dot_dimension_numbers<[1], [0], [0], [1], [0, 0, 1, 1], [], []>} : vector<16x32xbf16>, vector<32x96xbf16>, vector<16x96xf32> -> vector<16x96xf32>
    %c0_20 = arith.constant 0 : index
    %c0_21 = arith.constant 0 : index
    %47 = vector.load %arg5[%c0_20, %c0_21] : memref<2x96xf32, #tpu.memory_space<vmem>>, vector<1x96xf32>
    %48 = vector.broadcast %47 : vector<1x96xf32> to vector<16x96xf32>
    %49 = arith.addf %46, %48 : vector<16x96xf32>
    %50 = vector.extract_strided_slice %49 {offsets = [0, 0], sizes = [16, 8], strides = [1, 1]} : vector<16x96xf32> to vector<16x8xf32>
    %51 = arith.truncf %50 : vector<16x8xf32> to vector<16x8xbf16>
    %52 = vector.extract_strided_slice %49 {offsets = [0, 32], sizes = [16, 8], strides = [1, 1]} : vector<16x96xf32> to vector<16x8xf32>
    %53 = arith.truncf %52 : vector<16x8xf32> to vector<16x8xbf16>
    %54 = vector.extract_strided_slice %49 {offsets = [0, 64], sizes = [16, 8], strides = [1, 1]} : vector<16x96xf32> to vector<16x8xf32>
    %55 = arith.truncf %54 : vector<16x8xf32> to vector<16x8xbf16>
    "tpu.trace_start"() <{level = 10 : i32, message = "qd,kd->qk"}> : () -> ()
    %cst_22 = arith.constant dense<0.000000e+00> : vector<16x16xf32>
    %56 = tpu.matmul %51, %53, %cst_22 {dimension_numbers = #tpu.dot_dimension_numbers<[1], [1], [0], [0], [0, 0, 1, 0], [], []>} : vector<16x8xbf16>, vector<16x8xbf16>, vector<16x16xf32> -> vector<16x16xf32>
    "tpu.trace_stop"() : () -> ()
    %57 = arith.addf %56, %20 : vector<16x16xf32>
    %cst_23 = arith.constant dense<0xFF800000> : vector<16xf32>
    %58 = vector.multi_reduction <maximumf>, %57, %cst_23 [1] : vector<16x16xf32> to vector<16xf32>
    %59 = vector.shape_cast %58 : vector<16xf32> to vector<16x1xf32>
    %60 = vector.broadcast %59 : vector<16x1xf32> to vector<16x16xf32>
    %61 = arith.subf %57, %60 : vector<16x16xf32>
    %62 = math.exp %61 : vector<16x16xf32>
    %cst_24 = arith.constant dense<0.000000e+00> : vector<16xf32>
    %63 = vector.multi_reduction <add>, %62, %cst_24 [1] : vector<16x16xf32> to vector<16xf32>
    %64 = vector.shape_cast %63 : vector<16xf32> to vector<16x1xf32>
    %65 = tpu.reciprocal %64 {approx = true} : vector<16x1xf32> -> vector<16x1xf32>
    %66 = vector.broadcast %65 : vector<16x1xf32> to vector<16x16xf32>
    %67 = arith.mulf %62, %66 : vector<16x16xf32>
    %68 = arith.truncf %67 : vector<16x16xf32> to vector<16x16xbf16>
    %cst_25 = arith.constant dense<0.000000e+00> : vector<16x8xf32>
    %69 = tpu.matmul %68, %55, %cst_25 {dimension_numbers = #tpu.dot_dimension_numbers<[1], [0], [0], [1], [0, 0, 1, 1], [], []>} : vector<16x16xbf16>, vector<16x8xbf16>, vector<16x8xf32> -> vector<16x8xf32>
    %70 = vector.extract_strided_slice %49 {offsets = [0, 8], sizes = [16, 8], strides = [1, 1]} : vector<16x96xf32> to vector<16x8xf32>
    %71 = arith.truncf %70 : vector<16x8xf32> to vector<16x8xbf16>
    %72 = vector.extract_strided_slice %49 {offsets = [0, 40], sizes = [16, 8], strides = [1, 1]} : vector<16x96xf32> to vector<16x8xf32>
    %73 = arith.truncf %72 : vector<16x8xf32> to vector<16x8xbf16>
    %74 = vector.extract_strided_slice %49 {offsets = [0, 72], sizes = [16, 8], strides = [1, 1]} : vector<16x96xf32> to vector<16x8xf32>
    %75 = arith.truncf %74 : vector<16x8xf32> to vector<16x8xbf16>
    "tpu.trace_start"() <{level = 10 : i32, message = "qd,kd->qk"}> : () -> ()
    %cst_26 = arith.constant dense<0.000000e+00> : vector<16x16xf32>
    %76 = tpu.matmul %71, %73, %cst_26 {dimension_numbers = #tpu.dot_dimension_numbers<[1], [1], [0], [0], [0, 0, 1, 0], [], []>} : vector<16x8xbf16>, vector<16x8xbf16>, vector<16x16xf32> -> vector<16x16xf32>
    "tpu.trace_stop"() : () -> ()
    %77 = arith.addf %76, %20 : vector<16x16xf32>
    %cst_27 = arith.constant dense<0xFF800000> : vector<16xf32>
    %78 = vector.multi_reduction <maximumf>, %77, %cst_27 [1] : vector<16x16xf32> to vector<16xf32>
    %79 = vector.shape_cast %78 : vector<16xf32> to vector<16x1xf32>
    %80 = vector.broadcast %79 : vector<16x1xf32> to vector<16x16xf32>
    %81 = arith.subf %77, %80 : vector<16x16xf32>
    %82 = math.exp %81 : vector<16x16xf32>
    %cst_28 = arith.constant dense<0.000000e+00> : vector<16xf32>
    %83 = vector.multi_reduction <add>, %82, %cst_28 [1] : vector<16x16xf32> to vector<16xf32>
    %84 = vector.shape_cast %83 : vector<16xf32> to vector<16x1xf32>
    %85 = tpu.reciprocal %84 {approx = true} : vector<16x1xf32> -> vector<16x1xf32>
    %86 = vector.broadcast %85 : vector<16x1xf32> to vector<16x16xf32>
    %87 = arith.mulf %82, %86 : vector<16x16xf32>
    %88 = arith.truncf %87 : vector<16x16xf32> to vector<16x16xbf16>
    %cst_29 = arith.constant dense<0.000000e+00> : vector<16x8xf32>
    %89 = tpu.matmul %88, %75, %cst_29 {dimension_numbers = #tpu.dot_dimension_numbers<[1], [0], [0], [1], [0, 0, 1, 1], [], []>} : vector<16x16xbf16>, vector<16x8xbf16>, vector<16x8xf32> -> vector<16x8xf32>
    %90 = vector.extract_strided_slice %49 {offsets = [0, 16], sizes = [16, 8], strides = [1, 1]} : vector<16x96xf32> to vector<16x8xf32>
    %91 = arith.truncf %90 : vector<16x8xf32> to vector<16x8xbf16>
    %92 = vector.extract_strided_slice %49 {offsets = [0, 48], sizes = [16, 8], strides = [1, 1]} : vector<16x96xf32> to vector<16x8xf32>
    %93 = arith.truncf %92 : vector<16x8xf32> to vector<16x8xbf16>
    %94 = vector.extract_strided_slice %49 {offsets = [0, 80], sizes = [16, 8], strides = [1, 1]} : vector<16x96xf32> to vector<16x8xf32>
    %95 = arith.truncf %94 : vector<16x8xf32> to vector<16x8xbf16>
    "tpu.trace_start"() <{level = 10 : i32, message = "qd,kd->qk"}> : () -> ()
    %cst_30 = arith.constant dense<0.000000e+00> : vector<16x16xf32>
    %96 = tpu.matmul %91, %93, %cst_30 {dimension_numbers = #tpu.dot_dimension_numbers<[1], [1], [0], [0], [0, 0, 1, 0], [], []>} : vector<16x8xbf16>, vector<16x8xbf16>, vector<16x16xf32> -> vector<16x16xf32>
    "tpu.trace_stop"() : () -> ()
    %97 = arith.addf %96, %20 : vector<16x16xf32>
    %cst_31 = arith.constant dense<0xFF800000> : vector<16xf32>
    %98 = vector.multi_reduction <maximumf>, %97, %cst_31 [1] : vector<16x16xf32> to vector<16xf32>
    %99 = vector.shape_cast %98 : vector<16xf32> to vector<16x1xf32>
    %100 = vector.broadcast %99 : vector<16x1xf32> to vector<16x16xf32>
    %101 = arith.subf %97, %100 : vector<16x16xf32>
    %102 = math.exp %101 : vector<16x16xf32>
    %cst_32 = arith.constant dense<0.000000e+00> : vector<16xf32>
    %103 = vector.multi_reduction <add>, %102, %cst_32 [1] : vector<16x16xf32> to vector<16xf32>
    %104 = vector.shape_cast %103 : vector<16xf32> to vector<16x1xf32>
    %105 = tpu.reciprocal %104 {approx = true} : vector<16x1xf32> -> vector<16x1xf32>
    %106 = vector.broadcast %105 : vector<16x1xf32> to vector<16x16xf32>
    %107 = arith.mulf %102, %106 : vector<16x16xf32>
    %108 = arith.truncf %107 : vector<16x16xf32> to vector<16x16xbf16>
    %cst_33 = arith.constant dense<0.000000e+00> : vector<16x8xf32>
    %109 = tpu.matmul %108, %95, %cst_33 {dimension_numbers = #tpu.dot_dimension_numbers<[1], [0], [0], [1], [0, 0, 1, 1], [], []>} : vector<16x16xbf16>, vector<16x8xbf16>, vector<16x8xf32> -> vector<16x8xf32>
    %110 = vector.extract_strided_slice %49 {offsets = [0, 24], sizes = [16, 8], strides = [1, 1]} : vector<16x96xf32> to vector<16x8xf32>
    %111 = arith.truncf %110 : vector<16x8xf32> to vector<16x8xbf16>
    %112 = vector.extract_strided_slice %49 {offsets = [0, 56], sizes = [16, 8], strides = [1, 1]} : vector<16x96xf32> to vector<16x8xf32>
    %113 = arith.truncf %112 : vector<16x8xf32> to vector<16x8xbf16>
    %114 = vector.extract_strided_slice %49 {offsets = [0, 88], sizes = [16, 8], strides = [1, 1]} : vector<16x96xf32> to vector<16x8xf32>
    %115 = arith.truncf %114 : vector<16x8xf32> to vector<16x8xbf16>
    "tpu.trace_start"() <{level = 10 : i32, message = "qd,kd->qk"}> : () -> ()
    %cst_34 = arith.constant dense<0.000000e+00> : vector<16x16xf32>
    %116 = tpu.matmul %111, %113, %cst_34 {dimension_numbers = #tpu.dot_dimension_numbers<[1], [1], [0], [0], [0, 0, 1, 0], [], []>} : vector<16x8xbf16>, vector<16x8xbf16>, vector<16x16xf32> -> vector<16x16xf32>
    "tpu.trace_stop"() : () -> ()
    %117 = arith.addf %116, %20 : vector<16x16xf32>
    %cst_35 = arith.constant dense<0xFF800000> : vector<16xf32>
    %118 = vector.multi_reduction <maximumf>, %117, %cst_35 [1] : vector<16x16xf32> to vector<16xf32>
    %119 = vector.shape_cast %118 : vector<16xf32> to vector<16x1xf32>
    %120 = vector.broadcast %119 : vector<16x1xf32> to vector<16x16xf32>
    %121 = arith.subf %117, %120 : vector<16x16xf32>
    %122 = math.exp %121 : vector<16x16xf32>
    %cst_36 = arith.constant dense<0.000000e+00> : vector<16xf32>
    %123 = vector.multi_reduction <add>, %122, %cst_36 [1] : vector<16x16xf32> to vector<16xf32>
    %124 = vector.shape_cast %123 : vector<16xf32> to vector<16x1xf32>
    %125 = tpu.reciprocal %124 {approx = true} : vector<16x1xf32> -> vector<16x1xf32>
    %126 = vector.broadcast %125 : vector<16x1xf32> to vector<16x16xf32>
    %127 = arith.mulf %122, %126 : vector<16x16xf32>
    %128 = arith.truncf %127 : vector<16x16xf32> to vector<16x16xbf16>
    %cst_37 = arith.constant dense<0.000000e+00> : vector<16x8xf32>
    %129 = tpu.matmul %128, %115, %cst_37 {dimension_numbers = #tpu.dot_dimension_numbers<[1], [0], [0], [1], [0, 0, 1, 1], [], []>} : vector<16x16xbf16>, vector<16x8xbf16>, vector<16x8xf32> -> vector<16x8xf32>
    %130 = tpu.concatenate %69, %89, %109, %129 in 1 : vector<16x8xf32>, vector<16x8xf32>, vector<16x8xf32>, vector<16x8xf32> -> vector<16x32xf32>
    %c0_38 = arith.constant 0 : index
    %c0_39 = arith.constant 0 : index
    %c0_40 = arith.constant 0 : index
    %131 = vector.load %arg8[%c0_38, %c0_39, %c0_40] : memref<2x32x32xbf16, #tpu.memory_space<vmem>>, vector<1x32x32xbf16>
    %132 = vector.shape_cast %131 : vector<1x32x32xbf16> to vector<32x32xbf16>
    %133 = arith.truncf %130 : vector<16x32xf32> to vector<16x32xbf16>
    %cst_41 = arith.constant dense<0.000000e+00> : vector<16x32xf32>
    %134 = tpu.matmul %133, %132, %cst_41 {dimension_numbers = #tpu.dot_dimension_numbers<[1], [0], [0], [1], [0, 0, 1, 1], [], []>} : vector<16x32xbf16>, vector<32x32xbf16>, vector<16x32xf32> -> vector<16x32xf32>
    %135 = arith.addf %5, %134 : vector<16x32xf32>
    %c2 = arith.constant 2 : index
    %c0_42 = arith.constant 0 : index
    %136 = vector.load %arg4[%c2, %c0_42] : memref<14x32xf32, #tpu.memory_space<vmem>>, vector<1x32xf32>
    %137 = vector.broadcast %136 : vector<1x32xf32> to vector<16x32xf32>
    %138 = arith.addf %135, %137 : vector<16x32xf32>
    %c3 = arith.constant 3 : index
    %c0_43 = arith.constant 0 : index
    %139 = vector.load %arg4[%c3, %c0_43] : memref<14x32xf32, #tpu.memory_space<vmem>>, vector<1x32xf32>
    %c4 = arith.constant 4 : index
    %c0_44 = arith.constant 0 : index
    %140 = vector.load %arg4[%c4, %c0_44] : memref<14x32xf32, #tpu.memory_space<vmem>>, vector<1x32xf32>
    %cst_45 = arith.constant dense<0.000000e+00> : vector<16xf32>
    %141 = vector.multi_reduction <add>, %138, %cst_45 [1] : vector<16x32xf32> to vector<16xf32>
    %142 = vector.shape_cast %141 : vector<16xf32> to vector<16x1xf32>
    %cst_46 = arith.constant 3.200000e+01 : f32
    %143 = vector.broadcast %cst_46 : f32 to vector<16x1xf32>
    %144 = arith.divf %142, %143 : vector<16x1xf32>
    %145 = vector.broadcast %144 : vector<16x1xf32> to vector<16x32xf32>
    %146 = arith.subf %138, %145 : vector<16x32xf32>
    %147 = arith.mulf %146, %146 : vector<16x32xf32>
    %cst_47 = arith.constant dense<0.000000e+00> : vector<16xf32>
    %148 = vector.multi_reduction <add>, %147, %cst_47 [1] : vector<16x32xf32> to vector<16xf32>
    %149 = vector.shape_cast %148 : vector<16xf32> to vector<16x1xf32>
    %cst_48 = arith.constant 3.200000e+01 : f32
    %150 = vector.broadcast %cst_48 : f32 to vector<16x1xf32>
    %151 = arith.divf %149, %150 : vector<16x1xf32>
    %cst_49 = arith.constant 9.99999997E-7 : f32
    %152 = vector.broadcast %cst_49 : f32 to vector<16x1xf32>
    %153 = arith.addf %151, %152 : vector<16x1xf32>
    %154 = math.rsqrt %153 : vector<16x1xf32>
    %155 = vector.broadcast %154 : vector<16x1xf32> to vector<16x32xf32>
    %156 = arith.mulf %146, %155 : vector<16x32xf32>
    %157 = vector.broadcast %139 : vector<1x32xf32> to vector<16x32xf32>
    %158 = arith.mulf %156, %157 : vector<16x32xf32>
    %159 = vector.broadcast %140 : vector<1x32xf32> to vector<16x32xf32>
    %160 = arith.addf %158, %159 : vector<16x32xf32>
    %c0_50 = arith.constant 0 : index
    %c0_51 = arith.constant 0 : index
    %c0_52 = arith.constant 0 : index
    %161 = vector.load %arg9[%c0_50, %c0_51, %c0_52] : memref<2x32x128xbf16, #tpu.memory_space<vmem>>, vector<1x32x128xbf16>
    %162 = vector.shape_cast %161 : vector<1x32x128xbf16> to vector<32x128xbf16>
    %163 = arith.truncf %160 : vector<16x32xf32> to vector<16x32xbf16>
    %cst_53 = arith.constant dense<0.000000e+00> : vector<16x128xf32>
    %164 = tpu.matmul %163, %162, %cst_53 {dimension_numbers = #tpu.dot_dimension_numbers<[1], [0], [0], [1], [0, 0, 1, 1], [], []>} : vector<16x32xbf16>, vector<32x128xbf16>, vector<16x128xf32> -> vector<16x128xf32>
    %c0_54 = arith.constant 0 : index
    %c0_55 = arith.constant 0 : index
    %165 = vector.load %arg6[%c0_54, %c0_55] : memref<2x128xf32, #tpu.memory_space<vmem>>, vector<1x128xf32>
    %166 = vector.broadcast %165 : vector<1x128xf32> to vector<16x128xf32>
    %167 = arith.addf %164, %166 : vector<16x128xf32>
    %cst_56 = arith.constant 5.000000e-01 : f32
    %168 = vector.broadcast %cst_56 : f32 to vector<16x128xf32>
    %169 = arith.mulf %168, %167 : vector<16x128xf32>
    %cst_57 = arith.constant 4.471500e-02 : f32
    %170 = vector.broadcast %cst_57 : f32 to vector<16x128xf32>
    %171 = arith.mulf %170, %167 : vector<16x128xf32>
    %172 = arith.mulf %171, %167 : vector<16x128xf32>
    %173 = arith.mulf %172, %167 : vector<16x128xf32>
    %174 = arith.addf %167, %173 : vector<16x128xf32>
    %cst_58 = arith.constant 0.797884583 : f32
    %175 = vector.broadcast %cst_58 : f32 to vector<16x128xf32>
    %176 = arith.mulf %175, %174 : vector<16x128xf32>
    %177 = math.tanh %176 : vector<16x128xf32>
    %cst_59 = arith.constant 1.000000e+00 : f32
    %178 = vector.broadcast %cst_59 : f32 to vector<16x128xf32>
    %179 = arith.addf %178, %177 : vector<16x128xf32>
    %180 = arith.mulf %169, %179 : vector<16x128xf32>
    %c0_60 = arith.constant 0 : index
    %c0_61 = arith.constant 0 : index
    %c0_62 = arith.constant 0 : index
    %181 = vector.load %arg10[%c0_60, %c0_61, %c0_62] : memref<2x128x32xbf16, #tpu.memory_space<vmem>>, vector<1x128x32xbf16>
    %182 = vector.shape_cast %181 : vector<1x128x32xbf16> to vector<128x32xbf16>
    %183 = arith.truncf %180 : vector<16x128xf32> to vector<16x128xbf16>
    %cst_63 = arith.constant dense<0.000000e+00> : vector<16x32xf32>
    %184 = tpu.matmul %183, %182, %cst_63 {dimension_numbers = #tpu.dot_dimension_numbers<[1], [0], [0], [1], [0, 0, 1, 1], [], []>} : vector<16x128xbf16>, vector<128x32xbf16>, vector<16x32xf32> -> vector<16x32xf32>
    %185 = arith.addf %138, %184 : vector<16x32xf32>
    %c5 = arith.constant 5 : index
    %c0_64 = arith.constant 0 : index
    %186 = vector.load %arg4[%c5, %c0_64] : memref<14x32xf32, #tpu.memory_space<vmem>>, vector<1x32xf32>
    %187 = vector.broadcast %186 : vector<1x32xf32> to vector<16x32xf32>
    %188 = arith.addf %185, %187 : vector<16x32xf32>
    %c6 = arith.constant 6 : index
    %c0_65 = arith.constant 0 : index
    %189 = vector.load %arg4[%c6, %c0_65] : memref<14x32xf32, #tpu.memory_space<vmem>>, vector<1x32xf32>
    %c7 = arith.constant 7 : index
    %c0_66 = arith.constant 0 : index
    %190 = vector.load %arg4[%c7, %c0_66] : memref<14x32xf32, #tpu.memory_space<vmem>>, vector<1x32xf32>
    %cst_67 = arith.constant dense<0.000000e+00> : vector<16xf32>
    %191 = vector.multi_reduction <add>, %188, %cst_67 [1] : vector<16x32xf32> to vector<16xf32>
    %192 = vector.shape_cast %191 : vector<16xf32> to vector<16x1xf32>
    %cst_68 = arith.constant 3.200000e+01 : f32
    %193 = vector.broadcast %cst_68 : f32 to vector<16x1xf32>
    %194 = arith.divf %192, %193 : vector<16x1xf32>
    %195 = vector.broadcast %194 : vector<16x1xf32> to vector<16x32xf32>
    %196 = arith.subf %188, %195 : vector<16x32xf32>
    %197 = arith.mulf %196, %196 : vector<16x32xf32>
    %cst_69 = arith.constant dense<0.000000e+00> : vector<16xf32>
    %198 = vector.multi_reduction <add>, %197, %cst_69 [1] : vector<16x32xf32> to vector<16xf32>
    %199 = vector.shape_cast %198 : vector<16xf32> to vector<16x1xf32>
    %cst_70 = arith.constant 3.200000e+01 : f32
    %200 = vector.broadcast %cst_70 : f32 to vector<16x1xf32>
    %201 = arith.divf %199, %200 : vector<16x1xf32>
    %cst_71 = arith.constant 9.99999997E-7 : f32
    %202 = vector.broadcast %cst_71 : f32 to vector<16x1xf32>
    %203 = arith.addf %201, %202 : vector<16x1xf32>
    %204 = math.rsqrt %203 : vector<16x1xf32>
    %205 = vector.broadcast %204 : vector<16x1xf32> to vector<16x32xf32>
    %206 = arith.mulf %196, %205 : vector<16x32xf32>
    %207 = vector.broadcast %189 : vector<1x32xf32> to vector<16x32xf32>
    %208 = arith.mulf %206, %207 : vector<16x32xf32>
    %209 = vector.broadcast %190 : vector<1x32xf32> to vector<16x32xf32>
    %210 = arith.addf %208, %209 : vector<16x32xf32>
    %c1_72 = arith.constant 1 : index
    %c0_73 = arith.constant 0 : index
    %c0_74 = arith.constant 0 : index
    %211 = vector.load %arg7[%c1_72, %c0_73, %c0_74] : memref<2x32x96xbf16, #tpu.memory_space<vmem>>, vector<1x32x96xbf16>
    %212 = vector.shape_cast %211 : vector<1x32x96xbf16> to vector<32x96xbf16>
    %213 = arith.truncf %210 : vector<16x32xf32> to vector<16x32xbf16>
    %cst_75 = arith.constant dense<0.000000e+00> : vector<16x96xf32>
    %214 = tpu.matmul %213, %212, %cst_75 {dimension_numbers = #tpu.dot_dimension_numbers<[1], [0], [0], [1], [0, 0, 1, 1], [], []>} : vector<16x32xbf16>, vector<32x96xbf16>, vector<16x96xf32> -> vector<16x96xf32>
    %c1_76 = arith.constant 1 : index
    %c0_77 = arith.constant 0 : index
    %215 = vector.load %arg5[%c1_76, %c0_77] : memref<2x96xf32, #tpu.memory_space<vmem>>, vector<1x96xf32>
    %216 = vector.broadcast %215 : vector<1x96xf32> to vector<16x96xf32>
    %217 = arith.addf %214, %216 : vector<16x96xf32>
    %218 = vector.extract_strided_slice %217 {offsets = [0, 0], sizes = [16, 8], strides = [1, 1]} : vector<16x96xf32> to vector<16x8xf32>
    %219 = arith.truncf %218 : vector<16x8xf32> to vector<16x8xbf16>
    %220 = vector.extract_strided_slice %217 {offsets = [0, 32], sizes = [16, 8], strides = [1, 1]} : vector<16x96xf32> to vector<16x8xf32>
    %221 = arith.truncf %220 : vector<16x8xf32> to vector<16x8xbf16>
    %222 = vector.extract_strided_slice %217 {offsets = [0, 64], sizes = [16, 8], strides = [1, 1]} : vector<16x96xf32> to vector<16x8xf32>
    %223 = arith.truncf %222 : vector<16x8xf32> to vector<16x8xbf16>
    "tpu.trace_start"() <{level = 10 : i32, message = "qd,kd->qk"}> : () -> ()
    %cst_78 = arith.constant dense<0.000000e+00> : vector<16x16xf32>
    %224 = tpu.matmul %219, %221, %cst_78 {dimension_numbers = #tpu.dot_dimension_numbers<[1], [1], [0], [0], [0, 0, 1, 0], [], []>} : vector<16x8xbf16>, vector<16x8xbf16>, vector<16x16xf32> -> vector<16x16xf32>
    "tpu.trace_stop"() : () -> ()
    %225 = arith.addf %224, %20 : vector<16x16xf32>
    %cst_79 = arith.constant dense<0xFF800000> : vector<16xf32>
    %226 = vector.multi_reduction <maximumf>, %225, %cst_79 [1] : vector<16x16xf32> to vector<16xf32>
    %227 = vector.shape_cast %226 : vector<16xf32> to vector<16x1xf32>
    %228 = vector.broadcast %227 : vector<16x1xf32> to vector<16x16xf32>
    %229 = arith.subf %225, %228 : vector<16x16xf32>
    %230 = math.exp %229 : vector<16x16xf32>
    %cst_80 = arith.constant dense<0.000000e+00> : vector<16xf32>
    %231 = vector.multi_reduction <add>, %230, %cst_80 [1] : vector<16x16xf32> to vector<16xf32>
    %232 = vector.shape_cast %231 : vector<16xf32> to vector<16x1xf32>
    %233 = tpu.reciprocal %232 {approx = true} : vector<16x1xf32> -> vector<16x1xf32>
    %234 = vector.broadcast %233 : vector<16x1xf32> to vector<16x16xf32>
    %235 = arith.mulf %230, %234 : vector<16x16xf32>
    %236 = arith.truncf %235 : vector<16x16xf32> to vector<16x16xbf16>
    %cst_81 = arith.constant dense<0.000000e+00> : vector<16x8xf32>
    %237 = tpu.matmul %236, %223, %cst_81 {dimension_numbers = #tpu.dot_dimension_numbers<[1], [0], [0], [1], [0, 0, 1, 1], [], []>} : vector<16x16xbf16>, vector<16x8xbf16>, vector<16x8xf32> -> vector<16x8xf32>
    %238 = vector.extract_strided_slice %217 {offsets = [0, 8], sizes = [16, 8], strides = [1, 1]} : vector<16x96xf32> to vector<16x8xf32>
    %239 = arith.truncf %238 : vector<16x8xf32> to vector<16x8xbf16>
    %240 = vector.extract_strided_slice %217 {offsets = [0, 40], sizes = [16, 8], strides = [1, 1]} : vector<16x96xf32> to vector<16x8xf32>
    %241 = arith.truncf %240 : vector<16x8xf32> to vector<16x8xbf16>
    %242 = vector.extract_strided_slice %217 {offsets = [0, 72], sizes = [16, 8], strides = [1, 1]} : vector<16x96xf32> to vector<16x8xf32>
    %243 = arith.truncf %242 : vector<16x8xf32> to vector<16x8xbf16>
    "tpu.trace_start"() <{level = 10 : i32, message = "qd,kd->qk"}> : () -> ()
    %cst_82 = arith.constant dense<0.000000e+00> : vector<16x16xf32>
    %244 = tpu.matmul %239, %241, %cst_82 {dimension_numbers = #tpu.dot_dimension_numbers<[1], [1], [0], [0], [0, 0, 1, 0], [], []>} : vector<16x8xbf16>, vector<16x8xbf16>, vector<16x16xf32> -> vector<16x16xf32>
    "tpu.trace_stop"() : () -> ()
    %245 = arith.addf %244, %20 : vector<16x16xf32>
    %cst_83 = arith.constant dense<0xFF800000> : vector<16xf32>
    %246 = vector.multi_reduction <maximumf>, %245, %cst_83 [1] : vector<16x16xf32> to vector<16xf32>
    %247 = vector.shape_cast %246 : vector<16xf32> to vector<16x1xf32>
    %248 = vector.broadcast %247 : vector<16x1xf32> to vector<16x16xf32>
    %249 = arith.subf %245, %248 : vector<16x16xf32>
    %250 = math.exp %249 : vector<16x16xf32>
    %cst_84 = arith.constant dense<0.000000e+00> : vector<16xf32>
    %251 = vector.multi_reduction <add>, %250, %cst_84 [1] : vector<16x16xf32> to vector<16xf32>
    %252 = vector.shape_cast %251 : vector<16xf32> to vector<16x1xf32>
    %253 = tpu.reciprocal %252 {approx = true} : vector<16x1xf32> -> vector<16x1xf32>
    %254 = vector.broadcast %253 : vector<16x1xf32> to vector<16x16xf32>
    %255 = arith.mulf %250, %254 : vector<16x16xf32>
    %256 = arith.truncf %255 : vector<16x16xf32> to vector<16x16xbf16>
    %cst_85 = arith.constant dense<0.000000e+00> : vector<16x8xf32>
    %257 = tpu.matmul %256, %243, %cst_85 {dimension_numbers = #tpu.dot_dimension_numbers<[1], [0], [0], [1], [0, 0, 1, 1], [], []>} : vector<16x16xbf16>, vector<16x8xbf16>, vector<16x8xf32> -> vector<16x8xf32>
    %258 = vector.extract_strided_slice %217 {offsets = [0, 16], sizes = [16, 8], strides = [1, 1]} : vector<16x96xf32> to vector<16x8xf32>
    %259 = arith.truncf %258 : vector<16x8xf32> to vector<16x8xbf16>
    %260 = vector.extract_strided_slice %217 {offsets = [0, 48], sizes = [16, 8], strides = [1, 1]} : vector<16x96xf32> to vector<16x8xf32>
    %261 = arith.truncf %260 : vector<16x8xf32> to vector<16x8xbf16>
    %262 = vector.extract_strided_slice %217 {offsets = [0, 80], sizes = [16, 8], strides = [1, 1]} : vector<16x96xf32> to vector<16x8xf32>
    %263 = arith.truncf %262 : vector<16x8xf32> to vector<16x8xbf16>
    "tpu.trace_start"() <{level = 10 : i32, message = "qd,kd->qk"}> : () -> ()
    %cst_86 = arith.constant dense<0.000000e+00> : vector<16x16xf32>
    %264 = tpu.matmul %259, %261, %cst_86 {dimension_numbers = #tpu.dot_dimension_numbers<[1], [1], [0], [0], [0, 0, 1, 0], [], []>} : vector<16x8xbf16>, vector<16x8xbf16>, vector<16x16xf32> -> vector<16x16xf32>
    "tpu.trace_stop"() : () -> ()
    %265 = arith.addf %264, %20 : vector<16x16xf32>
    %cst_87 = arith.constant dense<0xFF800000> : vector<16xf32>
    %266 = vector.multi_reduction <maximumf>, %265, %cst_87 [1] : vector<16x16xf32> to vector<16xf32>
    %267 = vector.shape_cast %266 : vector<16xf32> to vector<16x1xf32>
    %268 = vector.broadcast %267 : vector<16x1xf32> to vector<16x16xf32>
    %269 = arith.subf %265, %268 : vector<16x16xf32>
    %270 = math.exp %269 : vector<16x16xf32>
    %cst_88 = arith.constant dense<0.000000e+00> : vector<16xf32>
    %271 = vector.multi_reduction <add>, %270, %cst_88 [1] : vector<16x16xf32> to vector<16xf32>
    %272 = vector.shape_cast %271 : vector<16xf32> to vector<16x1xf32>
    %273 = tpu.reciprocal %272 {approx = true} : vector<16x1xf32> -> vector<16x1xf32>
    %274 = vector.broadcast %273 : vector<16x1xf32> to vector<16x16xf32>
    %275 = arith.mulf %270, %274 : vector<16x16xf32>
    %276 = arith.truncf %275 : vector<16x16xf32> to vector<16x16xbf16>
    %cst_89 = arith.constant dense<0.000000e+00> : vector<16x8xf32>
    %277 = tpu.matmul %276, %263, %cst_89 {dimension_numbers = #tpu.dot_dimension_numbers<[1], [0], [0], [1], [0, 0, 1, 1], [], []>} : vector<16x16xbf16>, vector<16x8xbf16>, vector<16x8xf32> -> vector<16x8xf32>
    %278 = vector.extract_strided_slice %217 {offsets = [0, 24], sizes = [16, 8], strides = [1, 1]} : vector<16x96xf32> to vector<16x8xf32>
    %279 = arith.truncf %278 : vector<16x8xf32> to vector<16x8xbf16>
    %280 = vector.extract_strided_slice %217 {offsets = [0, 56], sizes = [16, 8], strides = [1, 1]} : vector<16x96xf32> to vector<16x8xf32>
    %281 = arith.truncf %280 : vector<16x8xf32> to vector<16x8xbf16>
    %282 = vector.extract_strided_slice %217 {offsets = [0, 88], sizes = [16, 8], strides = [1, 1]} : vector<16x96xf32> to vector<16x8xf32>
    %283 = arith.truncf %282 : vector<16x8xf32> to vector<16x8xbf16>
    "tpu.trace_start"() <{level = 10 : i32, message = "qd,kd->qk"}> : () -> ()
    %cst_90 = arith.constant dense<0.000000e+00> : vector<16x16xf32>
    %284 = tpu.matmul %279, %281, %cst_90 {dimension_numbers = #tpu.dot_dimension_numbers<[1], [1], [0], [0], [0, 0, 1, 0], [], []>} : vector<16x8xbf16>, vector<16x8xbf16>, vector<16x16xf32> -> vector<16x16xf32>
    "tpu.trace_stop"() : () -> ()
    %285 = arith.addf %284, %20 : vector<16x16xf32>
    %cst_91 = arith.constant dense<0xFF800000> : vector<16xf32>
    %286 = vector.multi_reduction <maximumf>, %285, %cst_91 [1] : vector<16x16xf32> to vector<16xf32>
    %287 = vector.shape_cast %286 : vector<16xf32> to vector<16x1xf32>
    %288 = vector.broadcast %287 : vector<16x1xf32> to vector<16x16xf32>
    %289 = arith.subf %285, %288 : vector<16x16xf32>
    %290 = math.exp %289 : vector<16x16xf32>
    %cst_92 = arith.constant dense<0.000000e+00> : vector<16xf32>
    %291 = vector.multi_reduction <add>, %290, %cst_92 [1] : vector<16x16xf32> to vector<16xf32>
    %292 = vector.shape_cast %291 : vector<16xf32> to vector<16x1xf32>
    %293 = tpu.reciprocal %292 {approx = true} : vector<16x1xf32> -> vector<16x1xf32>
    %294 = vector.broadcast %293 : vector<16x1xf32> to vector<16x16xf32>
    %295 = arith.mulf %290, %294 : vector<16x16xf32>
    %296 = arith.truncf %295 : vector<16x16xf32> to vector<16x16xbf16>
    %cst_93 = arith.constant dense<0.000000e+00> : vector<16x8xf32>
    %297 = tpu.matmul %296, %283, %cst_93 {dimension_numbers = #tpu.dot_dimension_numbers<[1], [0], [0], [1], [0, 0, 1, 1], [], []>} : vector<16x16xbf16>, vector<16x8xbf16>, vector<16x8xf32> -> vector<16x8xf32>
    %298 = tpu.concatenate %237, %257, %277, %297 in 1 : vector<16x8xf32>, vector<16x8xf32>, vector<16x8xf32>, vector<16x8xf32> -> vector<16x32xf32>
    %c1_94 = arith.constant 1 : index
    %c0_95 = arith.constant 0 : index
    %c0_96 = arith.constant 0 : index
    %299 = vector.load %arg8[%c1_94, %c0_95, %c0_96] : memref<2x32x32xbf16, #tpu.memory_space<vmem>>, vector<1x32x32xbf16>
    %300 = vector.shape_cast %299 : vector<1x32x32xbf16> to vector<32x32xbf16>
    %301 = arith.truncf %298 : vector<16x32xf32> to vector<16x32xbf16>
    %cst_97 = arith.constant dense<0.000000e+00> : vector<16x32xf32>
    %302 = tpu.matmul %301, %300, %cst_97 {dimension_numbers = #tpu.dot_dimension_numbers<[1], [0], [0], [1], [0, 0, 1, 1], [], []>} : vector<16x32xbf16>, vector<32x32xbf16>, vector<16x32xf32> -> vector<16x32xf32>
    %303 = arith.addf %188, %302 : vector<16x32xf32>
    %c8 = arith.constant 8 : index
    %c0_98 = arith.constant 0 : index
    %304 = vector.load %arg4[%c8, %c0_98] : memref<14x32xf32, #tpu.memory_space<vmem>>, vector<1x32xf32>
    %305 = vector.broadcast %304 : vector<1x32xf32> to vector<16x32xf32>
    %306 = arith.addf %303, %305 : vector<16x32xf32>
    %c9 = arith.constant 9 : index
    %c0_99 = arith.constant 0 : index
    %307 = vector.load %arg4[%c9, %c0_99] : memref<14x32xf32, #tpu.memory_space<vmem>>, vector<1x32xf32>
    %c10 = arith.constant 10 : index
    %c0_100 = arith.constant 0 : index
    %308 = vector.load %arg4[%c10, %c0_100] : memref<14x32xf32, #tpu.memory_space<vmem>>, vector<1x32xf32>
    %cst_101 = arith.constant dense<0.000000e+00> : vector<16xf32>
    %309 = vector.multi_reduction <add>, %306, %cst_101 [1] : vector<16x32xf32> to vector<16xf32>
    %310 = vector.shape_cast %309 : vector<16xf32> to vector<16x1xf32>
    %cst_102 = arith.constant 3.200000e+01 : f32
    %311 = vector.broadcast %cst_102 : f32 to vector<16x1xf32>
    %312 = arith.divf %310, %311 : vector<16x1xf32>
    %313 = vector.broadcast %312 : vector<16x1xf32> to vector<16x32xf32>
    %314 = arith.subf %306, %313 : vector<16x32xf32>
    %315 = arith.mulf %314, %314 : vector<16x32xf32>
    %cst_103 = arith.constant dense<0.000000e+00> : vector<16xf32>
    %316 = vector.multi_reduction <add>, %315, %cst_103 [1] : vector<16x32xf32> to vector<16xf32>
    %317 = vector.shape_cast %316 : vector<16xf32> to vector<16x1xf32>
    %cst_104 = arith.constant 3.200000e+01 : f32
    %318 = vector.broadcast %cst_104 : f32 to vector<16x1xf32>
    %319 = arith.divf %317, %318 : vector<16x1xf32>
    %cst_105 = arith.constant 9.99999997E-7 : f32
    %320 = vector.broadcast %cst_105 : f32 to vector<16x1xf32>
    %321 = arith.addf %319, %320 : vector<16x1xf32>
    %322 = math.rsqrt %321 : vector<16x1xf32>
    %323 = vector.broadcast %322 : vector<16x1xf32> to vector<16x32xf32>
    %324 = arith.mulf %314, %323 : vector<16x32xf32>
    %325 = vector.broadcast %307 : vector<1x32xf32> to vector<16x32xf32>
    %326 = arith.mulf %324, %325 : vector<16x32xf32>
    %327 = vector.broadcast %308 : vector<1x32xf32> to vector<16x32xf32>
    %328 = arith.addf %326, %327 : vector<16x32xf32>
    %c1_106 = arith.constant 1 : index
    %c0_107 = arith.constant 0 : index
    %c0_108 = arith.constant 0 : index
    %329 = vector.load %arg9[%c1_106, %c0_107, %c0_108] : memref<2x32x128xbf16, #tpu.memory_space<vmem>>, vector<1x32x128xbf16>
    %330 = vector.shape_cast %329 : vector<1x32x128xbf16> to vector<32x128xbf16>
    %331 = arith.truncf %328 : vector<16x32xf32> to vector<16x32xbf16>
    %cst_109 = arith.constant dense<0.000000e+00> : vector<16x128xf32>
    %332 = tpu.matmul %331, %330, %cst_109 {dimension_numbers = #tpu.dot_dimension_numbers<[1], [0], [0], [1], [0, 0, 1, 1], [], []>} : vector<16x32xbf16>, vector<32x128xbf16>, vector<16x128xf32> -> vector<16x128xf32>
    %c1_110 = arith.constant 1 : index
    %c0_111 = arith.constant 0 : index
    %333 = vector.load %arg6[%c1_110, %c0_111] : memref<2x128xf32, #tpu.memory_space<vmem>>, vector<1x128xf32>
    %334 = vector.broadcast %333 : vector<1x128xf32> to vector<16x128xf32>
    %335 = arith.addf %332, %334 : vector<16x128xf32>
    %cst_112 = arith.constant 5.000000e-01 : f32
    %336 = vector.broadcast %cst_112 : f32 to vector<16x128xf32>
    %337 = arith.mulf %336, %335 : vector<16x128xf32>
    %cst_113 = arith.constant 4.471500e-02 : f32
    %338 = vector.broadcast %cst_113 : f32 to vector<16x128xf32>
    %339 = arith.mulf %338, %335 : vector<16x128xf32>
    %340 = arith.mulf %339, %335 : vector<16x128xf32>
    %341 = arith.mulf %340, %335 : vector<16x128xf32>
    %342 = arith.addf %335, %341 : vector<16x128xf32>
    %cst_114 = arith.constant 0.797884583 : f32
    %343 = vector.broadcast %cst_114 : f32 to vector<16x128xf32>
    %344 = arith.mulf %343, %342 : vector<16x128xf32>
    %345 = math.tanh %344 : vector<16x128xf32>
    %cst_115 = arith.constant 1.000000e+00 : f32
    %346 = vector.broadcast %cst_115 : f32 to vector<16x128xf32>
    %347 = arith.addf %346, %345 : vector<16x128xf32>
    %348 = arith.mulf %337, %347 : vector<16x128xf32>
    %c1_116 = arith.constant 1 : index
    %c0_117 = arith.constant 0 : index
    %c0_118 = arith.constant 0 : index
    %349 = vector.load %arg10[%c1_116, %c0_117, %c0_118] : memref<2x128x32xbf16, #tpu.memory_space<vmem>>, vector<1x128x32xbf16>
    %350 = vector.shape_cast %349 : vector<1x128x32xbf16> to vector<128x32xbf16>
    %351 = arith.truncf %348 : vector<16x128xf32> to vector<16x128xbf16>
    %cst_119 = arith.constant dense<0.000000e+00> : vector<16x32xf32>
    %352 = tpu.matmul %351, %350, %cst_119 {dimension_numbers = #tpu.dot_dimension_numbers<[1], [0], [0], [1], [0, 0, 1, 1], [], []>} : vector<16x128xbf16>, vector<128x32xbf16>, vector<16x32xf32> -> vector<16x32xf32>
    %353 = arith.addf %306, %352 : vector<16x32xf32>
    %c11 = arith.constant 11 : index
    %c0_120 = arith.constant 0 : index
    %354 = vector.load %arg4[%c11, %c0_120] : memref<14x32xf32, #tpu.memory_space<vmem>>, vector<1x32xf32>
    %355 = vector.broadcast %354 : vector<1x32xf32> to vector<16x32xf32>
    %356 = arith.addf %353, %355 : vector<16x32xf32>
    %357 = vector.extract_strided_slice %356 {offsets = [0, 0], sizes = [1, 32], strides = [1, 1]} : vector<16x32xf32> to vector<1x32xf32>
    %358 = vector.extract_strided_slice %356 {offsets = [8, 0], sizes = [1, 32], strides = [1, 1]} : vector<16x32xf32> to vector<1x32xf32>
    %cst_121 = arith.constant 0.000000e+00 : f32
    %359 = vector.broadcast %cst_121 : f32 to vector<6x32xf32>
    %360 = tpu.concatenate %357, %358, %359 in 0 : vector<1x32xf32>, vector<1x32xf32>, vector<6x32xf32> -> vector<8x32xf32>
    %c12 = arith.constant 12 : index
    %c0_122 = arith.constant 0 : index
    %361 = vector.load %arg4[%c12, %c0_122] : memref<14x32xf32, #tpu.memory_space<vmem>>, vector<1x32xf32>
    %c13 = arith.constant 13 : index
    %c0_123 = arith.constant 0 : index
    %362 = vector.load %arg4[%c13, %c0_123] : memref<14x32xf32, #tpu.memory_space<vmem>>, vector<1x32xf32>
    %cst_124 = arith.constant dense<0.000000e+00> : vector<8xf32>
    %363 = vector.multi_reduction <add>, %360, %cst_124 [1] : vector<8x32xf32> to vector<8xf32>
    %364 = vector.shape_cast %363 : vector<8xf32> to vector<8x1xf32>
    %cst_125 = arith.constant 3.200000e+01 : f32
    %365 = vector.broadcast %cst_125 : f32 to vector<8x1xf32>
    %366 = arith.divf %364, %365 : vector<8x1xf32>
    %367 = vector.broadcast %366 : vector<8x1xf32> to vector<8x32xf32>
    %368 = arith.subf %360, %367 : vector<8x32xf32>
    %369 = arith.mulf %368, %368 : vector<8x32xf32>
    %cst_126 = arith.constant dense<0.000000e+00> : vector<8xf32>
    %370 = vector.multi_reduction <add>, %369, %cst_126 [1] : vector<8x32xf32> to vector<8xf32>
    %371 = vector.shape_cast %370 : vector<8xf32> to vector<8x1xf32>
    %cst_127 = arith.constant 3.200000e+01 : f32
    %372 = vector.broadcast %cst_127 : f32 to vector<8x1xf32>
    %373 = arith.divf %371, %372 : vector<8x1xf32>
    %cst_128 = arith.constant 9.99999997E-7 : f32
    %374 = vector.broadcast %cst_128 : f32 to vector<8x1xf32>
    %375 = arith.addf %373, %374 : vector<8x1xf32>
    %376 = math.rsqrt %375 : vector<8x1xf32>
    %377 = vector.broadcast %376 : vector<8x1xf32> to vector<8x32xf32>
    %378 = arith.mulf %368, %377 : vector<8x32xf32>
    %379 = vector.broadcast %361 : vector<1x32xf32> to vector<8x32xf32>
    %380 = arith.mulf %378, %379 : vector<8x32xf32>
    %381 = vector.broadcast %362 : vector<1x32xf32> to vector<8x32xf32>
    %382 = arith.addf %380, %381 : vector<8x32xf32>
    %c0_129 = arith.constant 0 : index
    %c0_130 = arith.constant 0 : index
    %383 = vector.load %arg11[%c0_129, %c0_130] : memref<32x512xbf16, #tpu.memory_space<vmem>>, vector<32x512xbf16>
    %384 = arith.truncf %382 : vector<8x32xf32> to vector<8x32xbf16>
    %cst_131 = arith.constant dense<0.000000e+00> : vector<8x512xf32>
    %385 = tpu.matmul %384, %383, %cst_131 {dimension_numbers = #tpu.dot_dimension_numbers<[1], [0], [0], [1], [0, 0, 1, 1], [], []>} : vector<8x32xbf16>, vector<32x512xbf16>, vector<8x512xf32> -> vector<8x512xf32>
    %c0_132 = arith.constant 0 : index
    %c0_133 = arith.constant 0 : index
    %386 = vector.load %arg14[%c0_132, %c0_133] : memref<1x896xf32, #tpu.memory_space<vmem>>, vector<1x512xf32>
    %387 = vector.broadcast %386 : vector<1x512xf32> to vector<8x512xf32>
    %388 = arith.addf %385, %387 : vector<8x512xf32>
    %cst_134 = arith.constant 0.000000e+00 : f32
    %389 = vector.broadcast %cst_134 : f32 to vector<8x512xf32>
    %390 = arith.maximumf %388, %389 : vector<8x512xf32>
    %c0_135 = arith.constant 0 : index
    %c0_136 = arith.constant 0 : index
    %391 = vector.load %arg12[%c0_135, %c0_136] : memref<512x256xbf16, #tpu.memory_space<vmem>>, vector<512x256xbf16>
    %392 = arith.truncf %390 : vector<8x512xf32> to vector<8x512xbf16>
    %cst_137 = arith.constant dense<0.000000e+00> : vector<8x256xf32>
    %393 = tpu.matmul %392, %391, %cst_137 {dimension_numbers = #tpu.dot_dimension_numbers<[1], [0], [0], [1], [0, 0, 1, 1], [], []>} : vector<8x512xbf16>, vector<512x256xbf16>, vector<8x256xf32> -> vector<8x256xf32>
    %c0_138 = arith.constant 0 : index
    %c512 = arith.constant 512 : index
    %394 = vector.load %arg14[%c0_138, %c512] : memref<1x896xf32, #tpu.memory_space<vmem>>, vector<1x256xf32>
    %395 = vector.broadcast %394 : vector<1x256xf32> to vector<8x256xf32>
    %396 = arith.addf %393, %395 : vector<8x256xf32>
    %cst_139 = arith.constant 0.000000e+00 : f32
    %397 = vector.broadcast %cst_139 : f32 to vector<8x256xf32>
    %398 = arith.maximumf %396, %397 : vector<8x256xf32>
    %c0_140 = arith.constant 0 : index
    %c0_141 = arith.constant 0 : index
    %399 = vector.load %arg13[%c0_140, %c0_141] : memref<256x128xbf16, #tpu.memory_space<vmem>>, vector<256x128xbf16>
    %400 = arith.truncf %398 : vector<8x256xf32> to vector<8x256xbf16>
    %cst_142 = arith.constant dense<0.000000e+00> : vector<8x128xf32>
    %401 = tpu.matmul %400, %399, %cst_142 {dimension_numbers = #tpu.dot_dimension_numbers<[1], [0], [0], [1], [0, 0, 1, 1], [], []>} : vector<8x256xbf16>, vector<256x128xbf16>, vector<8x128xf32> -> vector<8x128xf32>
    %c0_143 = arith.constant 0 : index
    %c768 = arith.constant 768 : index
    %402 = vector.load %arg14[%c0_143, %c768] : memref<1x896xf32, #tpu.memory_space<vmem>>, vector<1x128xf32>
    %403 = vector.broadcast %402 : vector<1x128xf32> to vector<8x128xf32>
    %404 = arith.addf %401, %403 : vector<8x128xf32>
    %c0_144 = arith.constant 0 : index
    %c0_145 = arith.constant 0 : index
    %405 = vector.load %arg15[%c0_144, %c0_145] : memref<8x128xf32, #tpu.memory_space<vmem>>, vector<8x128xf32>
    tpu.vector_store %arg15[%c0_144, %c0_145], %404 {strides = array<i32>} : memref<8x128xf32, #tpu.memory_space<vmem>>, vector<8x128xf32>,
    return
  }
  func.func @transform_0(%arg0: i32) -> (i32, i32) {
    %c0_i32 = arith.constant 0 : i32
    %c0_i32_0 = arith.constant 0 : i32
    %c0_i32_1 = arith.constant 0 : i32
    return %c0_i32, %c0_i32_0 : i32, i32
  }
  func.func @transform_1(%arg0: i32) -> (i32, i32) {
    %c0_i32 = arith.constant 0 : i32
    %c0_i32_0 = arith.constant 0 : i32
    %c0_i32_1 = arith.constant 0 : i32
    return %c0_i32, %c0_i32_0 : i32, i32
  }
  func.func @transform_2(%arg0: i32) -> (i32, i32) {
    %c0_i32 = arith.constant 0 : i32
    %c0_i32_0 = arith.constant 0 : i32
    %c0_i32_1 = arith.constant 0 : i32
    return %c0_i32, %c0_i32_0 : i32, i32
  }
  func.func @transform_3(%arg0: i32) -> (i32, i32) {
    %c0_i32 = arith.constant 0 : i32
    %c0_i32_0 = arith.constant 0 : i32
    %c0_i32_1 = arith.constant 0 : i32
    return %c0_i32, %c0_i32_0 : i32, i32
  }
  func.func @transform_4(%arg0: i32) -> (i32, i32) {
    %c0_i32 = arith.constant 0 : i32
    %c0_i32_0 = arith.constant 0 : i32
    %c0_i32_1 = arith.constant 0 : i32
    return %c0_i32, %c0_i32_0 : i32, i32
  }
  func.func @transform_5(%arg0: i32) -> (i32, i32) {
    %c0_i32 = arith.constant 0 : i32
    %c0_i32_0 = arith.constant 0 : i32
    %c0_i32_1 = arith.constant 0 : i32
    return %c0_i32, %c0_i32_0 : i32, i32
  }
  func.func @transform_6(%arg0: i32) -> (i32, i32, i32) {
    %c0_i32 = arith.constant 0 : i32
    %c0_i32_0 = arith.constant 0 : i32
    %c0_i32_1 = arith.constant 0 : i32
    %c0_i32_2 = arith.constant 0 : i32
    return %c0_i32, %c0_i32_0, %c0_i32_1 : i32, i32, i32
  }
  func.func @transform_7(%arg0: i32) -> (i32, i32, i32) {
    %c0_i32 = arith.constant 0 : i32
    %c0_i32_0 = arith.constant 0 : i32
    %c0_i32_1 = arith.constant 0 : i32
    %c0_i32_2 = arith.constant 0 : i32
    return %c0_i32, %c0_i32_0, %c0_i32_1 : i32, i32, i32
  }
  func.func @transform_8(%arg0: i32) -> (i32, i32, i32) {
    %c0_i32 = arith.constant 0 : i32
    %c0_i32_0 = arith.constant 0 : i32
    %c0_i32_1 = arith.constant 0 : i32
    %c0_i32_2 = arith.constant 0 : i32
    return %c0_i32, %c0_i32_0, %c0_i32_1 : i32, i32, i32
  }
  func.func @transform_9(%arg0: i32) -> (i32, i32, i32) {
    %c0_i32 = arith.constant 0 : i32
    %c0_i32_0 = arith.constant 0 : i32
    %c0_i32_1 = arith.constant 0 : i32
    %c0_i32_2 = arith.constant 0 : i32
    return %c0_i32, %c0_i32_0, %c0_i32_1 : i32, i32, i32
  }
  func.func @transform_10(%arg0: i32) -> (i32, i32) {
    %c0_i32 = arith.constant 0 : i32
    %c0_i32_0 = arith.constant 0 : i32
    %c0_i32_1 = arith.constant 0 : i32
    return %c0_i32, %c0_i32_0 : i32, i32
  }
  func.func @transform_11(%arg0: i32) -> (i32, i32) {
    %c0_i32 = arith.constant 0 : i32
    %c0_i32_0 = arith.constant 0 : i32
    %c0_i32_1 = arith.constant 0 : i32
    return %c0_i32, %c0_i32_0 : i32, i32
  }
  func.func @transform_12(%arg0: i32) -> (i32, i32) {
    %c0_i32 = arith.constant 0 : i32
    %c0_i32_0 = arith.constant 0 : i32
    %c0_i32_1 = arith.constant 0 : i32
    return %c0_i32, %c0_i32_0 : i32, i32
  }
  func.func @transform_13(%arg0: i32) -> (i32, i32) {
    %c0_i32 = arith.constant 0 : i32
    %c0_i32_0 = arith.constant 0 : i32
    %c0_i32_1 = arith.constant 0 : i32
    return %c0_i32, %c0_i32_0 : i32, i32
  }
  func.func @transform_14(%arg0: i32) -> (i32, i32) {
    %c0_i32 = arith.constant 0 : i32
    %c0_i32_0 = arith.constant 0 : i32
    %c0_i32_1 = arith.constant 0 : i32
    return %c0_i32, %c0_i32_0 : i32, i32
  }
}

</mosaic_0001>

<llo_original>
// kernel: forward.1
$region0: #{forward.1}
  #allocation0 [shape = 'u32[]', space=smem, size = 0x4, offset = 0x4, fixed_abs, tag = 'smem constant byte address 0x4 - core index']
  #allocation1 [shape = 'u32[144,128]{1,0:T(1,128)}', space=vmem, size = 0x12000, scoped, tag = 'internal scratch']
  %s0 = inlined_call_operand.vmem [shape: f32[16,192], index: 0, kind: input, shape index: {}]
  %s1 = inlined_call_operand.vmem [shape: bf16[192,32], index: 1, kind: input, shape index: {}]
  %s2 = inlined_call_operand.vmem [shape: f32[16,32], index: 2, kind: input, shape index: {}]
  %s3 = inlined_call_operand.vmem [shape: f32[14,32], index: 3, kind: input, shape index: {}]
  %s4 = inlined_call_operand.vmem [shape: f32[2,96], index: 4, kind: input, shape index: {}]
  %s5 = inlined_call_operand.vmem [shape: f32[2,128], index: 5, kind: input, shape index: {}]
  %s6 = inlined_call_operand.vmem [shape: bf16[2,32,96], index: 6, kind: input, shape index: {}]
  %s7 = inlined_call_operand.vmem [shape: bf16[2,32,32], index: 7, kind: input, shape index: {}]
  %s8 = inlined_call_operand.vmem [shape: bf16[2,32,128], index: 8, kind: input, shape index: {}]
  %s9 = inlined_call_operand.vmem [shape: bf16[2,128,32], index: 9, kind: input, shape index: {}]
  %s10 = inlined_call_operand.vmem [shape: bf16[32,512], index: 10, kind: input, shape index: {}]
  %s11 = inlined_call_operand.vmem [shape: bf16[512,256], index: 11, kind: input, shape index: {}]
  %s12 = inlined_call_operand.vmem [shape: bf16[256,128], index: 12, kind: input, shape index: {}]
  %s13 = inlined_call_operand.vmem [shape: f32[1,896], index: 13, kind: input, shape index: {}]
  %s14 = inlined_call_operand.vmem [shape: f32[8,128], index: 14, kind: output, shape index: {}]
  %s15 = sld [smem:[#allocation0]]
  $region66: #{forward.1} parent=0
    _
  %s17 = ssub.s32 1, %s15
  %s18 = scalar_select 0, %s17, %s15
  // Predicated region
  $region2: #{forward.1} parent=0 // pred_check
    _
  $region3: #{forward.1} parent=0 // pred_check_branch
    %20 = sbr.rel (0) target = $region5
  $region4: #{forward.1} parent=0 // pred_region
    _
  $region5: #{forward.1} parent=0 // pred_fallthru
    _
  // Predicated region
  $region6: #{forward.1} parent=0 // pred_check
    _
  $region7: #{forward.1} parent=0 // pred_check_branch
    %22 = sbr.rel (0) target = $region9
  $region8: #{forward.1} parent=0 // pred_region
    _
  $region9: #{forward.1} parent=0 // pred_fallthru
    _
  // Predicated region
  $region10: #{forward.1} parent=0 // pred_check
    _
  $region11: #{forward.1} parent=0 // pred_check_branch
    %24 = sbr.rel (0) target = $region13
  $region12: #{forward.1} parent=0 // pred_region
    _
  $region13: #{forward.1} parent=0 // pred_fallthru
    _
  // Predicated region
  $region14: #{forward.1} parent=0 // pred_check
    _
  $region15: #{forward.1} parent=0 // pred_check_branch
    %26 = sbr.rel (0) target = $region17
  $region16: #{forward.1} parent=0 // pred_region
    _
  $region17: #{forward.1} parent=0 // pred_fallthru
    _
  // Predicated region
  $region18: #{forward.1} parent=0 // pred_check
    _
  $region19: #{forward.1} parent=0 // pred_check_branch
    %28 = sbr.rel (0) target = $region21
  $region20: #{forward.1} parent=0 // pred_region
    _
  $region21: #{forward.1} parent=0 // pred_fallthru
    _
  // Predicated region
  $region22: #{forward.1} parent=0 // pred_check
    _
  $region23: #{forward.1} parent=0 // pred_check_branch
    %30 = sbr.rel (0) target = $region25
  $region24: #{forward.1} parent=0 // pred_region
    _
  $region25: #{forward.1} parent=0 // pred_fallthru
    _
  // Predicated region
  $region26: #{forward.1} parent=0 // pred_check
    _
  $region27: #{forward.1} parent=0 // pred_check_branch
    %32 = sbr.rel (0) target = $region29
  $region28: #{forward.1} parent=0 // pred_region
    _
  $region29: #{forward.1} parent=0 // pred_fallthru
    _
  // Predicated region
  $region30: #{forward.1} parent=0 // pred_check
    _
  $region31: #{forward.1} parent=0 // pred_check_branch
    %34 = sbr.rel (0) target = $region33
  $region32: #{forward.1} parent=0 // pred_region
    _
  $region33: #{forward.1} parent=0 // pred_fallthru
    _
  // Predicated region
  $region34: #{forward.1} parent=0 // pred_check
    _
  $region35: #{forward.1} parent=0 // pred_check_branch
    %36 = sbr.rel (0) target = $region37
  $region36: #{forward.1} parent=0 // pred_region
    _
  $region37: #{forward.1} parent=0 // pred_fallthru
    _
  // Predicated region
  $region38: #{forward.1} parent=0 // pred_check
    _
  $region39: #{forward.1} parent=0 // pred_check_branch
    %38 = sbr.rel (0) target = $region41
  $region40: #{forward.1} parent=0 // pred_region
    _
  $region41: #{forward.1} parent=0 // pred_fallthru
    _
  // Predicated region
  $region42: #{forward.1} parent=0 // pred_check
    _
  $region43: #{forward.1} parent=0 // pred_check_branch
    %40 = sbr.rel (0) target = $region45
  $region44: #{forward.1} parent=0 // pred_region
    _
  $region45: #{forward.1} parent=0 // pred_fallthru
    _
  // Predicated region
  $region46: #{forward.1} parent=0 // pred_check
    _
  $region47: #{forward.1} parent=0 // pred_check_branch
    %42 = sbr.rel (0) target = $region49
  $region48: #{forward.1} parent=0 // pred_region
    _
  $region49: #{forward.1} parent=0 // pred_fallthru
    _
  // Predicated region
  $region50: #{forward.1} parent=0 // pred_check
    _
  $region51: #{forward.1} parent=0 // pred_check_branch
    %44 = sbr.rel (0) target = $region53
  $region52: #{forward.1} parent=0 // pred_region
    _
  $region53: #{forward.1} parent=0 // pred_fallthru
    _
  // Predicated region
  $region54: #{forward.1} parent=0 // pred_check
    _
  $region55: #{forward.1} parent=0 // pred_check_branch
    %46 = sbr.rel (0) target = $region57
  $region56: #{forward.1} parent=0 // pred_region
    _
  $region57: #{forward.1} parent=0 // pred_fallthru
    _
  %v48 = vld [vmem:[%s0] sm:$0xff]
  %v49 = vld [vmem:[%s0 + $0x8] sm:$0xff]
  %v50 = vld [vmem:[%s0 + $0x10] sm:$0xff]
  %v51 = vld [vmem:[%s0 + $0x18] sm:$0xff]
  %v52 = vld [vmem:[%s1] sm:$0xf]
  %v53 = vld [vmem:[%s1 + $0x4] sm:$0xf]
  %v54 = vld [vmem:[%s1 + $0x8] sm:$0xf]
  %v55 = vld [vmem:[%s1 + $0xc] sm:$0xf]
  %v56 = vld [vmem:[%s1 + $0x10] sm:$0xf]
  %v57 = vld [vmem:[%s1 + $0x14] sm:$0xf]
  %v58 = vld [vmem:[%s1 + $0x18] sm:$0xf]
  %v59 = vld [vmem:[%s1 + $0x1c] sm:$0xf]
  %v60 = vld [vmem:[%s1 + $0x20] sm:$0xf]
  %v61 = vld [vmem:[%s1 + $0x24] sm:$0xf]
  %v62 = vld [vmem:[%s1 + $0x28] sm:$0xf]
  %v63 = vld [vmem:[%s1 + $0x2c] sm:$0xf]
  %v64 = vld [vmem:[%s1 + $0x30] sm:$0xf]
  %v65 = vld [vmem:[%s1 + $0x34] sm:$0xf]
  %v66 = vld [vmem:[%s1 + $0x38] sm:$0xf]
  %v67 = vld [vmem:[%s1 + $0x3c] sm:$0xf]
  %v68 = vld [vmem:[%s1 + $0x40] sm:$0xf]
  %v69 = vld [vmem:[%s1 + $0x44] sm:$0xf]
  %v70 = vld [vmem:[%s1 + $0x48] sm:$0xf]
  %v71 = vld [vmem:[%s1 + $0x4c] sm:$0xf]
  %v72 = vld [vmem:[%s1 + $0x50] sm:$0xf]
  %v73 = vld [vmem:[%s1 + $0x54] sm:$0xf]
  %v74 = vld [vmem:[%s1 + $0x58] sm:$0xf]
  %v75 = vld [vmem:[%s1 + $0x5c] sm:$0xf]
  %v76 = vpack.c.bf16 %v50, %v48
  %v77 = vpack.c.bf16 %v51, %v49
  %v78 = vld [vmem:[%s2] sm:$0xff]
  %v79 = vld [vmem:[%s2 + $0x8] sm:$0xff]
  %v104 = vunpack.c.l.b16 %v52
  %v105 = vunpack.c.l.b16 %v53
  %v106 = vunpack.c.l.b16 %v54
  %v107 = vunpack.c.l.b16 %v55
  %v108 = vunpack.c.l.b16 %v56
  %v109 = vunpack.c.l.b16 %v57
  %v110 = vunpack.c.l.b16 %v58
  %v111 = vunpack.c.l.b16 %v59
  %v112 = vunpack.c.l.b16 %v60
  %v113 = vunpack.c.l.b16 %v61
  %v114 = vunpack.c.l.b16 %v62
  %v115 = vunpack.c.l.b16 %v63
  %v116 = vunpack.c.l.b16 %v64
  %v117 = vunpack.c.l.b16 %v65
  %v118 = vunpack.c.l.b16 %v66
  %v119 = vunpack.c.l.b16 %v67
  %v120 = vunpack.c.l.b16 %v68
  %v121 = vunpack.c.l.b16 %v69
  %v122 = vunpack.c.l.b16 %v70
  %v123 = vunpack.c.l.b16 %v71
  %v124 = vunpack.c.l.b16 %v72
  %v125 = vunpack.c.l.b16 %v73
  %v126 = vunpack.c.l.b16 %v74
  %v127 = vunpack.c.l.b16 %v75
  %v128 = vpack.c.b16 %v105, %v104
  %v129 = vpack.c.b16 %v107, %v106
  %v130 = vpack.c.b16 %v109, %v108
  %v131 = vpack.c.b16 %v111, %v110
  %v132 = vpack.c.b16 %v113, %v112
  %v133 = vpack.c.b16 %v115, %v114
  %v134 = vpack.c.b16 %v117, %v116
  %v135 = vpack.c.b16 %v119, %v118
  %v136 = vpack.c.b16 %v121, %v120
  %v137 = vpack.c.b16 %v123, %v122
  %v138 = vpack.c.b16 %v125, %v124
  %v139 = vpack.c.b16 %v127, %v126
  %vm152 = vcmask 523264
  %v154 = vsel %vm152, %v77, 0
  %156 = vmatprep.subr.bf16.mxu0 0
  %157 = vmatpush1.bf16.msra.mxu0 %v128
  %158 = vmatprep.subr.bf16.mxu0 0
  %159 = vmatpush1.bf16.msra.mxu0 %v129
  %160 = vmatprep.subr.bf16.mxu0 0
  %161 = vmatpush1.bf16.msra.mxu0 %v130
  %162 = vmatprep.subr.bf16.mxu0 0
  %163 = vmatpush1.bf16.msra.mxu0 %v131
  %164 = vmatprep.subr.bf16.mxu0 0
  %165 = vmatpush1.bf16.msra.mxu0 %v132
  %166 = vmatprep.subr.bf16.mxu0 0
  %167 = vmatpush1.bf16.msra.mxu0 %v133
  %168 = vmatprep.subr.bf16.mxu0 0
  %169 = vmatpush1.bf16.msra.mxu0 %v134
  %170 = vmatprep.subr.bf16.mxu0 0
  %171 = vmatpush1.bf16.msra.mxu0 %v135
  %172 = vmatprep.subr.bf16.mxu0 0
  %173 = vmatpush1.bf16.msra.mxu0 %v136
  %174 = vmatprep.subr.bf16.mxu0 0
  %175 = vmatpush1.bf16.msra.mxu0 %v137
  %176 = vmatprep.subr.bf16.mxu0 0
  %177 = vmatpush1.bf16.msra.mxu0 %v138
  %178 = vmatprep.subr.bf16.mxu0 0
  %179 = vmatpush1.bf16.msra.mxu0 %v139
  %180 = vmatprep.subr.bf16.mxu0 0
  %181 = vmatpush1.bf16.msra.mxu0 0
  %182 = vmatprep.subr.bf16.mxu0 0
  %183 = vmatpush1.bf16.msra.mxu0 0
  %184 = vmatprep.subr.bf16.mxu0 0
  %185 = vmatpush1.bf16.msra.mxu0 0
  %186 = vmatprep.subr.bf16.mxu0 0
  %187 = vmatpush1.bf16.msra.mxu0 0
  %188 = vmatprep.mubr.bf16.mxu0 %v154
  %189 = vmatmul.mubr.bf16.gmra.mrb[0].mxu0 %v76
  %v190 = vpop.f32.mrb[0].mxu0
  %v191 = vadd.f32 %v78, %v190
  %v192 = vpop.f32.mrb[0].mxu0
  %v193 = vpop.f32.mrb[0].mxu0
  %v194 = vadd.f32 %v79, %v193
  %v195 = vpop.f32.mrb[0].mxu0
  %196 = vdwg.mxu0
  %v197 = vlaneseq
  %v198 = vshrl.u32 %v197, 7
  %v199 = vadd.s32 %v198, 8
  %v200 = vlaneseq
  %v201 = vand.u32 %v200, 127
  %v202 = vshra.s32 %v198, 3
  %v203 = vshra.s32 %v199, 3
  %v204 = vshra.s32 %v201, 3
  %vm205 = vcmp.eq.s32.totalorder %v202, %v204
  %vm206 = vcmp.eq.s32.totalorder %v203, %v204
  %v207 = vand.u32 %v201, 7
  %vm208 = vcmp.lt.s32.totalorder %v207, 5
  %vm209 = vmand %vm205, %vm208
  %vm210 = vmand %vm206, %vm208
  %v211 = vsel %vm209, 0.0, -1e+30
  %v212 = vsel %vm210, 0.0, -1e+30
  %v213 = vld [vmem:[%s3] sm:$0x1]
  %v214 = vld [vmem:[%s3 + $0x1] sm:$0x1]
  %vm215 = vcmask 261120
  %v216 = vsel %vm215, %v191, 0.0
  %217 = vadd.xlane.f32.xlu0 %v216
  %v218 = vpop.xlane.xlu0 %217
  %v219 = vsel %vm215, %v194, 0.0
  %220 = vadd.xlane.f32.xlu0 %v219
  %v221 = vpop.xlane.xlu0 %220
  %v222 = vrcp.pop 32.0
  %v223 = vmul.f32 %v218, %v222
  %v224 = vmul.f32 %v221, %v222
  %v225 = vsub.f32 %v191, %v223
  %v226 = vsub.f32 %v194, %v224
  %v227 = vmul.f32 %v225, %v225
  %v228 = vmul.f32 %v226, %v226
  %v229 = vsel %vm215, %v227, 0.0
  %230 = vadd.xlane.f32.xlu0 %v229
  %v231 = vpop.xlane.xlu0 %230
  %v232 = vsel %vm215, %v228, 0.0
  %233 = vadd.xlane.f32.xlu0 %v232
  %v234 = vpop.xlane.xlu0 %233
  %v235 = vmul.f32 %v231, %v222
  %v236 = vmul.f32 %v234, %v222
  %v237 = vadd.f32 %v235, 1e-06
  %v238 = vadd.f32 %v236, 1e-06
  %v239 = vrsqrt.pop %v237
  %v240 = vrsqrt.pop %v238
  %v241 = vmul.f32 %v225, %v239
  %v242 = vmul.f32 %v226, %v240
  %v243 = vlaneseq
  %v244 = vshrl.u32 %v243, 7
  %v245 = vsub.s32 0, %v244
  %v246 = vrot.slane %v213, %v245
  %v247 = vmul.f32 %v241, %v246
  %v248 = vmul.f32 %v242, %v246
  %v249 = vlaneseq
  %v250 = vshrl.u32 %v249, 7
  %v251 = vsub.s32 0, %v250
  %v252 = vrot.slane %v214, %v251
  %v253 = vadd.f32 %v247, %v252
  %v254 = vadd.f32 %v248, %v252
  %v255 = vld [vmem:[%s6] sm:$0xf]
  %v256 = vld [vmem:[%s6 + $0x4] sm:$0xf]
  %v257 = vld [vmem:[%s6 + $0x8] sm:$0xf]
  %v258 = vld [vmem:[%s6 + $0xc] sm:$0xf]
  %v259 = vpack.c.bf16 %v254, %v253
  %v260 = vld [vmem:[%s4] sm:$0x1]
  %v261 = vlaneseq
  %v262 = vshrl.u32 %v261, 7
  %v263 = vsub.s32 0, %v262
  %v264 = vrot.slane %v260, %v263
  %v269 = vunpack.c.l.b16 %v255
  %v270 = vunpack.c.l.b16 %v256
  %v271 = vunpack.c.l.b16 %v257
  %v272 = vunpack.c.l.b16 %v258
  %v273 = vpack.c.b16 %v270, %v269
  %v274 = vpack.c.b16 %v272, %v271
  %v278 = vsel %vm215, %v259, 0
  %280 = vmatprep.subr.bf16.mxu0 0
  %281 = vmatpush1.bf16.msra.mxu0 %v273
  %282 = vmatprep.subr.bf16.mxu0 0
  %283 = vmatpush1.bf16.msra.mxu0 %v274
  %284 = vmatprep.subr.bf16.mxu0 0
  %285 = vmatpush1.bf16.msra.mxu0 0
  %286 = vmatprep.subr.bf16.mxu0 0
  %287 = vmatpush1.bf16.msra.mxu0 0
  %288 = vmatprep.subr.bf16.mxu0 0
  %289 = vmatpush1.bf16.msra.mxu0 0
  %290 = vmatprep.subr.bf16.mxu0 0
  %291 = vmatpush1.bf16.msra.mxu0 0
  %292 = vmatprep.subr.bf16.mxu0 0
  %293 = vmatpush1.bf16.msra.mxu0 0
  %294 = vmatprep.subr.bf16.mxu0 0
  %295 = vmatpush1.bf16.msra.mxu0 0
  %296 = vmatprep.subr.bf16.mxu0 0
  %297 = vmatpush1.bf16.msra.mxu0 0
  %298 = vmatprep.subr.bf16.mxu0 0
  %299 = vmatpush1.bf16.msra.mxu0 0
  %300 = vmatprep.subr.bf16.mxu0 0
  %301 = vmatpush1.bf16.msra.mxu0 0
  %302 = vmatprep.subr.bf16.mxu0 0
  %303 = vmatpush1.bf16.msra.mxu0 0
  %304 = vmatprep.subr.bf16.mxu0 0
  %305 = vmatpush1.bf16.msra.mxu0 0
  %306 = vmatprep.subr.bf16.mxu0 0
  %307 = vmatpush1.bf16.msra.mxu0 0
  %308 = vmatprep.subr.bf16.mxu0 0
  %309 = vmatpush1.bf16.msra.mxu0 0
  %310 = vmatprep.subr.bf16.mxu0 0
  %311 = vmatpush1.bf16.msra.mxu0 0
  %312 = vmatprep.mubr.bf16.mxu0 0
  %313 = vmatmul.mubr.bf16.gmra.mrb[0].mxu0 %v278
  %v314 = vpop.f32.mrb[0].mxu0
  %v315 = vadd.f32 %v264, %v314
  %v316 = vpop.f32.mrb[0].mxu0
  %v317 = vpop.f32.mrb[0].mxu0
  %v318 = vadd.f32 %v264, %v317
  %v319 = vpop.f32.mrb[0].mxu0
  %320 = vdwg.mxu0
  %v321 = vpack.c.bf16 %v318, %v315
  %323 = vrot.lane.b32.xlu0 %v321, 96
  %v324 = vpop.permute.xlu0 %323
  %vm325 = vcmask 64512
  %v327 = vsel %vm325, %v321, 0
  %v330 = vsel %vm325, %v324, 0
  %332 = vmatprep.subr.bf16.mxu0 0
  %333 = vmatpush1.bf16.xpose.msra.mxu0 %v330
  %334 = vmatprep.subr.bf16.mxu0 0
  %335 = vmatpush1.bf16.xpose.msra.mxu0 0
  %336 = vmatprep.subr.bf16.mxu0 0
  %337 = vmatpush1.bf16.xpose.msra.mxu0 0
  %338 = vmatprep.subr.bf16.mxu0 0
  %339 = vmatpush1.bf16.xpose.msra.mxu0 0
  %340 = vmatprep.subr.bf16.mxu0 0
  %341 = vmatpush1.bf16.xpose.msra.mxu0 0
  %342 = vmatprep.subr.bf16.mxu0 0
  %343 = vmatpush1.bf16.xpose.msra.mxu0 0
  %344 = vmatprep.subr.bf16.mxu0 0
  %345 = vmatpush1.bf16.xpose.msra.mxu0 0
  %346 = vmatprep.subr.bf16.mxu0 0
  %347 = vmatpush1.bf16.xpose.msra.mxu0 0
  %348 = vmatprep.subr.bf16.mxu0 0
  %349 = vmatpush1.bf16.xpose.msra.mxu0 0
  %350 = vmatprep.subr.bf16.mxu0 0
  %351 = vmatpush1.bf16.xpose.msra.mxu0 0
  %352 = vmatprep.subr.bf16.mxu0 0
  %353 = vmatpush1.bf16.xpose.msra.mxu0 0
  %354 = vmatprep.subr.bf16.mxu0 0
  %355 = vmatpush1.bf16.xpose.msra.mxu0 0
  %356 = vmatprep.subr.bf16.mxu0 0
  %357 = vmatpush1.bf16.xpose.msra.mxu0 0
  %358 = vmatprep.subr.bf16.mxu0 0
  %359 = vmatpush1.bf16.xpose.msra.mxu0 0
  %360 = vmatprep.subr.bf16.mxu0 0
  %361 = vmatpush1.bf16.xpose.msra.mxu0 0
  %362 = vmatprep.subr.bf16.mxu0 0
  %363 = vmatpush1.bf16.xpose.msra.mxu0 0
  %364 = vmatprep.mubr.bf16.mxu0 0
  %365 = vmatmul.mubr.bf16.gmra.mrb[0].mxu0 %v327
  %v366 = vpop.f32.mrb[0].mxu0
  %v367 = vadd.f32 %v211, %v366
  %v368 = vpop.f32.mrb[0].mxu0
  %v369 = vpop.f32.mrb[0].mxu0
  %v370 = vadd.f32 %v212, %v369
  %v371 = vpop.f32.mrb[0].mxu0
  %372 = vdwg.mxu0
  %vm373 = vcmask 130048
  %v374 = vsel %vm373, %v367, -inf
  %375 = vmax.xlane.f32.xlu0 %v374
  %v376 = vpop.xlane.xlu0 %375
  %v377 = vsel %vm373, %v370, -inf
  %378 = vmax.xlane.f32.xlu0 %v377
  %v379 = vpop.xlane.xlu0 %378
  %v380 = vsub.f32 %v367, %v376
  %v381 = vsub.f32 %v370, %v379
  %v382 = vmul.f32 %v380, 1.442695
  %v383 = vpow.pop %v382
  %v384 = vmul.f32 %v381, 1.442695
  %v385 = vpow.pop %v384
  %v386 = vsel %vm373, %v383, 0.0
  %387 = vadd.xlane.f32.xlu0 %v386
  %v388 = vpop.xlane.xlu0 %387
  %v389 = vsel %vm373, %v385, 0.0
  %390 = vadd.xlane.f32.xlu0 %v389
  %v391 = vpop.xlane.xlu0 %390
  %v392 = vrcp.pop %v388
  %v393 = vrcp.pop %v391
  %v394 = vmul.f32 %v383, %v392
  %v395 = vmul.f32 %v385, %v393
  %v396 = vpack.c.bf16 %v395, %v394
  %397 = vrot.lane.b32.xlu0 %v321, 64
  %v398 = vpop.permute.xlu0 %397
  %v401 = vsel %vm373, %v396, 0
  %403 = vmatprep.subr.bf16.mxu0 0
  %404 = vmatpush1.bf16.msra.mxu0 %v398
  %405 = vmatprep.subr.bf16.mxu0 0
  %406 = vmatpush1.bf16.msra.mxu0 0
  %407 = vmatprep.subr.bf16.mxu0 0
  %408 = vmatpush1.bf16.msra.mxu0 0
  %409 = vmatprep.subr.bf16.mxu0 0
  %410 = vmatpush1.bf16.msra.mxu0 0
  %411 = vmatprep.subr.bf16.mxu0 0
  %412 = vmatpush1.bf16.msra.mxu0 0
  %413 = vmatprep.subr.bf16.mxu0 0
  %414 = vmatpush1.bf16.msra.mxu0 0
  %415 = vmatprep.subr.bf16.mxu0 0
  %416 = vmatpush1.bf16.msra.mxu0 0
  %417 = vmatprep.subr.bf16.mxu0 0
  %418 = vmatpush1.bf16.msra.mxu0 0
  %419 = vmatprep.subr.bf16.mxu0 0
  %420 = vmatpush1.bf16.msra.mxu0 0
  %421 = vmatprep.subr.bf16.mxu0 0
  %422 = vmatpush1.bf16.msra.mxu0 0
  %423 = vmatprep.subr.bf16.mxu0 0
  %424 = vmatpush1.bf16.msra.mxu0 0
  %425 = vmatprep.subr.bf16.mxu0 0
  %426 = vmatpush1.bf16.msra.mxu0 0
  %427 = vmatprep.subr.bf16.mxu0 0
  %428 = vmatpush1.bf16.msra.mxu0 0
  %429 = vmatprep.subr.bf16.mxu0 0
  %430 = vmatpush1.bf16.msra.mxu0 0
  %431 = vmatprep.subr.bf16.mxu0 0
  %432 = vmatpush1.bf16.msra.mxu0 0
  %433 = vmatprep.subr.bf16.mxu0 0
  %434 = vmatpush1.bf16.msra.mxu0 0
  %435 = vmatprep.mubr.bf16.mxu0 0
  %436 = vmatmul.mubr.bf16.gmra.mrb[0].mxu0 %v401
  %v437 = vpop.f32.mrb[0].mxu0
  %v438 = vadd.f32 0.0, %v437
  %v439 = vpop.f32.mrb[0].mxu0
  %v440 = vpop.f32.mrb[0].mxu0
  %v441 = vadd.f32 0.0, %v440
  %v442 = vpop.f32.mrb[0].mxu0
  %443 = vdwg.mxu0
  %444 = vrot.lane.b32.xlu0 %v321, 120
  %v445 = vpop.permute.xlu0 %444
  %446 = vrot.lane.b32.xlu0 %v321, 88
  %v447 = vpop.permute.xlu0 %446
  %v449 = vsel %vm325, %v445, 0
  %v452 = vsel %vm325, %v447, 0
  %454 = vmatprep.subr.bf16.mxu0 0
  %455 = vmatpush1.bf16.xpose.msra.mxu0 %v452
  %456 = vmatprep.subr.bf16.mxu0 0
  %457 = vmatpush1.bf16.xpose.msra.mxu0 0
  %458 = vmatprep.subr.bf16.mxu0 0
  %459 = vmatpush1.bf16.xpose.msra.mxu0 0
  %460 = vmatprep.subr.bf16.mxu0 0
  %461 = vmatpush1.bf16.xpose.msra.mxu0 0
  %462 = vmatprep.subr.bf16.mxu0 0
  %463 = vmatpush1.bf16.xpose.msra.mxu0 0
  %464 = vmatprep.subr.bf16.mxu0 0
  %465 = vmatpush1.bf16.xpose.msra.mxu0 0
  %466 = vmatprep.subr.bf16.mxu0 0
  %467 = vmatpush1.bf16.xpose.msra.mxu0 0
  %468 = vmatprep.subr.bf16.mxu0 0
  %469 = vmatpush1.bf16.xpose.msra.mxu0 0
  %470 = vmatprep.subr.bf16.mxu0 0
  %471 = vmatpush1.bf16.xpose.msra.mxu0 0
  %472 = vmatprep.subr.bf16.mxu0 0
  %473 = vmatpush1.bf16.xpose.msra.mxu0 0
  %474 = vmatprep.subr.bf16.mxu0 0
  %475 = vmatpush1.bf16.xpose.msra.mxu0 0
  %476 = vmatprep.subr.bf16.mxu0 0
  %477 = vmatpush1.bf16.xpose.msra.mxu0 0
  %478 = vmatprep.subr.bf16.mxu0 0
  %479 = vmatpush1.bf16.xpose.msra.mxu0 0
  %480 = vmatprep.subr.bf16.mxu0 0
  %481 = vmatpush1.bf16.xpose.msra.mxu0 0
  %482 = vmatprep.subr.bf16.mxu0 0
  %483 = vmatpush1.bf16.xpose.msra.mxu0 0
  %484 = vmatprep.subr.bf16.mxu0 0
  %485 = vmatpush1.bf16.xpose.msra.mxu0 0
  %486 = vmatprep.mubr.bf16.mxu0 0
  %487 = vmatmul.mubr.bf16.gmra.mrb[0].mxu0 %v449
  %v488 = vpop.f32.mrb[0].mxu0
  %v489 = vadd.f32 %v211, %v488
  %v490 = vpop.f32.mrb[0].mxu0
  %v491 = vpop.f32.mrb[0].mxu0
  %v492 = vadd.f32 %v212, %v491
  %v493 = vpop.f32.mrb[0].mxu0
  %494 = vdwg.mxu0
  %v495 = vsel %vm373, %v489, -inf
  %496 = vmax.xlane.f32.xlu0 %v495
  %v497 = vpop.xlane.xlu0 %496
  %v498 = vsel %vm373, %v492, -inf
  %499 = vmax.xlane.f32.xlu0 %v498
  %v500 = vpop.xlane.xlu0 %499
  %v501 = vsub.f32 %v489, %v497
  %v502 = vsub.f32 %v492, %v500
  %v503 = vmul.f32 %v501, 1.442695
  %v504 = vpow.pop %v503
  %v505 = vmul.f32 %v502, 1.442695
  %v506 = vpow.pop %v505
  %v507 = vsel %vm373, %v504, 0.0
  %508 = vadd.xlane.f32.xlu0 %v507
  %v509 = vpop.xlane.xlu0 %508
  %v510 = vsel %vm373, %v506, 0.0
  %511 = vadd.xlane.f32.xlu0 %v510
  %v512 = vpop.xlane.xlu0 %511
  %v513 = vrcp.pop %v509
  %v514 = vrcp.pop %v512
  %v515 = vmul.f32 %v504, %v513
  %v516 = vmul.f32 %v506, %v514
  %v517 = vpack.c.bf16 %v516, %v515
  %518 = vrot.lane.b32.xlu0 %v321, 56
  %v519 = vpop.permute.xlu0 %518
  %v522 = vsel %vm373, %v517, 0
  %524 = vmatprep.subr.bf16.mxu0 0
  %525 = vmatpush1.bf16.msra.mxu0 %v519
  %526 = vmatprep.subr.bf16.mxu0 0
  %527 = vmatpush1.bf16.msra.mxu0 0
  %528 = vmatprep.subr.bf16.mxu0 0
  %529 = vmatpush1.bf16.msra.mxu0 0
  %530 = vmatprep.subr.bf16.mxu0 0
  %531 = vmatpush1.bf16.msra.mxu0 0
  %532 = vmatprep.subr.bf16.mxu0 0
  %533 = vmatpush1.bf16.msra.mxu0 0
  %534 = vmatprep.subr.bf16.mxu0 0
  %535 = vmatpush1.bf16.msra.mxu0 0
  %536 = vmatprep.subr.bf16.mxu0 0
  %537 = vmatpush1.bf16.msra.mxu0 0
  %538 = vmatprep.subr.bf16.mxu0 0
  %539 = vmatpush1.bf16.msra.mxu0 0
  %540 = vmatprep.subr.bf16.mxu0 0
  %541 = vmatpush1.bf16.msra.mxu0 0
  %542 = vmatprep.subr.bf16.mxu0 0
  %543 = vmatpush1.bf16.msra.mxu0 0
  %544 = vmatprep.subr.bf16.mxu0 0
  %545 = vmatpush1.bf16.msra.mxu0 0
  %546 = vmatprep.subr.bf16.mxu0 0
  %547 = vmatpush1.bf16.msra.mxu0 0
  %548 = vmatprep.subr.bf16.mxu0 0
  %549 = vmatpush1.bf16.msra.mxu0 0
  %550 = vmatprep.subr.bf16.mxu0 0
  %551 = vmatpush1.bf16.msra.mxu0 0
  %552 = vmatprep.subr.bf16.mxu0 0
  %553 = vmatpush1.bf16.msra.mxu0 0
  %554 = vmatprep.subr.bf16.mxu0 0
  %555 = vmatpush1.bf16.msra.mxu0 0
  %556 = vmatprep.mubr.bf16.mxu0 0
  %557 = vmatmul.mubr.bf16.gmra.mrb[0].mxu0 %v522
  %v558 = vpop.f32.mrb[0].mxu0
  %v559 = vadd.f32 0.0, %v558
  %v560 = vpop.f32.mrb[0].mxu0
  %v561 = vpop.f32.mrb[0].mxu0
  %v562 = vadd.f32 0.0, %v561
  %v563 = vpop.f32.mrb[0].mxu0
  %564 = vdwg.mxu0
  %565 = vrot.lane.b32.xlu0 %v321, 112
  %v566 = vpop.permute.xlu0 %565
  %567 = vrot.lane.b32.xlu0 %v321, 80
  %v568 = vpop.permute.xlu0 %567
  %v570 = vsel %vm325, %v566, 0
  %v573 = vsel %vm325, %v568, 0
  %575 = vmatprep.subr.bf16.mxu0 0
  %576 = vmatpush1.bf16.xpose.msra.mxu0 %v573
  %577 = vmatprep.subr.bf16.mxu0 0
  %578 = vmatpush1.bf16.xpose.msra.mxu0 0
  %579 = vmatprep.subr.bf16.mxu0 0
  %580 = vmatpush1.bf16.xpose.msra.mxu0 0
  %581 = vmatprep.subr.bf16.mxu0 0
  %582 = vmatpush1.bf16.xpose.msra.mxu0 0
  %583 = vmatprep.subr.bf16.mxu0 0
  %584 = vmatpush1.bf16.xpose.msra.mxu0 0
  %585 = vmatprep.subr.bf16.mxu0 0
  %586 = vmatpush1.bf16.xpose.msra.mxu0 0
  %587 = vmatprep.subr.bf16.mxu0 0
  %588 = vmatpush1.bf16.xpose.msra.mxu0 0
  %589 = vmatprep.subr.bf16.mxu0 0
  %590 = vmatpush1.bf16.xpose.msra.mxu0 0
  %591 = vmatprep.subr.bf16.mxu0 0
  %592 = vmatpush1.bf16.xpose.msra.mxu0 0
  %593 = vmatprep.subr.bf16.mxu0 0
  %594 = vmatpush1.bf16.xpose.msra.mxu0 0
  %595 = vmatprep.subr.bf16.mxu0 0
  %596 = vmatpush1.bf16.xpose.msra.mxu0 0
  %597 = vmatprep.subr.bf16.mxu0 0
  %598 = vmatpush1.bf16.xpose.msra.mxu0 0
  %599 = vmatprep.subr.bf16.mxu0 0
  %600 = vmatpush1.bf16.xpose.msra.mxu0 0
  %601 = vmatprep.subr.bf16.mxu0 0
  %602 = vmatpush1.bf16.xpose.msra.mxu0 0
  %603 = vmatprep.subr.bf16.mxu0 0
  %604 = vmatpush1.bf16.xpose.msra.mxu0 0
  %605 = vmatprep.subr.bf16.mxu0 0
  %606 = vmatpush1.bf16.xpose.msra.mxu0 0
  %607 = vmatprep.mubr.bf16.mxu0 0
  %608 = vmatmul.mubr.bf16.gmra.mrb[0].mxu0 %v570
  %v609 = vpop.f32.mrb[0].mxu0
  %v610 = vadd.f32 %v211, %v609
  %v611 = vpop.f32.mrb[0].mxu0
  %v612 = vpop.f32.mrb[0].mxu0
  %v613 = vadd.f32 %v212, %v612
  %v614 = vpop.f32.mrb[0].mxu0
  %615 = vdwg.mxu0
  %v616 = vsel %vm373, %v610, -inf
  %617 = vmax.xlane.f32.xlu0 %v616
  %v618 = vpop.xlane.xlu0 %617
  %v619 = vsel %vm373, %v613, -inf
  %620 = vmax.xlane.f32.xlu0 %v619
  %v621 = vpop.xlane.xlu0 %620
  %v622 = vsub.f32 %v610, %v618
  %v623 = vsub.f32 %v613, %v621
  %v624 = vmul.f32 %v622, 1.442695
  %v625 = vpow.pop %v624
  %v626 = vmul.f32 %v623, 1.442695
  %v627 = vpow.pop %v626
  %v628 = vsel %vm373, %v625, 0.0
  %629 = vadd.xlane.f32.xlu0 %v628
  %v630 = vpop.xlane.xlu0 %629
  %v631 = vsel %vm373, %v627, 0.0
  %632 = vadd.xlane.f32.xlu0 %v631
  %v633 = vpop.xlane.xlu0 %632
  %v634 = vrcp.pop %v630
  %v635 = vrcp.pop %v633
  %v636 = vmul.f32 %v625, %v634
  %v637 = vmul.f32 %v627, %v635
  %v638 = vpack.c.bf16 %v637, %v636
  %639 = vrot.lane.b32.xlu0 %v321, 48
  %v640 = vpop.permute.xlu0 %639
  %v643 = vsel %vm373, %v638, 0
  %645 = vmatprep.subr.bf16.mxu0 0
  %646 = vmatpush1.bf16.msra.mxu0 %v640
  %647 = vmatprep.subr.bf16.mxu0 0
  %648 = vmatpush1.bf16.msra.mxu0 0
  %649 = vmatprep.subr.bf16.mxu0 0
  %650 = vmatpush1.bf16.msra.mxu0 0
  %651 = vmatprep.subr.bf16.mxu0 0
  %652 = vmatpush1.bf16.msra.mxu0 0
  %653 = vmatprep.subr.bf16.mxu0 0
  %654 = vmatpush1.bf16.msra.mxu0 0
  %655 = vmatprep.subr.bf16.mxu0 0
  %656 = vmatpush1.bf16.msra.mxu0 0
  %657 = vmatprep.subr.bf16.mxu0 0
  %658 = vmatpush1.bf16.msra.mxu0 0
  %659 = vmatprep.subr.bf16.mxu0 0
  %660 = vmatpush1.bf16.msra.mxu0 0
  %661 = vmatprep.subr.bf16.mxu0 0
  %662 = vmatpush1.bf16.msra.mxu0 0
  %663 = vmatprep.subr.bf16.mxu0 0
  %664 = vmatpush1.bf16.msra.mxu0 0
  %665 = vmatprep.subr.bf16.mxu0 0
  %666 = vmatpush1.bf16.msra.mxu0 0
  %667 = vmatprep.subr.bf16.mxu0 0
  %668 = vmatpush1.bf16.msra.mxu0 0
  %669 = vmatprep.subr.bf16.mxu0 0
  %670 = vmatpush1.bf16.msra.mxu0 0
  %671 = vmatprep.subr.bf16.mxu0 0
  %672 = vmatpush1.bf16.msra.mxu0 0
  %673 = vmatprep.subr.bf16.mxu0 0
  %674 = vmatpush1.bf16.msra.mxu0 0
  %675 = vmatprep.subr.bf16.mxu0 0
  %676 = vmatpush1.bf16.msra.mxu0 0
  %677 = vmatprep.mubr.bf16.mxu0 0
  %678 = vmatmul.mubr.bf16.gmra.mrb[0].mxu0 %v643
  %v679 = vpop.f32.mrb[0].mxu0
  %v680 = vadd.f32 0.0, %v679
  %v681 = vpop.f32.mrb[0].mxu0
  %v682 = vpop.f32.mrb[0].mxu0
  %v683 = vadd.f32 0.0, %v682
  %v684 = vpop.f32.mrb[0].mxu0
  %685 = vdwg.mxu0
  %686 = vrot.lane.b32.xlu0 %v321, 104
  %v687 = vpop.permute.xlu0 %686
  %688 = vrot.lane.b32.xlu0 %v321, 72
  %v689 = vpop.permute.xlu0 %688
  %v691 = vsel %vm325, %v687, 0
  %v694 = vsel %vm325, %v689, 0
  %696 = vmatprep.subr.bf16.mxu0 0
  %697 = vmatpush1.bf16.xpose.msra.mxu0 %v694
  %698 = vmatprep.subr.bf16.mxu0 0
  %699 = vmatpush1.bf16.xpose.msra.mxu0 0
  %700 = vmatprep.subr.bf16.mxu0 0
  %701 = vmatpush1.bf16.xpose.msra.mxu0 0
  %702 = vmatprep.subr.bf16.mxu0 0
  %703 = vmatpush1.bf16.xpose.msra.mxu0 0
  %704 = vmatprep.subr.bf16.mxu0 0
  %705 = vmatpush1.bf16.xpose.msra.mxu0 0
  %706 = vmatprep.subr.bf16.mxu0 0
  %707 = vmatpush1.bf16.xpose.msra.mxu0 0
  %708 = vmatprep.subr.bf16.mxu0 0
  %709 = vmatpush1.bf16.xpose.msra.mxu0 0
  %710 = vmatprep.subr.bf16.mxu0 0
  %711 = vmatpush1.bf16.xpose.msra.mxu0 0
  %712 = vmatprep.subr.bf16.mxu0 0
  %713 = vmatpush1.bf16.xpose.msra.mxu0 0
  %714 = vmatprep.subr.bf16.mxu0 0
  %715 = vmatpush1.bf16.xpose.msra.mxu0 0
  %716 = vmatprep.subr.bf16.mxu0 0
  %717 = vmatpush1.bf16.xpose.msra.mxu0 0
  %718 = vmatprep.subr.bf16.mxu0 0
  %719 = vmatpush1.bf16.xpose.msra.mxu0 0
  %720 = vmatprep.subr.bf16.mxu0 0
  %721 = vmatpush1.bf16.xpose.msra.mxu0 0
  %722 = vmatprep.subr.bf16.mxu0 0
  %723 = vmatpush1.bf16.xpose.msra.mxu0 0
  %724 = vmatprep.subr.bf16.mxu0 0
  %725 = vmatpush1.bf16.xpose.msra.mxu0 0
  %726 = vmatprep.subr.bf16.mxu0 0
  %727 = vmatpush1.bf16.xpose.msra.mxu0 0
  %728 = vmatprep.mubr.bf16.mxu0 0
  %729 = vmatmul.mubr.bf16.gmra.mrb[0].mxu0 %v691
  %v730 = vpop.f32.mrb[0].mxu0
  %v731 = vadd.f32 %v211, %v730
  %v732 = vpop.f32.mrb[0].mxu0
  %v733 = vpop.f32.mrb[0].mxu0
  %v734 = vadd.f32 %v212, %v733
  %v735 = vpop.f32.mrb[0].mxu0
  %736 = vdwg.mxu0
  %v737 = vsel %vm373, %v731, -inf
  %738 = vmax.xlane.f32.xlu0 %v737
  %v739 = vpop.xlane.xlu0 %738
  %v740 = vsel %vm373, %v734, -inf
  %741 = vmax.xlane.f32.xlu0 %v740
  %v742 = vpop.xlane.xlu0 %741
  %v743 = vsub.f32 %v731, %v739
  %v744 = vsub.f32 %v734, %v742
  %v745 = vmul.f32 %v743, 1.442695
  %v746 = vpow.pop %v745
  %v747 = vmul.f32 %v744, 1.442695
  %v748 = vpow.pop %v747
  %v749 = vsel %vm373, %v746, 0.0
  %750 = vadd.xlane.f32.xlu0 %v749
  %v751 = vpop.xlane.xlu0 %750
  %v752 = vsel %vm373, %v748, 0.0
  %753 = vadd.xlane.f32.xlu0 %v752
  %v754 = vpop.xlane.xlu0 %753
  %v755 = vrcp.pop %v751
  %v756 = vrcp.pop %v754
  %v757 = vmul.f32 %v746, %v755
  %v758 = vmul.f32 %v748, %v756
  %v759 = vpack.c.bf16 %v758, %v757
  %760 = vrot.lane.b32.xlu0 %v321, 40
  %v761 = vpop.permute.xlu0 %760
  %v764 = vsel %vm373, %v759, 0
  %766 = vmatprep.subr.bf16.mxu0 0
  %767 = vmatpush1.bf16.msra.mxu0 %v761
  %768 = vmatprep.subr.bf16.mxu0 0
  %769 = vmatpush1.bf16.msra.mxu0 0
  %770 = vmatprep.subr.bf16.mxu0 0
  %771 = vmatpush1.bf16.msra.mxu0 0
  %772 = vmatprep.subr.bf16.mxu0 0
  %773 = vmatpush1.bf16.msra.mxu0 0
  %774 = vmatprep.subr.bf16.mxu0 0
  %775 = vmatpush1.bf16.msra.mxu0 0
  %776 = vmatprep.subr.bf16.mxu0 0
  %777 = vmatpush1.bf16.msra.mxu0 0
  %778 = vmatprep.subr.bf16.mxu0 0
  %779 = vmatpush1.bf16.msra.mxu0 0
  %780 = vmatprep.subr.bf16.mxu0 0
  %781 = vmatpush1.bf16.msra.mxu0 0
  %782 = vmatprep.subr.bf16.mxu0 0
  %783 = vmatpush1.bf16.msra.mxu0 0
  %784 = vmatprep.subr.bf16.mxu0 0
  %785 = vmatpush1.bf16.msra.mxu0 0
  %786 = vmatprep.subr.bf16.mxu0 0
  %787 = vmatpush1.bf16.msra.mxu0 0
  %788 = vmatprep.subr.bf16.mxu0 0
  %789 = vmatpush1.bf16.msra.mxu0 0
  %790 = vmatprep.subr.bf16.mxu0 0
  %791 = vmatpush1.bf16.msra.mxu0 0
  %792 = vmatprep.subr.bf16.mxu0 0
  %793 = vmatpush1.bf16.msra.mxu0 0
  %794 = vmatprep.subr.bf16.mxu0 0
  %795 = vmatpush1.bf16.msra.mxu0 0
  %796 = vmatprep.subr.bf16.mxu0 0
  %797 = vmatpush1.bf16.msra.mxu0 0
  %798 = vmatprep.mubr.bf16.mxu0 0
  %799 = vmatmul.mubr.bf16.gmra.mrb[0].mxu0 %v764
  %v800 = vpop.f32.mrb[0].mxu0
  %v801 = vadd.f32 0.0, %v800
  %v802 = vpop.f32.mrb[0].mxu0
  %v803 = vpop.f32.mrb[0].mxu0
  %v804 = vadd.f32 0.0, %v803
  %v805 = vpop.f32.mrb[0].mxu0
  %806 = vdwg.mxu0
  %809 = vrot.lane.b32.xlu0 %v559, 8
  %v810 = vpop.permute.xlu0 %809
  %811 = vrot.lane.b32.xlu0 %v562, 8
  %v812 = vpop.permute.xlu0 %811
  %817 = vrot.lane.b32.xlu0 %v680, 16
  %v818 = vpop.permute.xlu0 %817
  %819 = vrot.lane.b32.xlu0 %v683, 16
  %v820 = vpop.permute.xlu0 %819
  %825 = vrot.lane.b32.xlu0 %v801, 24
  %v826 = vpop.permute.xlu0 %825
  %827 = vrot.lane.b32.xlu0 %v804, 24
  %v828 = vpop.permute.xlu0 %827
  %v831 = vsel %vm325, %v438, %v810
  %v832 = vsel %vm325, %v441, %v812
  %v833 = vsel %vm373, %v831, %v818
  %v834 = vsel %vm373, %v832, %v820
  %vm835 = vcmask 195584
  %v836 = vsel %vm835, %v833, %v826
  %v837 = vsel %vm835, %v834, %v828
  %v838 = vld [vmem:[%s7] sm:$0xf]
  %v839 = vld [vmem:[%s7 + $0x4] sm:$0xf]
  %v840 = vld [vmem:[%s7 + $0x8] sm:$0xf]
  %v841 = vld [vmem:[%s7 + $0xc] sm:$0xf]
  %v842 = vpack.c.bf16 %v837, %v836
  %v847 = vunpack.c.l.b16 %v838
  %v848 = vunpack.c.l.b16 %v839
  %v849 = vunpack.c.l.b16 %v840
  %v850 = vunpack.c.l.b16 %v841
  %v851 = vpack.c.b16 %v848, %v847
  %v852 = vpack.c.b16 %v850, %v849
  %v856 = vsel %vm215, %v842, 0
  %858 = vmatprep.subr.bf16.mxu0 0
  %859 = vmatpush1.bf16.msra.mxu0 %v851
  %860 = vmatprep.subr.bf16.mxu0 0
  %861 = vmatpush1.bf16.msra.mxu0 %v852
  %862 = vmatprep.subr.bf16.mxu0 0
  %863 = vmatpush1.bf16.msra.mxu0 0
  %864 = vmatprep.subr.bf16.mxu0 0
  %865 = vmatpush1.bf16.msra.mxu0 0
  %866 = vmatprep.subr.bf16.mxu0 0
  %867 = vmatpush1.bf16.msra.mxu0 0
  %868 = vmatprep.subr.bf16.mxu0 0
  %869 = vmatpush1.bf16.msra.mxu0 0
  %870 = vmatprep.subr.bf16.mxu0 0
  %871 = vmatpush1.bf16.msra.mxu0 0
  %872 = vmatprep.subr.bf16.mxu0 0
  %873 = vmatpush1.bf16.msra.mxu0 0
  %874 = vmatprep.subr.bf16.mxu0 0
  %875 = vmatpush1.bf16.msra.mxu0 0
  %876 = vmatprep.subr.bf16.mxu0 0
  %877 = vmatpush1.bf16.msra.mxu0 0
  %878 = vmatprep.subr.bf16.mxu0 0
  %879 = vmatpush1.bf16.msra.mxu0 0
  %880 = vmatprep.subr.bf16.mxu0 0
  %881 = vmatpush1.bf16.msra.mxu0 0
  %882 = vmatprep.subr.bf16.mxu0 0
  %883 = vmatpush1.bf16.msra.mxu0 0
  %884 = vmatprep.subr.bf16.mxu0 0
  %885 = vmatpush1.bf16.msra.mxu0 0
  %886 = vmatprep.subr.bf16.mxu0 0
  %887 = vmatpush1.bf16.msra.mxu0 0
  %888 = vmatprep.subr.bf16.mxu0 0
  %889 = vmatpush1.bf16.msra.mxu0 0
  %890 = vmatprep.mubr.bf16.mxu0 0
  %891 = vmatmul.mubr.bf16.gmra.mrb[0].mxu0 %v856
  %v892 = vpop.f32.mrb[0].mxu0
  %v893 = vadd.f32 0.0, %v892
  %v894 = vpop.f32.mrb[0].mxu0
  %v895 = vpop.f32.mrb[0].mxu0
  %v896 = vadd.f32 0.0, %v895
  %v897 = vpop.f32.mrb[0].mxu0
  %898 = vdwg.mxu0
  %v899 = vadd.f32 %v191, %v893
  %v900 = vadd.f32 %v194, %v896
  %v901 = vld [vmem:[%s3 + $0x2] sm:$0x1]
  %v902 = vlaneseq
  %v903 = vshrl.u32 %v902, 7
  %v904 = vsub.s32 0, %v903
  %v905 = vrot.slane %v901, %v904
  %v906 = vadd.f32 %v899, %v905
  %v907 = vadd.f32 %v900, %v905
  %v908 = vld [vmem:[%s3 + $0x3] sm:$0x1]
  %v909 = vld [vmem:[%s3 + $0x4] sm:$0x1]
  %v910 = vsel %vm215, %v906, 0.0
  %911 = vadd.xlane.f32.xlu0 %v910
  %v912 = vpop.xlane.xlu0 %911
  %v913 = vsel %vm215, %v907, 0.0
  %914 = vadd.xlane.f32.xlu0 %v913
  %v915 = vpop.xlane.xlu0 %914
  %v916 = vmul.f32 %v912, %v222
  %v917 = vmul.f32 %v915, %v222
  %v918 = vsub.f32 %v906, %v916
  %v919 = vsub.f32 %v907, %v917
  %v920 = vmul.f32 %v918, %v918
  %v921 = vmul.f32 %v919, %v919
  %v922 = vsel %vm215, %v920, 0.0
  %923 = vadd.xlane.f32.xlu0 %v922
  %v924 = vpop.xlane.xlu0 %923
  %v925 = vsel %vm215, %v921, 0.0
  %926 = vadd.xlane.f32.xlu0 %v925
  %v927 = vpop.xlane.xlu0 %926
  %v928 = vmul.f32 %v924, %v222
  %v929 = vmul.f32 %v927, %v222
  %v930 = vadd.f32 %v928, 1e-06
  %v931 = vadd.f32 %v929, 1e-06
  %v932 = vrsqrt.pop %v930
  %v933 = vrsqrt.pop %v931
  %v934 = vmul.f32 %v918, %v932
  %v935 = vmul.f32 %v919, %v933
  %v936 = vlaneseq
  %v937 = vshrl.u32 %v936, 7
  %v938 = vsub.s32 0, %v937
  %v939 = vrot.slane %v908, %v938
  %v940 = vmul.f32 %v934, %v939
  %v941 = vmul.f32 %v935, %v939
  %v942 = vlaneseq
  %v943 = vshrl.u32 %v942, 7
  %v944 = vsub.s32 0, %v943
  %v945 = vrot.slane %v909, %v944
  %v946 = vadd.f32 %v940, %v945
  %v947 = vadd.f32 %v941, %v945
  %v948 = vld [vmem:[%s8] sm:$0xf]
  %v949 = vld [vmem:[%s8 + $0x4] sm:$0xf]
  %v950 = vld [vmem:[%s8 + $0x8] sm:$0xf]
  %v951 = vld [vmem:[%s8 + $0xc] sm:$0xf]
  %v952 = vpack.c.bf16 %v947, %v946
  %v953 = vld [vmem:[%s5] sm:$0x1]
  %v954 = vlaneseq
  %v955 = vshrl.u32 %v954, 7
  %v956 = vsub.s32 0, %v955
  %v957 = vrot.slane %v953, %v956
  %v962 = vunpack.c.l.b16 %v948
  %v963 = vunpack.c.l.b16 %v949
  %v964 = vunpack.c.l.b16 %v950
  %v965 = vunpack.c.l.b16 %v951
  %v966 = vpack.c.b16 %v963, %v962
  %v967 = vpack.c.b16 %v965, %v964
  %v971 = vsel %vm215, %v952, 0
  %973 = vmatprep.subr.bf16.mxu0 0
  %974 = vmatpush1.bf16.msra.mxu0 %v966
  %975 = vmatprep.subr.bf16.mxu0 0
  %976 = vmatpush1.bf16.msra.mxu0 %v967
  %977 = vmatprep.subr.bf16.mxu0 0
  %978 = vmatpush1.bf16.msra.mxu0 0
  %979 = vmatprep.subr.bf16.mxu0 0
  %980 = vmatpush1.bf16.msra.mxu0 0
  %981 = vmatprep.subr.bf16.mxu0 0
  %982 = vmatpush1.bf16.msra.mxu0 0
  %983 = vmatprep.subr.bf16.mxu0 0
  %984 = vmatpush1.bf16.msra.mxu0 0
  %985 = vmatprep.subr.bf16.mxu0 0
  %986 = vmatpush1.bf16.msra.mxu0 0
  %987 = vmatprep.subr.bf16.mxu0 0
  %988 = vmatpush1.bf16.msra.mxu0 0
  %989 = vmatprep.subr.bf16.mxu0 0
  %990 = vmatpush1.bf16.msra.mxu0 0
  %991 = vmatprep.subr.bf16.mxu0 0
  %992 = vmatpush1.bf16.msra.mxu0 0
  %993 = vmatprep.subr.bf16.mxu0 0
  %994 = vmatpush1.bf16.msra.mxu0 0
  %995 = vmatprep.subr.bf16.mxu0 0
  %996 = vmatpush1.bf16.msra.mxu0 0
  %997 = vmatprep.subr.bf16.mxu0 0
  %998 = vmatpush1.bf16.msra.mxu0 0
  %999 = vmatprep.subr.bf16.mxu0 0
  %1000 = vmatpush1.bf16.msra.mxu0 0
  %1001 = vmatprep.subr.bf16.mxu0 0
  %1002 = vmatpush1.bf16.msra.mxu0 0
  %1003 = vmatprep.subr.bf16.mxu0 0
  %1004 = vmatpush1.bf16.msra.mxu0 0
  %1005 = vmatprep.mubr.bf16.mxu0 0
  %1006 = vmatmul.mubr.bf16.gmra.mrb[0].mxu0 %v971
  %v1007 = vpop.f32.mrb[0].mxu0
  %v1008 = vadd.f32 %v957, %v1007
  %v1009 = vpop.f32.mrb[0].mxu0
  %v1010 = vpop.f32.mrb[0].mxu0
  %v1011 = vadd.f32 %v957, %v1010
  %v1012 = vpop.f32.mrb[0].mxu0
  %1013 = vdwg.mxu0
  %v1014 = vmul.f32 %v1008, 0.5
  %v1015 = vmul.f32 %v1011, 0.5
  %v1016 = vmul.f32 %v1008, 0.044715
  %v1017 = vmul.f32 %v1011, 0.044715
  %v1018 = vmul.f32 %v1016, %v1008
  %v1019 = vmul.f32 %v1017, %v1011
  %v1020 = vmul.f32 %v1018, %v1008
  %v1021 = vmul.f32 %v1019, %v1011
  %v1022 = vadd.f32 %v1008, %v1020
  %v1023 = vadd.f32 %v1011, %v1021
  %v1024 = vmul.f32 %v1022, 0.7978846
  %v1025 = vmul.f32 %v1023, 0.7978846
  %v1026 = vtanh.pop %v1024
  %v1027 = vtanh.pop %v1025
  %v1028 = vadd.f32 %v1026, 1.0
  %v1029 = vadd.f32 %v1027, 1.0
  %v1030 = vmul.f32 %v1014, %v1028
  %v1031 = vmul.f32 %v1015, %v1029
  %v1032 = vld [vmem:[%s9] sm:$0xf]
  %v1033 = vld [vmem:[%s9 + $0x4] sm:$0xf]
  %v1034 = vld [vmem:[%s9 + $0x8] sm:$0xf]
  %v1035 = vld [vmem:[%s9 + $0xc] sm:$0xf]
  %v1036 = vld [vmem:[%s9 + $0x10] sm:$0xf]
  %v1037 = vld [vmem:[%s9 + $0x14] sm:$0xf]
  %v1038 = vld [vmem:[%s9 + $0x18] sm:$0xf]
  %v1039 = vld [vmem:[%s9 + $0x1c] sm:$0xf]
  %v1040 = vld [vmem:[%s9 + $0x20] sm:$0xf]
  %v1041 = vld [vmem:[%s9 + $0x24] sm:$0xf]
  %v1042 = vld [vmem:[%s9 + $0x28] sm:$0xf]
  %v1043 = vld [vmem:[%s9 + $0x2c] sm:$0xf]
  %v1044 = vld [vmem:[%s9 + $0x30] sm:$0xf]
  %v1045 = vld [vmem:[%s9 + $0x34] sm:$0xf]
  %v1046 = vld [vmem:[%s9 + $0x38] sm:$0xf]
  %v1047 = vld [vmem:[%s9 + $0x3c] sm:$0xf]
  %v1048 = vpack.c.bf16 %v1031, %v1030
  %v1065 = vunpack.c.l.b16 %v1032
  %v1066 = vunpack.c.l.b16 %v1033
  %v1067 = vunpack.c.l.b16 %v1034
  %v1068 = vunpack.c.l.b16 %v1035
  %v1069 = vunpack.c.l.b16 %v1036
  %v1070 = vunpack.c.l.b16 %v1037
  %v1071 = vunpack.c.l.b16 %v1038
  %v1072 = vunpack.c.l.b16 %v1039
  %v1073 = vunpack.c.l.b16 %v1040
  %v1074 = vunpack.c.l.b16 %v1041
  %v1075 = vunpack.c.l.b16 %v1042
  %v1076 = vunpack.c.l.b16 %v1043
  %v1077 = vunpack.c.l.b16 %v1044
  %v1078 = vunpack.c.l.b16 %v1045
  %v1079 = vunpack.c.l.b16 %v1046
  %v1080 = vunpack.c.l.b16 %v1047
  %v1081 = vpack.c.b16 %v1066, %v1065
  %v1082 = vpack.c.b16 %v1068, %v1067
  %v1083 = vpack.c.b16 %v1070, %v1069
  %v1084 = vpack.c.b16 %v1072, %v1071
  %v1085 = vpack.c.b16 %v1074, %v1073
  %v1086 = vpack.c.b16 %v1076, %v1075
  %v1087 = vpack.c.b16 %v1078, %v1077
  %v1088 = vpack.c.b16 %v1080, %v1079
  %1097 = vmatprep.subr.bf16.mxu0 0
  %1098 = vmatpush1.bf16.msra.mxu0 %v1081
  %1099 = vmatprep.subr.bf16.mxu0 0
  %1100 = vmatpush1.bf16.msra.mxu0 %v1082
  %1101 = vmatprep.subr.bf16.mxu0 0
  %1102 = vmatpush1.bf16.msra.mxu0 %v1083
  %1103 = vmatprep.subr.bf16.mxu0 0
  %1104 = vmatpush1.bf16.msra.mxu0 %v1084
  %1105 = vmatprep.subr.bf16.mxu0 0
  %1106 = vmatpush1.bf16.msra.mxu0 %v1085
  %1107 = vmatprep.subr.bf16.mxu0 0
  %1108 = vmatpush1.bf16.msra.mxu0 %v1086
  %1109 = vmatprep.subr.bf16.mxu0 0
  %1110 = vmatpush1.bf16.msra.mxu0 %v1087
  %1111 = vmatprep.subr.bf16.mxu0 0
  %1112 = vmatpush1.bf16.msra.mxu0 %v1088
  %1113 = vmatprep.subr.bf16.mxu0 0
  %1114 = vmatpush1.bf16.msra.mxu0 0
  %1115 = vmatprep.subr.bf16.mxu0 0
  %1116 = vmatpush1.bf16.msra.mxu0 0
  %1117 = vmatprep.subr.bf16.mxu0 0
  %1118 = vmatpush1.bf16.msra.mxu0 0
  %1119 = vmatprep.subr.bf16.mxu0 0
  %1120 = vmatpush1.bf16.msra.mxu0 0
  %1121 = vmatprep.subr.bf16.mxu0 0
  %1122 = vmatpush1.bf16.msra.mxu0 0
  %1123 = vmatprep.subr.bf16.mxu0 0
  %1124 = vmatpush1.bf16.msra.mxu0 0
  %1125 = vmatprep.subr.bf16.mxu0 0
  %1126 = vmatpush1.bf16.msra.mxu0 0
  %1127 = vmatprep.subr.bf16.mxu0 0
  %1128 = vmatpush1.bf16.msra.mxu0 0
  %1129 = vmatprep.mubr.bf16.mxu0 0
  %1130 = vmatmul.mubr.bf16.gmra.mrb[0].mxu0 %v1048
  %v1131 = vpop.f32.mrb[0].mxu0
  %v1132 = vadd.f32 0.0, %v1131
  %v1133 = vpop.f32.mrb[0].mxu0
  %v1134 = vpop.f32.mrb[0].mxu0
  %v1135 = vadd.f32 0.0, %v1134
  %v1136 = vpop.f32.mrb[0].mxu0
  %1137 = vdwg.mxu0
  %v1138 = vadd.f32 %v906, %v1132
  %v1139 = vadd.f32 %v907, %v1135
  %v1140 = vld [vmem:[%s3 + $0x5] sm:$0x1]
  %v1141 = vlaneseq
  %v1142 = vshrl.u32 %v1141, 7
  %v1143 = vsub.s32 0, %v1142
  %v1144 = vrot.slane %v1140, %v1143
  %v1145 = vadd.f32 %v1138, %v1144
  %v1146 = vadd.f32 %v1139, %v1144
  %v1147 = vld [vmem:[%s3 + $0x6] sm:$0x1]
  %v1148 = vld [vmem:[%s3 + $0x7] sm:$0x1]
  %v1149 = vsel %vm215, %v1145, 0.0
  %1150 = vadd.xlane.f32.xlu0 %v1149
  %v1151 = vpop.xlane.xlu0 %1150
  %v1152 = vsel %vm215, %v1146, 0.0
  %1153 = vadd.xlane.f32.xlu0 %v1152
  %v1154 = vpop.xlane.xlu0 %1153
  %v1155 = vmul.f32 %v1151, %v222
  %v1156 = vmul.f32 %v1154, %v222
  %v1157 = vsub.f32 %v1145, %v1155
  %v1158 = vsub.f32 %v1146, %v1156
  %v1159 = vmul.f32 %v1157, %v1157
  %v1160 = vmul.f32 %v1158, %v1158
  %v1161 = vsel %vm215, %v1159, 0.0
  %1162 = vadd.xlane.f32.xlu0 %v1161
  %v1163 = vpop.xlane.xlu0 %1162
  %v1164 = vsel %vm215, %v1160, 0.0
  %1165 = vadd.xlane.f32.xlu0 %v1164
  %v1166 = vpop.xlane.xlu0 %1165
  %v1167 = vmul.f32 %v1163, %v222
  %v1168 = vmul.f32 %v1166, %v222
  %v1169 = vadd.f32 %v1167, 1e-06
  %v1170 = vadd.f32 %v1168, 1e-06
  %v1171 = vrsqrt.pop %v1169
  %v1172 = vrsqrt.pop %v1170
  %v1173 = vmul.f32 %v1157, %v1171
  %v1174 = vmul.f32 %v1158, %v1172
  %v1175 = vlaneseq
  %v1176 = vshrl.u32 %v1175, 7
  %v1177 = vsub.s32 0, %v1176
  %v1178 = vrot.slane %v1147, %v1177
  %v1179 = vmul.f32 %v1173, %v1178
  %v1180 = vmul.f32 %v1174, %v1178
  %v1181 = vlaneseq
  %v1182 = vshrl.u32 %v1181, 7
  %v1183 = vsub.s32 0, %v1182
  %v1184 = vrot.slane %v1148, %v1183
  %v1185 = vadd.f32 %v1179, %v1184
  %v1186 = vadd.f32 %v1180, %v1184
  %s1187 = scalar_lea.vmem %s6, 16
  %v1188 = vld [vmem:[%s1187] sm:$0xf]
  %v1189 = vld [vmem:[%s1187 + $0x4] sm:$0xf]
  %v1190 = vld [vmem:[%s1187 + $0x8] sm:$0xf]
  %v1191 = vld [vmem:[%s1187 + $0xc] sm:$0xf]
  %v1192 = vpack.c.bf16 %v1186, %v1185
  %v1193 = vld [vmem:[%s4 + $0x1] sm:$0x1]
  %v1194 = vlaneseq
  %v1195 = vshrl.u32 %v1194, 7
  %v1196 = vsub.s32 0, %v1195
  %v1197 = vrot.slane %v1193, %v1196
  %v1202 = vunpack.c.l.b16 %v1188
  %v1203 = vunpack.c.l.b16 %v1189
  %v1204 = vunpack.c.l.b16 %v1190
  %v1205 = vunpack.c.l.b16 %v1191
  %v1206 = vpack.c.b16 %v1203, %v1202
  %v1207 = vpack.c.b16 %v1205, %v1204
  %v1211 = vsel %vm215, %v1192, 0
  %1213 = vmatprep.subr.bf16.mxu0 0
  %1214 = vmatpush1.bf16.msra.mxu0 %v1206
  %1215 = vmatprep.subr.bf16.mxu0 0
  %1216 = vmatpush1.bf16.msra.mxu0 %v1207
  %1217 = vmatprep.subr.bf16.mxu0 0
  %1218 = vmatpush1.bf16.msra.mxu0 0
  %1219 = vmatprep.subr.bf16.mxu0 0
  %1220 = vmatpush1.bf16.msra.mxu0 0
  %1221 = vmatprep.subr.bf16.mxu0 0
  %1222 = vmatpush1.bf16.msra.mxu0 0
  %1223 = vmatprep.subr.bf16.mxu0 0
  %1224 = vmatpush1.bf16.msra.mxu0 0
  %1225 = vmatprep.subr.bf16.mxu0 0
  %1226 = vmatpush1.bf16.msra.mxu0 0
  %1227 = vmatprep.subr.bf16.mxu0 0
  %1228 = vmatpush1.bf16.msra.mxu0 0
  %1229 = vmatprep.subr.bf16.mxu0 0
  %1230 = vmatpush1.bf16.msra.mxu0 0
  %1231 = vmatprep.subr.bf16.mxu0 0
  %1232 = vmatpush1.bf16.msra.mxu0 0
  %1233 = vmatprep.subr.bf16.mxu0 0
  %1234 = vmatpush1.bf16.msra.mxu0 0
  %1235 = vmatprep.subr.bf16.mxu0 0
  %1236 = vmatpush1.bf16.msra.mxu0 0
  %1237 = vmatprep.subr.bf16.mxu0 0
  %1238 = vmatpush1.bf16.msra.mxu0 0
  %1239 = vmatprep.subr.bf16.mxu0 0
  %1240 = vmatpush1.bf16.msra.mxu0 0
  %1241 = vmatprep.subr.bf16.mxu0 0
  %1242 = vmatpush1.bf16.msra.mxu0 0
  %1243 = vmatprep.subr.bf16.mxu0 0
  %1244 = vmatpush1.bf16.msra.mxu0 0
  %1245 = vmatprep.mubr.bf16.mxu0 0
  %1246 = vmatmul.mubr.bf16.gmra.mrb[0].mxu0 %v1211
  %v1247 = vpop.f32.mrb[0].mxu0
  %v1248 = vadd.f32 %v1197, %v1247
  %v1249 = vpop.f32.mrb[0].mxu0
  %v1250 = vpop.f32.mrb[0].mxu0
  %v1251 = vadd.f32 %v1197, %v1250
  %v1252 = vpop.f32.mrb[0].mxu0
  %1253 = vdwg.mxu0
  %v1254 = vpack.c.bf16 %v1251, %v1248
  %1256 = vrot.lane.b32.xlu0 %v1254, 96
  %v1257 = vpop.permute.xlu0 %1256
  %v1259 = vsel %vm325, %v1254, 0
  %v1262 = vsel %vm325, %v1257, 0
  %1264 = vmatprep.subr.bf16.mxu0 0
  %1265 = vmatpush1.bf16.xpose.msra.mxu0 %v1262
  %1266 = vmatprep.subr.bf16.mxu0 0
  %1267 = vmatpush1.bf16.xpose.msra.mxu0 0
  %1268 = vmatprep.subr.bf16.mxu0 0
  %1269 = vmatpush1.bf16.xpose.msra.mxu0 0
  %1270 = vmatprep.subr.bf16.mxu0 0
  %1271 = vmatpush1.bf16.xpose.msra.mxu0 0
  %1272 = vmatprep.subr.bf16.mxu0 0
  %1273 = vmatpush1.bf16.xpose.msra.mxu0 0
  %1274 = vmatprep.subr.bf16.mxu0 0
  %1275 = vmatpush1.bf16.xpose.msra.mxu0 0
  %1276 = vmatprep.subr.bf16.mxu0 0
  %1277 = vmatpush1.bf16.xpose.msra.mxu0 0
  %1278 = vmatprep.subr.bf16.mxu0 0
  %1279 = vmatpush1.bf16.xpose.msra.mxu0 0
  %1280 = vmatprep.subr.bf16.mxu0 0
  %1281 = vmatpush1.bf16.xpose.msra.mxu0 0
  %1282 = vmatprep.subr.bf16.mxu0 0
  %1283 = vmatpush1.bf16.xpose.msra.mxu0 0
  %1284 = vmatprep.subr.bf16.mxu0 0
  %1285 = vmatpush1.bf16.xpose.msra.mxu0 0
  %1286 = vmatprep.subr.bf16.mxu0 0
  %1287 = vmatpush1.bf16.xpose.msra.mxu0 0
  %1288 = vmatprep.subr.bf16.mxu0 0
  %1289 = vmatpush1.bf16.xpose.msra.mxu0 0
  %1290 = vmatprep.subr.bf16.mxu0 0
  %1291 = vmatpush1.bf16.xpose.msra.mxu0 0
  %1292 = vmatprep.subr.bf16.mxu0 0
  %1293 = vmatpush1.bf16.xpose.msra.mxu0 0
  %1294 = vmatprep.subr.bf16.mxu0 0
  %1295 = vmatpush1.bf16.xpose.msra.mxu0 0
  %1296 = vmatprep.mubr.bf16.mxu0 0
  %1297 = vmatmul.mubr.bf16.gmra.mrb[0].mxu0 %v1259
  %v1298 = vpop.f32.mrb[0].mxu0
  %v1299 = vadd.f32 %v211, %v1298
  %v1300 = vpop.f32.mrb[0].mxu0
  %v1301 = vpop.f32.mrb[0].mxu0
  %v1302 = vadd.f32 %v212, %v1301
  %v1303 = vpop.f32.mrb[0].mxu0
  %1304 = vdwg.mxu0
  %v1305 = vsel %vm373, %v1299, -inf
  %1306 = vmax.xlane.f32.xlu0 %v1305
  %v1307 = vpop.xlane.xlu0 %1306
  %v1308 = vsel %vm373, %v1302, -inf
  %1309 = vmax.xlane.f32.xlu0 %v1308
  %v1310 = vpop.xlane.xlu0 %1309
  %v1311 = vsub.f32 %v1299, %v1307
  %v1312 = vsub.f32 %v1302, %v1310
  %v1313 = vmul.f32 %v1311, 1.442695
  %v1314 = vpow.pop %v1313
  %v1315 = vmul.f32 %v1312, 1.442695
  %v1316 = vpow.pop %v1315
  %v1317 = vsel %vm373, %v1314, 0.0
  %1318 = vadd.xlane.f32.xlu0 %v1317
  %v1319 = vpop.xlane.xlu0 %1318
  %v1320 = vsel %vm373, %v1316, 0.0
  %1321 = vadd.xlane.f32.xlu0 %v1320
  %v1322 = vpop.xlane.xlu0 %1321
  %v1323 = vrcp.pop %v1319
  %v1324 = vrcp.pop %v1322
  %v1325 = vmul.f32 %v1314, %v1323
  %v1326 = vmul.f32 %v1316, %v1324
  %v1327 = vpack.c.bf16 %v1326, %v1325
  %1328 = vrot.lane.b32.xlu0 %v1254, 64
  %v1329 = vpop.permute.xlu0 %1328
  %v1332 = vsel %vm373, %v1327, 0
  %1334 = vmatprep.subr.bf16.mxu0 0
  %1335 = vmatpush1.bf16.msra.mxu0 %v1329
  %1336 = vmatprep.subr.bf16.mxu0 0
  %1337 = vmatpush1.bf16.msra.mxu0 0
  %1338 = vmatprep.subr.bf16.mxu0 0
  %1339 = vmatpush1.bf16.msra.mxu0 0
  %1340 = vmatprep.subr.bf16.mxu0 0
  %1341 = vmatpush1.bf16.msra.mxu0 0
  %1342 = vmatprep.subr.bf16.mxu0 0
  %1343 = vmatpush1.bf16.msra.mxu0 0
  %1344 = vmatprep.subr.bf16.mxu0 0
  %1345 = vmatpush1.bf16.msra.mxu0 0
  %1346 = vmatprep.subr.bf16.mxu0 0
  %1347 = vmatpush1.bf16.msra.mxu0 0
  %1348 = vmatprep.subr.bf16.mxu0 0
  %1349 = vmatpush1.bf16.msra.mxu0 0
  %1350 = vmatprep.subr.bf16.mxu0 0
  %1351 = vmatpush1.bf16.msra.mxu0 0
  %1352 = vmatprep.subr.bf16.mxu0 0
  %1353 = vmatpush1.bf16.msra.mxu0 0
  %1354 = vmatprep.subr.bf16.mxu0 0
  %1355 = vmatpush1.bf16.msra.mxu0 0
  %1356 = vmatprep.subr.bf16.mxu0 0
  %1357 = vmatpush1.bf16.msra.mxu0 0
  %1358 = vmatprep.subr.bf16.mxu0 0
  %1359 = vmatpush1.bf16.msra.mxu0 0
  %1360 = vmatprep.subr.bf16.mxu0 0
  %1361 = vmatpush1.bf16.msra.mxu0 0
  %1362 = vmatprep.subr.bf16.mxu0 0
  %1363 = vmatpush1.bf16.msra.mxu0 0
  %1364 = vmatprep.subr.bf16.mxu0 0
  %1365 = vmatpush1.bf16.msra.mxu0 0
  %1366 = vmatprep.mubr.bf16.mxu0 0
  %1367 = vmatmul.mubr.bf16.gmra.mrb[0].mxu0 %v1332
  %v1368 = vpop.f32.mrb[0].mxu0
  %v1369 = vadd.f32 0.0, %v1368
  %v1370 = vpop.f32.mrb[0].mxu0
  %v1371 = vpop.f32.mrb[0].mxu0
  %v1372 = vadd.f32 0.0, %v1371
  %v1373 = vpop.f32.mrb[0].mxu0
  %1374 = vdwg.mxu0
  %1375 = vrot.lane.b32.xlu0 %v1254, 120
  %v1376 = vpop.permute.xlu0 %1375
  %1377 = vrot.lane.b32.xlu0 %v1254, 88
  %v1378 = vpop.permute.xlu0 %1377
  %v1380 = vsel %vm325, %v1376, 0
  %v1383 = vsel %vm325, %v1378, 0
  %1385 = vmatprep.subr.bf16.mxu0 0
  %1386 = vmatpush1.bf16.xpose.msra.mxu0 %v1383
  %1387 = vmatprep.subr.bf16.mxu0 0
  %1388 = vmatpush1.bf16.xpose.msra.mxu0 0
  %1389 = vmatprep.subr.bf16.mxu0 0
  %1390 = vmatpush1.bf16.xpose.msra.mxu0 0
  %1391 = vmatprep.subr.bf16.mxu0 0
  %1392 = vmatpush1.bf16.xpose.msra.mxu0 0
  %1393 = vmatprep.subr.bf16.mxu0 0
  %1394 = vmatpush1.bf16.xpose.msra.mxu0 0
  %1395 = vmatprep.subr.bf16.mxu0 0
  %1396 = vmatpush1.bf16.xpose.msra.mxu0 0
  %1397 = vmatprep.subr.bf16.mxu0 0
  %1398 = vmatpush1.bf16.xpose.msra.mxu0 0
  %1399 = vmatprep.subr.bf16.mxu0 0
  %1400 = vmatpush1.bf16.xpose.msra.mxu0 0
  %1401 = vmatprep.subr.bf16.mxu0 0
  %1402 = vmatpush1.bf16.xpose.msra.mxu0 0
  %1403 = vmatprep.subr.bf16.mxu0 0
  %1404 = vmatpush1.bf16.xpose.msra.mxu0 0
  %1405 = vmatprep.subr.bf16.mxu0 0
  %1406 = vmatpush1.bf16.xpose.msra.mxu0 0
  %1407 = vmatprep.subr.bf16.mxu0 0
  %1408 = vmatpush1.bf16.xpose.msra.mxu0 0
  %1409 = vmatprep.subr.bf16.mxu0 0
  %1410 = vmatpush1.bf16.xpose.msra.mxu0 0
  %1411 = vmatprep.subr.bf16.mxu0 0
  %1412 = vmatpush1.bf16.xpose.msra.mxu0 0
  %1413 = vmatprep.subr.bf16.mxu0 0
  %1414 = vmatpush1.bf16.xpose.msra.mxu0 0
  %1415 = vmatprep.subr.bf16.mxu0 0
  %1416 = vmatpush1.bf16.xpose.msra.mxu0 0
  %1417 = vmatprep.mubr.bf16.mxu0 0
  %1418 = vmatmul.mubr.bf16.gmra.mrb[0].mxu0 %v1380
  %v1419 = vpop.f32.mrb[0].mxu0
  %v1420 = vadd.f32 %v211, %v1419
  %v1421 = vpop.f32.mrb[0].mxu0
  %v1422 = vpop.f32.mrb[0].mxu0
  %v1423 = vadd.f32 %v212, %v1422
  %v1424 = vpop.f32.mrb[0].mxu0
  %1425 = vdwg.mxu0
  %v1426 = vsel %vm373, %v1420, -inf
  %1427 = vmax.xlane.f32.xlu0 %v1426
  %v1428 = vpop.xlane.xlu0 %1427
  %v1429 = vsel %vm373, %v1423, -inf
  %1430 = vmax.xlane.f32.xlu0 %v1429
  %v1431 = vpop.xlane.xlu0 %1430
  %v1432 = vsub.f32 %v1420, %v1428
  %v1433 = vsub.f32 %v1423, %v1431
  %v1434 = vmul.f32 %v1432, 1.442695
  %v1435 = vpow.pop %v1434
  %v1436 = vmul.f32 %v1433, 1.442695
  %v1437 = vpow.pop %v1436
  %v1438 = vsel %vm373, %v1435, 0.0
  %1439 = vadd.xlane.f32.xlu0 %v1438
  %v1440 = vpop.xlane.xlu0 %1439
  %v1441 = vsel %vm373, %v1437, 0.0
  %1442 = vadd.xlane.f32.xlu0 %v1441
  %v1443 = vpop.xlane.xlu0 %1442
  %v1444 = vrcp.pop %v1440
  %v1445 = vrcp.pop %v1443
  %v1446 = vmul.f32 %v1435, %v1444
  %v1447 = vmul.f32 %v1437, %v1445
  %v1448 = vpack.c.bf16 %v1447, %v1446
  %1449 = vrot.lane.b32.xlu0 %v1254, 56
  %v1450 = vpop.permute.xlu0 %1449
  %v1453 = vsel %vm373, %v1448, 0
  %1455 = vmatprep.subr.bf16.mxu0 0
  %1456 = vmatpush1.bf16.msra.mxu0 %v1450
  %1457 = vmatprep.subr.bf16.mxu0 0
  %1458 = vmatpush1.bf16.msra.mxu0 0
  %1459 = vmatprep.subr.bf16.mxu0 0
  %1460 = vmatpush1.bf16.msra.mxu0 0
  %1461 = vmatprep.subr.bf16.mxu0 0
  %1462 = vmatpush1.bf16.msra.mxu0 0
  %1463 = vmatprep.subr.bf16.mxu0 0
  %1464 = vmatpush1.bf16.msra.mxu0 0
  %1465 = vmatprep.subr.bf16.mxu0 0
  %1466 = vmatpush1.bf16.msra.mxu0 0
  %1467 = vmatprep.subr.bf16.mxu0 0
  %1468 = vmatpush1.bf16.msra.mxu0 0
  %1469 = vmatprep.subr.bf16.mxu0 0
  %1470 = vmatpush1.bf16.msra.mxu0 0
  %1471 = vmatprep.subr.bf16.mxu0 0
  %1472 = vmatpush1.bf16.msra.mxu0 0
  %1473 = vmatprep.subr.bf16.mxu0 0
  %1474 = vmatpush1.bf16.msra.mxu0 0
  %1475 = vmatprep.subr.bf16.mxu0 0
  %1476 = vmatpush1.bf16.msra.mxu0 0
  %1477 = vmatprep.subr.bf16.mxu0 0
  %1478 = vmatpush1.bf16.msra.mxu0 0
  %1479 = vmatprep.subr.bf16.mxu0 0
  %1480 = vmatpush1.bf16.msra.mxu0 0
  %1481 = vmatprep.subr.bf16.mxu0 0
  %1482 = vmatpush1.bf16.msra.mxu0 0
  %1483 = vmatprep.subr.bf16.mxu0 0
  %1484 = vmatpush1.bf16.msra.mxu0 0
  %1485 = vmatprep.subr.bf16.mxu0 0
  %1486 = vmatpush1.bf16.msra.mxu0 0
  %1487 = vmatprep.mubr.bf16.mxu0 0
  %1488 = vmatmul.mubr.bf16.gmra.mrb[0].mxu0 %v1453
  %v1489 = vpop.f32.mrb[0].mxu0
  %v1490 = vadd.f32 0.0, %v1489
  %v1491 = vpop.f32.mrb[0].mxu0
  %v1492 = vpop.f32.mrb[0].mxu0
  %v1493 = vadd.f32 0.0, %v1492
  %v1494 = vpop.f32.mrb[0].mxu0
  %1495 = vdwg.mxu0
  %1496 = vrot.lane.b32.xlu0 %v1254, 112
  %v1497 = vpop.permute.xlu0 %1496
  %1498 = vrot.lane.b32.xlu0 %v1254, 80
  %v1499 = vpop.permute.xlu0 %1498
  %v1501 = vsel %vm325, %v1497, 0
  %v1504 = vsel %vm325, %v1499, 0
  %1506 = vmatprep.subr.bf16.mxu0 0
  %1507 = vmatpush1.bf16.xpose.msra.mxu0 %v1504
  %1508 = vmatprep.subr.bf16.mxu0 0
  %1509 = vmatpush1.bf16.xpose.msra.mxu0 0
  %1510 = vmatprep.subr.bf16.mxu0 0
  %1511 = vmatpush1.bf16.xpose.msra.mxu0 0
  %1512 = vmatprep.subr.bf16.mxu0 0
  %1513 = vmatpush1.bf16.xpose.msra.mxu0 0
  %1514 = vmatprep.subr.bf16.mxu0 0
  %1515 = vmatpush1.bf16.xpose.msra.mxu0 0
  %1516 = vmatprep.subr.bf16.mxu0 0
  %1517 = vmatpush1.bf16.xpose.msra.mxu0 0
  %1518 = vmatprep.subr.bf16.mxu0 0
  %1519 = vmatpush1.bf16.xpose.msra.mxu0 0
  %1520 = vmatprep.subr.bf16.mxu0 0
  %1521 = vmatpush1.bf16.xpose.msra.mxu0 0
  %1522 = vmatprep.subr.bf16.mxu0 0
  %1523 = vmatpush1.bf16.xpose.msra.mxu0 0
  %1524 = vmatprep.subr.bf16.mxu0 0
  %1525 = vmatpush1.bf16.xpose.msra.mxu0 0
  %1526 = vmatprep.subr.bf16.mxu0 0
  %1527 = vmatpush1.bf16.xpose.msra.mxu0 0
  %1528 = vmatprep.subr.bf16.mxu0 0
  %1529 = vmatpush1.bf16.xpose.msra.mxu0 0
  %1530 = vmatprep.subr.bf16.mxu0 0
  %1531 = vmatpush1.bf16.xpose.msra.mxu0 0
  %1532 = vmatprep.subr.bf16.mxu0 0
  %1533 = vmatpush1.bf16.xpose.msra.mxu0 0
  %1534 = vmatprep.subr.bf16.mxu0 0
  %1535 = vmatpush1.bf16.xpose.msra.mxu0 0
  %1536 = vmatprep.subr.bf16.mxu0 0
  %1537 = vmatpush1.bf16.xpose.msra.mxu0 0
  %1538 = vmatprep.mubr.bf16.mxu0 0
  %1539 = vmatmul.mubr.bf16.gmra.mrb[0].mxu0 %v1501
  %v1540 = vpop.f32.mrb[0].mxu0
  %v1541 = vadd.f32 %v211, %v1540
  %v1542 = vpop.f32.mrb[0].mxu0
  %v1543 = vpop.f32.mrb[0].mxu0
  %v1544 = vadd.f32 %v212, %v1543
  %v1545 = vpop.f32.mrb[0].mxu0
  %1546 = vdwg.mxu0
  %v1547 = vsel %vm373, %v1541, -inf
  %1548 = vmax.xlane.f32.xlu0 %v1547
  %v1549 = vpop.xlane.xlu0 %1548
  %v1550 = vsel %vm373, %v1544, -inf
  %1551 = vmax.xlane.f32.xlu0 %v1550
  %v1552 = vpop.xlane.xlu0 %1551
  %v1553 = vsub.f32 %v1541, %v1549
  %v1554 = vsub.f32 %v1544, %v1552
  %v1555 = vmul.f32 %v1553, 1.442695
  %v1556 = vpow.pop %v1555
  %v1557 = vmul.f32 %v1554, 1.442695
  %v1558 = vpow.pop %v1557
  %v1559 = vsel %vm373, %v1556, 0.0
  %1560 = vadd.xlane.f32.xlu0 %v1559
  %v1561 = vpop.xlane.xlu0 %1560
  %v1562 = vsel %vm373, %v1558, 0.0
  %1563 = vadd.xlane.f32.xlu0 %v1562
  %v1564 = vpop.xlane.xlu0 %1563
  %v1565 = vrcp.pop %v1561
  %v1566 = vrcp.pop %v1564
  %v1567 = vmul.f32 %v1556, %v1565
  %v1568 = vmul.f32 %v1558, %v1566
  %v1569 = vpack.c.bf16 %v1568, %v1567
  %1570 = vrot.lane.b32.xlu0 %v1254, 48
  %v1571 = vpop.permute.xlu0 %1570
  %v1574 = vsel %vm373, %v1569, 0
  %1576 = vmatprep.subr.bf16.mxu0 0
  %1577 = vmatpush1.bf16.msra.mxu0 %v1571
  %1578 = vmatprep.subr.bf16.mxu0 0
  %1579 = vmatpush1.bf16.msra.mxu0 0
  %1580 = vmatprep.subr.bf16.mxu0 0
  %1581 = vmatpush1.bf16.msra.mxu0 0
  %1582 = vmatprep.subr.bf16.mxu0 0
  %1583 = vmatpush1.bf16.msra.mxu0 0
  %1584 = vmatprep.subr.bf16.mxu0 0
  %1585 = vmatpush1.bf16.msra.mxu0 0
  %1586 = vmatprep.subr.bf16.mxu0 0
  %1587 = vmatpush1.bf16.msra.mxu0 0
  %1588 = vmatprep.subr.bf16.mxu0 0
  %1589 = vmatpush1.bf16.msra.mxu0 0
  %1590 = vmatprep.subr.bf16.mxu0 0
  %1591 = vmatpush1.bf16.msra.mxu0 0
  %1592 = vmatprep.subr.bf16.mxu0 0
  %1593 = vmatpush1.bf16.msra.mxu0 0
  %1594 = vmatprep.subr.bf16.mxu0 0
  %1595 = vmatpush1.bf16.msra.mxu0 0
  %1596 = vmatprep.subr.bf16.mxu0 0
  %1597 = vmatpush1.bf16.msra.mxu0 0
  %1598 = vmatprep.subr.bf16.mxu0 0
  %1599 = vmatpush1.bf16.msra.mxu0 0
  %1600 = vmatprep.subr.bf16.mxu0 0
  %1601 = vmatpush1.bf16.msra.mxu0 0
  %1602 = vmatprep.subr.bf16.mxu0 0
  %1603 = vmatpush1.bf16.msra.mxu0 0
  %1604 = vmatprep.subr.bf16.mxu0 0
  %1605 = vmatpush1.bf16.msra.mxu0 0
  %1606 = vmatprep.subr.bf16.mxu0 0
  %1607 = vmatpush1.bf16.msra.mxu0 0
  %1608 = vmatprep.mubr.bf16.mxu0 0
  %1609 = vmatmul.mubr.bf16.gmra.mrb[0].mxu0 %v1574
  %v1610 = vpop.f32.mrb[0].mxu0
  %v1611 = vadd.f32 0.0, %v1610
  %v1612 = vpop.f32.mrb[0].mxu0
  %v1613 = vpop.f32.mrb[0].mxu0
  %v1614 = vadd.f32 0.0, %v1613
  %v1615 = vpop.f32.mrb[0].mxu0
  %1616 = vdwg.mxu0
  %1617 = vrot.lane.b32.xlu0 %v1254, 104
  %v1618 = vpop.permute.xlu0 %1617
  %1619 = vrot.lane.b32.xlu0 %v1254, 72
  %v1620 = vpop.permute.xlu0 %1619
  %v1622 = vsel %vm325, %v1618, 0
  %v1625 = vsel %vm325, %v1620, 0
  %1627 = vmatprep.subr.bf16.mxu0 0
  %1628 = vmatpush1.bf16.xpose.msra.mxu0 %v1625
  %1629 = vmatprep.subr.bf16.mxu0 0
  %1630 = vmatpush1.bf16.xpose.msra.mxu0 0
  %1631 = vmatprep.subr.bf16.mxu0 0
  %1632 = vmatpush1.bf16.xpose.msra.mxu0 0
  %1633 = vmatprep.subr.bf16.mxu0 0
  %1634 = vmatpush1.bf16.xpose.msra.mxu0 0
  %1635 = vmatprep.subr.bf16.mxu0 0
  %1636 = vmatpush1.bf16.xpose.msra.mxu0 0
  %1637 = vmatprep.subr.bf16.mxu0 0
  %1638 = vmatpush1.bf16.xpose.msra.mxu0 0
  %1639 = vmatprep.subr.bf16.mxu0 0
  %1640 = vmatpush1.bf16.xpose.msra.mxu0 0
  %1641 = vmatprep.subr.bf16.mxu0 0
  %1642 = vmatpush1.bf16.xpose.msra.mxu0 0
  %1643 = vmatprep.subr.bf16.mxu0 0
  %1644 = vmatpush1.bf16.xpose.msra.mxu0 0
  %1645 = vmatprep.subr.bf16.mxu0 0
  %1646 = vmatpush1.bf16.xpose.msra.mxu0 0
  %1647 = vmatprep.subr.bf16.mxu0 0
  %1648 = vmatpush1.bf16.xpose.msra.mxu0 0
  %1649 = vmatprep.subr.bf16.mxu0 0
  %1650 = vmatpush1.bf16.xpose.msra.mxu0 0
  %1651 = vmatprep.subr.bf16.mxu0 0
  %1652 = vmatpush1.bf16.xpose.msra.mxu0 0
  %1653 = vmatprep.subr.bf16.mxu0 0
  %1654 = vmatpush1.bf16.xpose.msra.mxu0 0
  %1655 = vmatprep.subr.bf16.mxu0 0
  %1656 = vmatpush1.bf16.xpose.msra.mxu0 0
  %1657 = vmatprep.subr.bf16.mxu0 0
  %1658 = vmatpush1.bf16.xpose.msra.mxu0 0
  %1659 = vmatprep.mubr.bf16.mxu0 0
  %1660 = vmatmul.mubr.bf16.gmra.mrb[0].mxu0 %v1622
  %v1661 = vpop.f32.mrb[0].mxu0
  %v1662 = vadd.f32 %v211, %v1661
  %v1663 = vpop.f32.mrb[0].mxu0
  %v1664 = vpop.f32.mrb[0].mxu0
  %v1665 = vadd.f32 %v212, %v1664
  %v1666 = vpop.f32.mrb[0].mxu0
  %1667 = vdwg.mxu0
  %v1668 = vsel %vm373, %v1662, -inf
  %1669 = vmax.xlane.f32.xlu0 %v1668
  %v1670 = vpop.xlane.xlu0 %1669
  %v1671 = vsel %vm373, %v1665, -inf
  %1672 = vmax.xlane.f32.xlu0 %v1671
  %v1673 = vpop.xlane.xlu0 %1672
  %v1674 = vsub.f32 %v1662, %v1670
  %v1675 = vsub.f32 %v1665, %v1673
  %v1676 = vmul.f32 %v1674, 1.442695
  %v1677 = vpow.pop %v1676
  %v1678 = vmul.f32 %v1675, 1.442695
  %v1679 = vpow.pop %v1678
  %v1680 = vsel %vm373, %v1677, 0.0
  %1681 = vadd.xlane.f32.xlu0 %v1680
  %v1682 = vpop.xlane.xlu0 %1681
  %v1683 = vsel %vm373, %v1679, 0.0
  %1684 = vadd.xlane.f32.xlu0 %v1683
  %v1685 = vpop.xlane.xlu0 %1684
  %v1686 = vrcp.pop %v1682
  %v1687 = vrcp.pop %v1685
  %v1688 = vmul.f32 %v1677, %v1686
  %v1689 = vmul.f32 %v1679, %v1687
  %v1690 = vpack.c.bf16 %v1689, %v1688
  %1691 = vrot.lane.b32.xlu0 %v1254, 40
  %v1692 = vpop.permute.xlu0 %1691
  %v1695 = vsel %vm373, %v1690, 0
  %1697 = vmatprep.subr.bf16.mxu0 0
  %1698 = vmatpush1.bf16.msra.mxu0 %v1692
  %1699 = vmatprep.subr.bf16.mxu0 0
  %1700 = vmatpush1.bf16.msra.mxu0 0
  %1701 = vmatprep.subr.bf16.mxu0 0
  %1702 = vmatpush1.bf16.msra.mxu0 0
  %1703 = vmatprep.subr.bf16.mxu0 0
  %1704 = vmatpush1.bf16.msra.mxu0 0
  %1705 = vmatprep.subr.bf16.mxu0 0
  %1706 = vmatpush1.bf16.msra.mxu0 0
  %1707 = vmatprep.subr.bf16.mxu0 0
  %1708 = vmatpush1.bf16.msra.mxu0 0
  %1709 = vmatprep.subr.bf16.mxu0 0
  %1710 = vmatpush1.bf16.msra.mxu0 0
  %1711 = vmatprep.subr.bf16.mxu0 0
  %1712 = vmatpush1.bf16.msra.mxu0 0
  %1713 = vmatprep.subr.bf16.mxu0 0
  %1714 = vmatpush1.bf16.msra.mxu0 0
  %1715 = vmatprep.subr.bf16.mxu0 0
  %1716 = vmatpush1.bf16.msra.mxu0 0
  %1717 = vmatprep.subr.bf16.mxu0 0
  %1718 = vmatpush1.bf16.msra.mxu0 0
  %1719 = vmatprep.subr.bf16.mxu0 0
  %1720 = vmatpush1.bf16.msra.mxu0 0
  %1721 = vmatprep.subr.bf16.mxu0 0
  %1722 = vmatpush1.bf16.msra.mxu0 0
  %1723 = vmatprep.subr.bf16.mxu0 0
  %1724 = vmatpush1.bf16.msra.mxu0 0
  %1725 = vmatprep.subr.bf16.mxu0 0
  %1726 = vmatpush1.bf16.msra.mxu0 0
  %1727 = vmatprep.subr.bf16.mxu0 0
  %1728 = vmatpush1.bf16.msra.mxu0 0
  %1729 = vmatprep.mubr.bf16.mxu0 0
  %1730 = vmatmul.mubr.bf16.gmra.mrb[0].mxu0 %v1695
  %v1731 = vpop.f32.mrb[0].mxu0
  %v1732 = vadd.f32 0.0, %v1731
  %v1733 = vpop.f32.mrb[0].mxu0
  %v1734 = vpop.f32.mrb[0].mxu0
  %v1735 = vadd.f32 0.0, %v1734
  %v1736 = vpop.f32.mrb[0].mxu0
  %1737 = vdwg.mxu0
  %1740 = vrot.lane.b32.xlu0 %v1490, 8
  %v1741 = vpop.permute.xlu0 %1740
  %1742 = vrot.lane.b32.xlu0 %v1493, 8
  %v1743 = vpop.permute.xlu0 %1742
  %1748 = vrot.lane.b32.xlu0 %v1611, 16
  %v1749 = vpop.permute.xlu0 %1748
  %1750 = vrot.lane.b32.xlu0 %v1614, 16
  %v1751 = vpop.permute.xlu0 %1750
  %1756 = vrot.lane.b32.xlu0 %v1732, 24
  %v1757 = vpop.permute.xlu0 %1756
  %1758 = vrot.lane.b32.xlu0 %v1735, 24
  %v1759 = vpop.permute.xlu0 %1758
  %v1762 = vsel %vm325, %v1369, %v1741
  %v1763 = vsel %vm325, %v1372, %v1743
  %v1764 = vsel %vm373, %v1762, %v1749
  %v1765 = vsel %vm373, %v1763, %v1751
  %v1766 = vsel %vm835, %v1764, %v1757
  %v1767 = vsel %vm835, %v1765, %v1759
  %s1768 = scalar_lea.vmem %s7, 16
  %v1769 = vld [vmem:[%s1768] sm:$0xf]
  %v1770 = vld [vmem:[%s1768 + $0x4] sm:$0xf]
  %v1771 = vld [vmem:[%s1768 + $0x8] sm:$0xf]
  %v1772 = vld [vmem:[%s1768 + $0xc] sm:$0xf]
  %v1773 = vpack.c.bf16 %v1767, %v1766
  %v1778 = vunpack.c.l.b16 %v1769
  %v1779 = vunpack.c.l.b16 %v1770
  %v1780 = vunpack.c.l.b16 %v1771
  %v1781 = vunpack.c.l.b16 %v1772
  %v1782 = vpack.c.b16 %v1779, %v1778
  %v1783 = vpack.c.b16 %v1781, %v1780
  %v1787 = vsel %vm215, %v1773, 0
  %1789 = vmatprep.subr.bf16.mxu0 0
  %1790 = vmatpush1.bf16.msra.mxu0 %v1782
  %1791 = vmatprep.subr.bf16.mxu0 0
  %1792 = vmatpush1.bf16.msra.mxu0 %v1783
  %1793 = vmatprep.subr.bf16.mxu0 0
  %1794 = vmatpush1.bf16.msra.mxu0 0
  %1795 = vmatprep.subr.bf16.mxu0 0
  %1796 = vmatpush1.bf16.msra.mxu0 0
  %1797 = vmatprep.subr.bf16.mxu0 0
  %1798 = vmatpush1.bf16.msra.mxu0 0
  %1799 = vmatprep.subr.bf16.mxu0 0
  %1800 = vmatpush1.bf16.msra.mxu0 0
  %1801 = vmatprep.subr.bf16.mxu0 0
  %1802 = vmatpush1.bf16.msra.mxu0 0
  %1803 = vmatprep.subr.bf16.mxu0 0
  %1804 = vmatpush1.bf16.msra.mxu0 0
  %1805 = vmatprep.subr.bf16.mxu0 0
  %1806 = vmatpush1.bf16.msra.mxu0 0
  %1807 = vmatprep.subr.bf16.mxu0 0
  %1808 = vmatpush1.bf16.msra.mxu0 0
  %1809 = vmatprep.subr.bf16.mxu0 0
  %1810 = vmatpush1.bf16.msra.mxu0 0
  %1811 = vmatprep.subr.bf16.mxu0 0
  %1812 = vmatpush1.bf16.msra.mxu0 0
  %1813 = vmatprep.subr.bf16.mxu0 0
  %1814 = vmatpush1.bf16.msra.mxu0 0
  %1815 = vmatprep.subr.bf16.mxu0 0
  %1816 = vmatpush1.bf16.msra.mxu0 0
  %1817 = vmatprep.subr.bf16.mxu0 0
  %1818 = vmatpush1.bf16.msra.mxu0 0
  %1819 = vmatprep.subr.bf16.mxu0 0
  %1820 = vmatpush1.bf16.msra.mxu0 0
  %1821 = vmatprep.mubr.bf16.mxu0 0
  %1822 = vmatmul.mubr.bf16.gmra.mrb[0].mxu0 %v1787
  %v1823 = vpop.f32.mrb[0].mxu0
  %v1824 = vadd.f32 0.0, %v1823
  %v1825 = vpop.f32.mrb[0].mxu0
  %v1826 = vpop.f32.mrb[0].mxu0
  %v1827 = vadd.f32 0.0, %v1826
  %v1828 = vpop.f32.mrb[0].mxu0
  %1829 = vdwg.mxu0
  %v1830 = vadd.f32 %v1145, %v1824
  %v1831 = vadd.f32 %v1146, %v1827
  %v1832 = vld [vmem:[%s3 + $0x8] sm:$0x1]
  %v1833 = vlaneseq
  %v1834 = vshrl.u32 %v1833, 7
  %v1835 = vsub.s32 0, %v1834
  %v1836 = vrot.slane %v1832, %v1835
  %v1837 = vadd.f32 %v1830, %v1836
  %v1838 = vadd.f32 %v1831, %v1836
  %v1839 = vld [vmem:[%s3 + $0x9] sm:$0x1]
  %v1840 = vld [vmem:[%s3 + $0xa] sm:$0x1]
  %v1841 = vsel %vm215, %v1837, 0.0
  %1842 = vadd.xlane.f32.xlu0 %v1841
  %v1843 = vpop.xlane.xlu0 %1842
  %v1844 = vsel %vm215, %v1838, 0.0
  %1845 = vadd.xlane.f32.xlu0 %v1844
  %v1846 = vpop.xlane.xlu0 %1845
  %v1847 = vmul.f32 %v1843, %v222
  %v1848 = vmul.f32 %v1846, %v222
  %v1849 = vsub.f32 %v1837, %v1847
  %v1850 = vsub.f32 %v1838, %v1848
  %v1851 = vmul.f32 %v1849, %v1849
  %v1852 = vmul.f32 %v1850, %v1850
  %v1853 = vsel %vm215, %v1851, 0.0
  %1854 = vadd.xlane.f32.xlu0 %v1853
  %v1855 = vpop.xlane.xlu0 %1854
  %v1856 = vsel %vm215, %v1852, 0.0
  %1857 = vadd.xlane.f32.xlu0 %v1856
  %v1858 = vpop.xlane.xlu0 %1857
  %v1859 = vmul.f32 %v1855, %v222
  %v1860 = vmul.f32 %v1858, %v222
  %v1861 = vadd.f32 %v1859, 1e-06
  %v1862 = vadd.f32 %v1860, 1e-06
  %v1863 = vrsqrt.pop %v1861
  %v1864 = vrsqrt.pop %v1862
  %v1865 = vmul.f32 %v1849, %v1863
  %v1866 = vmul.f32 %v1850, %v1864
  %v1867 = vlaneseq
  %v1868 = vshrl.u32 %v1867, 7
  %v1869 = vsub.s32 0, %v1868
  %v1870 = vrot.slane %v1839, %v1869
  %v1871 = vmul.f32 %v1865, %v1870
  %v1872 = vmul.f32 %v1866, %v1870
  %v1873 = vlaneseq
  %v1874 = vshrl.u32 %v1873, 7
  %v1875 = vsub.s32 0, %v1874
  %v1876 = vrot.slane %v1840, %v1875
  %v1877 = vadd.f32 %v1871, %v1876
  %v1878 = vadd.f32 %v1872, %v1876
  %s1879 = scalar_lea.vmem %s8, 16
  %v1880 = vld [vmem:[%s1879] sm:$0xf]
  %v1881 = vld [vmem:[%s1879 + $0x4] sm:$0xf]
  %v1882 = vld [vmem:[%s1879 + $0x8] sm:$0xf]
  %v1883 = vld [vmem:[%s1879 + $0xc] sm:$0xf]
  %v1884 = vpack.c.bf16 %v1878, %v1877
  %v1885 = vld [vmem:[%s5 + $0x1] sm:$0x1]
  %v1886 = vlaneseq
  %v1887 = vshrl.u32 %v1886, 7
  %v1888 = vsub.s32 0, %v1887
  %v1889 = vrot.slane %v1885, %v1888
  %v1894 = vunpack.c.l.b16 %v1880
  %v1895 = vunpack.c.l.b16 %v1881
  %v1896 = vunpack.c.l.b16 %v1882
  %v1897 = vunpack.c.l.b16 %v1883
  %v1898 = vpack.c.b16 %v1895, %v1894
  %v1899 = vpack.c.b16 %v1897, %v1896
  %v1903 = vsel %vm215, %v1884, 0
  %1905 = vmatprep.subr.bf16.mxu0 0
  %1906 = vmatpush1.bf16.msra.mxu0 %v1898
  %1907 = vmatprep.subr.bf16.mxu0 0
  %1908 = vmatpush1.bf16.msra.mxu0 %v1899
  %1909 = vmatprep.subr.bf16.mxu0 0
  %1910 = vmatpush1.bf16.msra.mxu0 0
  %1911 = vmatprep.subr.bf16.mxu0 0
  %1912 = vmatpush1.bf16.msra.mxu0 0
  %1913 = vmatprep.subr.bf16.mxu0 0
  %1914 = vmatpush1.bf16.msra.mxu0 0
  %1915 = vmatprep.subr.bf16.mxu0 0
  %1916 = vmatpush1.bf16.msra.mxu0 0
  %1917 = vmatprep.subr.bf16.mxu0 0
  %1918 = vmatpush1.bf16.msra.mxu0 0
  %1919 = vmatprep.subr.bf16.mxu0 0
  %1920 = vmatpush1.bf16.msra.mxu0 0
  %1921 = vmatprep.subr.bf16.mxu0 0
  %1922 = vmatpush1.bf16.msra.mxu0 0
  %1923 = vmatprep.subr.bf16.mxu0 0
  %1924 = vmatpush1.bf16.msra.mxu0 0
  %1925 = vmatprep.subr.bf16.mxu0 0
  %1926 = vmatpush1.bf16.msra.mxu0 0
  %1927 = vmatprep.subr.bf16.mxu0 0
  %1928 = vmatpush1.bf16.msra.mxu0 0
  %1929 = vmatprep.subr.bf16.mxu0 0
  %1930 = vmatpush1.bf16.msra.mxu0 0
  %1931 = vmatprep.subr.bf16.mxu0 0
  %1932 = vmatpush1.bf16.msra.mxu0 0
  %1933 = vmatprep.subr.bf16.mxu0 0
  %1934 = vmatpush1.bf16.msra.mxu0 0
  %1935 = vmatprep.subr.bf16.mxu0 0
  %1936 = vmatpush1.bf16.msra.mxu0 0
  %1937 = vmatprep.mubr.bf16.mxu0 0
  %1938 = vmatmul.mubr.bf16.gmra.mrb[0].mxu0 %v1903
  %v1939 = vpop.f32.mrb[0].mxu0
  %v1940 = vadd.f32 %v1889, %v1939
  %v1941 = vpop.f32.mrb[0].mxu0
  %v1942 = vpop.f32.mrb[0].mxu0
  %v1943 = vadd.f32 %v1889, %v1942
  %v1944 = vpop.f32.mrb[0].mxu0
  %1945 = vdwg.mxu0
  %v1946 = vmul.f32 %v1940, 0.5
  %v1947 = vmul.f32 %v1943, 0.5
  %v1948 = vmul.f32 %v1940, 0.044715
  %v1949 = vmul.f32 %v1943, 0.044715
  %v1950 = vmul.f32 %v1948, %v1940
  %v1951 = vmul.f32 %v1949, %v1943
  %v1952 = vmul.f32 %v1950, %v1940
  %v1953 = vmul.f32 %v1951, %v1943
  %v1954 = vadd.f32 %v1940, %v1952
  %v1955 = vadd.f32 %v1943, %v1953
  %v1956 = vmul.f32 %v1954, 0.7978846
  %v1957 = vmul.f32 %v1955, 0.7978846
  %v1958 = vtanh.pop %v1956
  %v1959 = vtanh.pop %v1957
  %v1960 = vadd.f32 %v1958, 1.0
  %v1961 = vadd.f32 %v1959, 1.0
  %v1962 = vmul.f32 %v1946, %v1960
  %v1963 = vmul.f32 %v1947, %v1961
  %s1964 = scalar_lea.vmem %s9, 64
  %v1965 = vld [vmem:[%s1964] sm:$0xf]
  %v1966 = vld [vmem:[%s1964 + $0x4] sm:$0xf]
  %v1967 = vld [vmem:[%s1964 + $0x8] sm:$0xf]
  %v1968 = vld [vmem:[%s1964 + $0xc] sm:$0xf]
  %v1969 = vld [vmem:[%s1964 + $0x10] sm:$0xf]
  %v1970 = vld [vmem:[%s1964 + $0x14] sm:$0xf]
  %v1971 = vld [vmem:[%s1964 + $0x18] sm:$0xf]
  %v1972 = vld [vmem:[%s1964 + $0x1c] sm:$0xf]
  %v1973 = vld [vmem:[%s1964 + $0x20] sm:$0xf]
  %v1974 = vld [vmem:[%s1964 + $0x24] sm:$0xf]
  %v1975 = vld [vmem:[%s1964 + $0x28] sm:$0xf]
  %v1976 = vld [vmem:[%s1964 + $0x2c] sm:$0xf]
  %v1977 = vld [vmem:[%s1964 + $0x30] sm:$0xf]
  %v1978 = vld [vmem:[%s1964 + $0x34] sm:$0xf]
  %v1979 = vld [vmem:[%s1964 + $0x38] sm:$0xf]
  %v1980 = vld [vmem:[%s1964 + $0x3c] sm:$0xf]
  %v1981 = vpack.c.bf16 %v1963, %v1962
  %v1998 = vunpack.c.l.b16 %v1965
  %v1999 = vunpack.c.l.b16 %v1966
  %v2000 = vunpack.c.l.b16 %v1967
  %v2001 = vunpack.c.l.b16 %v1968
  %v2002 = vunpack.c.l.b16 %v1969
  %v2003 = vunpack.c.l.b16 %v1970
  %v2004 = vunpack.c.l.b16 %v1971
  %v2005 = vunpack.c.l.b16 %v1972
  %v2006 = vunpack.c.l.b16 %v1973
  %v2007 = vunpack.c.l.b16 %v1974
  %v2008 = vunpack.c.l.b16 %v1975
  %v2009 = vunpack.c.l.b16 %v1976
  %v2010 = vunpack.c.l.b16 %v1977
  %v2011 = vunpack.c.l.b16 %v1978
  %v2012 = vunpack.c.l.b16 %v1979
  %v2013 = vunpack.c.l.b16 %v1980
  %v2014 = vpack.c.b16 %v1999, %v1998
  %v2015 = vpack.c.b16 %v2001, %v2000
  %v2016 = vpack.c.b16 %v2003, %v2002
  %v2017 = vpack.c.b16 %v2005, %v2004
  %v2018 = vpack.c.b16 %v2007, %v2006
  %v2019 = vpack.c.b16 %v2009, %v2008
  %v2020 = vpack.c.b16 %v2011, %v2010
  %v2021 = vpack.c.b16 %v2013, %v2012
  %2030 = vmatprep.subr.bf16.mxu0 0
  %2031 = vmatpush1.bf16.msra.mxu0 %v2014
  %2032 = vmatprep.subr.bf16.mxu0 0
  %2033 = vmatpush1.bf16.msra.mxu0 %v2015
  %2034 = vmatprep.subr.bf16.mxu0 0
  %2035 = vmatpush1.bf16.msra.mxu0 %v2016
  %2036 = vmatprep.subr.bf16.mxu0 0
  %2037 = vmatpush1.bf16.msra.mxu0 %v2017
  %2038 = vmatprep.subr.bf16.mxu0 0
  %2039 = vmatpush1.bf16.msra.mxu0 %v2018
  %2040 = vmatprep.subr.bf16.mxu0 0
  %2041 = vmatpush1.bf16.msra.mxu0 %v2019
  %2042 = vmatprep.subr.bf16.mxu0 0
  %2043 = vmatpush1.bf16.msra.mxu0 %v2020
  %2044 = vmatprep.subr.bf16.mxu0 0
  %2045 = vmatpush1.bf16.msra.mxu0 %v2021
  %2046 = vmatprep.subr.bf16.mxu0 0
  %2047 = vmatpush1.bf16.msra.mxu0 0
  %2048 = vmatprep.subr.bf16.mxu0 0
  %2049 = vmatpush1.bf16.msra.mxu0 0
  %2050 = vmatprep.subr.bf16.mxu0 0
  %2051 = vmatpush1.bf16.msra.mxu0 0
  %2052 = vmatprep.subr.bf16.mxu0 0
  %2053 = vmatpush1.bf16.msra.mxu0 0
  %2054 = vmatprep.subr.bf16.mxu0 0
  %2055 = vmatpush1.bf16.msra.mxu0 0
  %2056 = vmatprep.subr.bf16.mxu0 0
  %2057 = vmatpush1.bf16.msra.mxu0 0
  %2058 = vmatprep.subr.bf16.mxu0 0
  %2059 = vmatpush1.bf16.msra.mxu0 0
  %2060 = vmatprep.subr.bf16.mxu0 0
  %2061 = vmatpush1.bf16.msra.mxu0 0
  %2062 = vmatprep.mubr.bf16.mxu0 0
  %2063 = vmatmul.mubr.bf16.gmra.mrb[0].mxu0 %v1981
  %v2064 = vpop.f32.mrb[0].mxu0
  %v2065 = vadd.f32 0.0, %v2064
  %v2066 = vpop.f32.mrb[0].mxu0
  %v2067 = vpop.f32.mrb[0].mxu0
  %v2068 = vadd.f32 0.0, %v2067
  %v2069 = vpop.f32.mrb[0].mxu0
  %2070 = vdwg.mxu0
  %v2071 = vadd.f32 %v1837, %v2065
  %v2072 = vadd.f32 %v1838, %v2068
  %v2073 = vld [vmem:[%s3 + $0xb] sm:$0x1]
  %v2074 = vlaneseq
  %v2075 = vshrl.u32 %v2074, 7
  %v2076 = vsub.s32 0, %v2075
  %v2077 = vrot.slane %v2073, %v2076
  %v2078 = vadd.f32 %v2071, %v2077
  %v2079 = vadd.f32 %v2072, %v2077
  %v2081 = vrot.slane %v2079, 7
  %vm2083 = vcmask 1040384
  %v2084 = vsel %vm2083, %v2078, %v2081
  %vm2085 = vcmask 1041408
  %v2086 = vsel %vm2085, %v2084, 0.0
  %v2087 = vld [vmem:[%s3 + $0xc] sm:$0x1]
  %v2088 = vld [vmem:[%s3 + $0xd] sm:$0x1]
  %v2089 = vsel %vm215, %v2086, 0.0
  %2090 = vadd.xlane.f32.xlu0 %v2089
  %v2091 = vpop.xlane.xlu0 %2090
  %v2092 = vmul.f32 %v2091, %v222
  %v2093 = vsub.f32 %v2086, %v2092
  %v2094 = vmul.f32 %v2093, %v2093
  %v2095 = vsel %vm215, %v2094, 0.0
  %2096 = vadd.xlane.f32.xlu0 %v2095
  %v2097 = vpop.xlane.xlu0 %2096
  %v2098 = vmul.f32 %v2097, %v222
  %v2099 = vadd.f32 %v2098, 1e-06
  %v2100 = vrsqrt.pop %v2099
  %v2101 = vmul.f32 %v2093, %v2100
  %v2102 = vlaneseq
  %v2103 = vshrl.u32 %v2102, 7
  %v2104 = vsub.s32 0, %v2103
  %v2105 = vrot.slane %v2087, %v2104
  %v2106 = vmul.f32 %v2101, %v2105
  %v2107 = vlaneseq
  %v2108 = vshrl.u32 %v2107, 7
  %v2109 = vsub.s32 0, %v2108
  %v2110 = vrot.slane %v2088, %v2109
  %v2111 = vadd.f32 %v2106, %v2110
  %v2112 = vld [vmem:[%s10] sm:$0xff]
  %v2113 = vld [vmem:[%s10 + $0x8] sm:$0xff]
  %v2114 = vld [vmem:[%s10 + $0x10] sm:$0xff]
  %v2115 = vld [vmem:[%s10 + $0x18] sm:$0xff]
  %v2116 = vld [vmem:[%s10 + $0x20] sm:$0xff]
  %v2117 = vld [vmem:[%s10 + $0x28] sm:$0xff]
  %v2118 = vld [vmem:[%s10 + $0x30] sm:$0xff]
  %v2119 = vld [vmem:[%s10 + $0x38] sm:$0xff]
  %v2120 = vpack.c.bf16 %v2111, %v2111
  %v2121 = vld [vmem:[%s13] sm:$0xf]
  %v2123 = vlaneseq
  %v2124 = vshrl.u32 %v2123, 7
  %v2125 = vsub.s32 0, %v2124
  %v2126 = vrot.slane %v2121, %v2125
  %v2127 = vlaneseq
  %v2128 = vshrl.u32 %v2127, 7
  %v2129 = vsub.s32 1, %v2128
  %v2130 = vrot.slane %v2121, %v2129
  %v2131 = vlaneseq
  %v2132 = vshrl.u32 %v2131, 7
  %v2133 = vsub.s32 2, %v2132
  %v2134 = vrot.slane %v2121, %v2133
  %v2135 = vlaneseq
  %v2136 = vshrl.u32 %v2135, 7
  %v2137 = vsub.s32 3, %v2136
  %v2138 = vrot.slane %v2121, %v2137
  %v2151 = vunpack.c.l.b16 %v2112
  %v2152 = vunpack.c.h.b16 %v2112
  %v2153 = vunpack.c.l.b16 %v2113
  %v2154 = vunpack.c.h.b16 %v2113
  %v2155 = vunpack.c.l.b16 %v2114
  %v2156 = vunpack.c.h.b16 %v2114
  %v2157 = vunpack.c.l.b16 %v2115
  %v2158 = vunpack.c.h.b16 %v2115
  %v2159 = vunpack.c.l.b16 %v2116
  %v2160 = vunpack.c.h.b16 %v2116
  %v2161 = vunpack.c.l.b16 %v2117
  %v2162 = vunpack.c.h.b16 %v2117
  %v2163 = vunpack.c.l.b16 %v2118
  %v2164 = vunpack.c.h.b16 %v2118
  %v2165 = vunpack.c.l.b16 %v2119
  %v2166 = vunpack.c.h.b16 %v2119
  %v2167 = vpack.c.b16 %v2155, %v2151
  %v2168 = vpack.c.b16 %v2156, %v2152
  %v2169 = vpack.c.b16 %v2157, %v2153
  %v2170 = vpack.c.b16 %v2158, %v2154
  %v2171 = vpack.c.b16 %v2163, %v2159
  %v2172 = vpack.c.b16 %v2164, %v2160
  %v2173 = vpack.c.b16 %v2165, %v2161
  %v2174 = vpack.c.b16 %v2166, %v2162
  %v2184 = vsel %vm215, %v2120, 0
  %2186 = vmatprep.subr.bf16.mxu0 %v2168
  %2187 = vmatpush1.bf16.msra.mxu0 %v2167
  %2188 = vmatprep.subr.bf16.mxu0 %v2172
  %2189 = vmatpush1.bf16.msra.mxu0 %v2171
  %2190 = vmatprep.subr.bf16.mxu0 0
  %2191 = vmatpush1.bf16.msra.mxu0 0
  %2192 = vmatprep.subr.bf16.mxu0 0
  %2193 = vmatpush1.bf16.msra.mxu0 0
  %2194 = vmatprep.subr.bf16.mxu0 0
  %2195 = vmatpush1.bf16.msra.mxu0 0
  %2196 = vmatprep.subr.bf16.mxu0 0
  %2197 = vmatpush1.bf16.msra.mxu0 0
  %2198 = vmatprep.subr.bf16.mxu0 0
  %2199 = vmatpush1.bf16.msra.mxu0 0
  %2200 = vmatprep.subr.bf16.mxu0 0
  %2201 = vmatpush1.bf16.msra.mxu0 0
  %2202 = vmatprep.subr.bf16.mxu0 0
  %2203 = vmatpush1.bf16.msra.mxu0 0
  %2204 = vmatprep.subr.bf16.mxu0 0
  %2205 = vmatpush1.bf16.msra.mxu0 0
  %2206 = vmatprep.subr.bf16.mxu0 0
  %2207 = vmatpush1.bf16.msra.mxu0 0
  %2208 = vmatprep.subr.bf16.mxu0 0
  %2209 = vmatpush1.bf16.msra.mxu0 0
  %2210 = vmatprep.subr.bf16.mxu0 0
  %2211 = vmatpush1.bf16.msra.mxu0 0
  %2212 = vmatprep.subr.bf16.mxu0 0
  %2213 = vmatpush1.bf16.msra.mxu0 0
  %2214 = vmatprep.subr.bf16.mxu0 0
  %2215 = vmatpush1.bf16.msra.mxu0 0
  %2216 = vmatprep.subr.bf16.mxu0 0
  %2217 = vmatpush1.bf16.msra.mxu0 0
  %2218 = vmatprep.mubr.bf16.mxu0 0
  %2219 = vmatmul.mubr.bf16.gmra.mrb[0].mxu0 %v2184
  %v2220 = vpop.f32.mrb[0].mxu0
  %v2221 = vadd.f32 %v2126, %v2220
  %v2222 = vpop.f32.mrb[0].mxu0
  %v2223 = vadd.f32 %v2130, %v2222
  %v2224 = vpop.f32.mrb[0].mxu0
  %v2225 = vpop.f32.mrb[0].mxu0
  %2226 = vdwg.mxu0
  %2227 = vmatprep.subr.bf16.mxu0 %v2170
  %2228 = vmatpush1.bf16.msra.mxu0 %v2169
  %2229 = vmatprep.subr.bf16.mxu0 %v2174
  %2230 = vmatpush1.bf16.msra.mxu0 %v2173
  %2231 = vmatprep.subr.bf16.mxu0 0
  %2232 = vmatpush1.bf16.msra.mxu0 0
  %2233 = vmatprep.subr.bf16.mxu0 0
  %2234 = vmatpush1.bf16.msra.mxu0 0
  %2235 = vmatprep.subr.bf16.mxu0 0
  %2236 = vmatpush1.bf16.msra.mxu0 0
  %2237 = vmatprep.subr.bf16.mxu0 0
  %2238 = vmatpush1.bf16.msra.mxu0 0
  %2239 = vmatprep.subr.bf16.mxu0 0
  %2240 = vmatpush1.bf16.msra.mxu0 0
  %2241 = vmatprep.subr.bf16.mxu0 0
  %2242 = vmatpush1.bf16.msra.mxu0 0
  %2243 = vmatprep.subr.bf16.mxu0 0
  %2244 = vmatpush1.bf16.msra.mxu0 0
  %2245 = vmatprep.subr.bf16.mxu0 0
  %2246 = vmatpush1.bf16.msra.mxu0 0
  %2247 = vmatprep.subr.bf16.mxu0 0
  %2248 = vmatpush1.bf16.msra.mxu0 0
  %2249 = vmatprep.subr.bf16.mxu0 0
  %2250 = vmatpush1.bf16.msra.mxu0 0
  %2251 = vmatprep.subr.bf16.mxu0 0
  %2252 = vmatpush1.bf16.msra.mxu0 0
  %2253 = vmatprep.subr.bf16.mxu0 0
  %2254 = vmatpush1.bf16.msra.mxu0 0
  %2255 = vmatprep.subr.bf16.mxu0 0
  %2256 = vmatpush1.bf16.msra.mxu0 0
  %2257 = vmatprep.subr.bf16.mxu0 0
  %2258 = vmatpush1.bf16.msra.mxu0 0
  %2259 = vmatprep.mubr.bf16.mxu0 0
  %2260 = vmatmul.mubr.bf16.gmra.mrb[0].mxu0 %v2184
  %v2261 = vpop.f32.mrb[0].mxu0
  %v2262 = vadd.f32 %v2134, %v2261
  %v2263 = vpop.f32.mrb[0].mxu0
  %v2264 = vadd.f32 %v2138, %v2263
  %v2265 = vpop.f32.mrb[0].mxu0
  %v2266 = vpop.f32.mrb[0].mxu0
  %2267 = vdwg.mxu0
  %v2268 = vmax.f32 %v2221, 0.0
  %v2269 = vmax.f32 %v2223, 0.0
  %v2270 = vmax.f32 %v2262, 0.0
  %v2271 = vmax.f32 %v2264, 0.0
  %v2272 = vld [vmem:[%s11] sm:$0xff]
  %v2273 = vld [vmem:[%s11 + $0x8] sm:$0xff]
  %v2274 = vld [vmem:[%s11 + $0x10] sm:$0xff]
  %v2275 = vld [vmem:[%s11 + $0x18] sm:$0xff]
  %v2276 = vld [vmem:[%s11 + $0x20] sm:$0xff]
  %v2277 = vld [vmem:[%s11 + $0x28] sm:$0xff]
  %v2278 = vld [vmem:[%s11 + $0x30] sm:$0xff]
  %v2279 = vld [vmem:[%s11 + $0x38] sm:$0xff]
  %v2280 = vld [vmem:[%s11 + $0x40] sm:$0xff]
  %v2281 = vld [vmem:[%s11 + $0x48] sm:$0xff]
  %v2282 = vld [vmem:[%s11 + $0x50] sm:$0xff]
  %v2283 = vld [vmem:[%s11 + $0x58] sm:$0xff]
  %v2284 = vld [vmem:[%s11 + $0x60] sm:$0xff]
  %v2285 = vld [vmem:[%s11 + $0x68] sm:$0xff]
  %v2286 = vld [vmem:[%s11 + $0x70] sm:$0xff]
  %v2287 = vld [vmem:[%s11 + $0x78] sm:$0xff]
  %v2288 = vld [vmem:[%s11 + $0x80] sm:$0xff]
  %v2289 = vld [vmem:[%s11 + $0x88] sm:$0xff]
  %v2290 = vld [vmem:[%s11 + $0x90] sm:$0xff]
  %v2291 = vld [vmem:[%s11 + $0x98] sm:$0xff]
  %v2292 = vld [vmem:[%s11 + $0xa0] sm:$0xff]
  %v2293 = vld [vmem:[%s11 + $0xa8] sm:$0xff]
  %v2294 = vld [vmem:[%s11 + $0xb0] sm:$0xff]
  %v2295 = vld [vmem:[%s11 + $0xb8] sm:$0xff]
  %v2296 = vld [vmem:[%s11 + $0xc0] sm:$0xff]
  %v2297 = vld [vmem:[%s11 + $0xc8] sm:$0xff]
  %v2298 = vld [vmem:[%s11 + $0xd0] sm:$0xff]
  %v2299 = vld [vmem:[%s11 + $0xd8] sm:$0xff]
  %v2300 = vld [vmem:[%s11 + $0xe0] sm:$0xff]
  %v2301 = vld [vmem:[%s11 + $0xe8] sm:$0xff]
  %v2302 = vld [vmem:[%s11 + $0xf0] sm:$0xff]
  %v2303 = vld [vmem:[%s11 + $0xf8] sm:$0xff]
  %v2304 = vld [vmem:[%s11 + $0x100] sm:$0xff]
  %v2305 = vld [vmem:[%s11 + $0x108] sm:$0xff]
  %v2306 = vld [vmem:[%s11 + $0x110] sm:$0xff]
  %v2307 = vld [vmem:[%s11 + $0x118] sm:$0xff]
  %v2308 = vld [vmem:[%s11 + $0x120] sm:$0xff]
  %v2309 = vld [vmem:[%s11 + $0x128] sm:$0xff]
  %v2310 = vld [vmem:[%s11 + $0x130] sm:$0xff]
  %v2311 = vld [vmem:[%s11 + $0x138] sm:$0xff]
  %v2312 = vld [vmem:[%s11 + $0x140] sm:$0xff]
  %v2313 = vld [vmem:[%s11 + $0x148] sm:$0xff]
  %v2314 = vld [vmem:[%s11 + $0x150] sm:$0xff]
  %v2315 = vld [vmem:[%s11 + $0x158] sm:$0xff]
  %v2316 = vld [vmem:[%s11 + $0x160] sm:$0xff]
  %v2317 = vld [vmem:[%s11 + $0x168] sm:$0xff]
  %v2318 = vld [vmem:[%s11 + $0x170] sm:$0xff]
  %v2319 = vld [vmem:[%s11 + $0x178] sm:$0xff]
  %v2320 = vld [vmem:[%s11 + $0x180] sm:$0xff]
  %v2321 = vld [vmem:[%s11 + $0x188] sm:$0xff]
  %v2322 = vld [vmem:[%s11 + $0x190] sm:$0xff]
  %v2323 = vld [vmem:[%s11 + $0x198] sm:$0xff]
  %v2324 = vld [vmem:[%s11 + $0x1a0] sm:$0xff]
  %v2325 = vld [vmem:[%s11 + $0x1a8] sm:$0xff]
  %v2326 = vld [vmem:[%s11 + $0x1b0] sm:$0xff]
  %v2327 = vld [vmem:[%s11 + $0x1b8] sm:$0xff]
  %v2328 = vld [vmem:[%s11 + $0x1c0] sm:$0xff]
  %v2329 = vld [vmem:[%s11 + $0x1c8] sm:$0xff]
  %v2330 = vld [vmem:[%s11 + $0x1d0] sm:$0xff]
  %v2331 = vld [vmem:[%s11 + $0x1d8] sm:$0xff]
  %v2332 = vld [vmem:[%s11 + $0x1e0] sm:$0xff]
  %v2333 = vld [vmem:[%s11 + $0x1e8] sm:$0xff]
  %v2334 = vld [vmem:[%s11 + $0x1f0] sm:$0xff]
  %v2335 = vld [vmem:[%s11 + $0x1f8] sm:$0xff]
  %v2336 = vpack.c.bf16 %v2268, %v2268
  %v2337 = vpack.c.bf16 %v2269, %v2269
  %v2338 = vpack.c.bf16 %v2270, %v2270
  %v2339 = vpack.c.bf16 %v2271, %v2271
  %v2340 = vld [vmem:[%s13 + $0x4] sm:$0x3]
  %v2342 = vlaneseq
  %v2343 = vshrl.u32 %v2342, 7
  %v2344 = vsub.s32 0, %v2343
  %v2345 = vrot.slane %v2340, %v2344
  %v2346 = vlaneseq
  %v2347 = vshrl.u32 %v2346, 7
  %v2348 = vsub.s32 1, %v2347
  %v2349 = vrot.slane %v2340, %v2348
  %v2416 = vunpack.c.l.b16 %v2272
  %v2417 = vunpack.c.h.b16 %v2272
  %v2418 = vunpack.c.l.b16 %v2273
  %v2419 = vunpack.c.h.b16 %v2273
  %v2420 = vunpack.c.l.b16 %v2274
  %v2421 = vunpack.c.h.b16 %v2274
  %v2422 = vunpack.c.l.b16 %v2275
  %v2423 = vunpack.c.h.b16 %v2275
  %v2424 = vunpack.c.l.b16 %v2276
  %v2425 = vunpack.c.h.b16 %v2276
  %v2426 = vunpack.c.l.b16 %v2277
  %v2427 = vunpack.c.h.b16 %v2277
  %v2428 = vunpack.c.l.b16 %v2278
  %v2429 = vunpack.c.h.b16 %v2278
  %v2430 = vunpack.c.l.b16 %v2279
  %v2431 = vunpack.c.h.b16 %v2279
  %v2432 = vunpack.c.l.b16 %v2280
  %v2433 = vunpack.c.h.b16 %v2280
  %v2434 = vunpack.c.l.b16 %v2281
  %v2435 = vunpack.c.h.b16 %v2281
  %v2436 = vunpack.c.l.b16 %v2282
  %v2437 = vunpack.c.h.b16 %v2282
  %v2438 = vunpack.c.l.b16 %v2283
  %v2439 = vunpack.c.h.b16 %v2283
  %v2440 = vunpack.c.l.b16 %v2284
  %v2441 = vunpack.c.h.b16 %v2284
  %v2442 = vunpack.c.l.b16 %v2285
  %v2443 = vunpack.c.h.b16 %v2285
  %v2444 = vunpack.c.l.b16 %v2286
  %v2445 = vunpack.c.h.b16 %v2286
  %v2446 = vunpack.c.l.b16 %v2287
  %v2447 = vunpack.c.h.b16 %v2287
  %v2448 = vunpack.c.l.b16 %v2288
  %v2449 = vunpack.c.h.b16 %v2288
  %v2450 = vunpack.c.l.b16 %v2289
  %v2451 = vunpack.c.h.b16 %v2289
  %v2452 = vunpack.c.l.b16 %v2290
  %v2453 = vunpack.c.h.b16 %v2290
  %v2454 = vunpack.c.l.b16 %v2291
  %v2455 = vunpack.c.h.b16 %v2291
  %v2456 = vunpack.c.l.b16 %v2292
  %v2457 = vunpack.c.h.b16 %v2292
  %v2458 = vunpack.c.l.b16 %v2293
  %v2459 = vunpack.c.h.b16 %v2293
  %v2460 = vunpack.c.l.b16 %v2294
  %v2461 = vunpack.c.h.b16 %v2294
  %v2462 = vunpack.c.l.b16 %v2295
  %v2463 = vunpack.c.h.b16 %v2295
  %v2464 = vunpack.c.l.b16 %v2296
  %v2465 = vunpack.c.h.b16 %v2296
  %v2466 = vunpack.c.l.b16 %v2297
  %v2467 = vunpack.c.h.b16 %v2297
  %v2468 = vunpack.c.l.b16 %v2298
  %v2469 = vunpack.c.h.b16 %v2298
  %v2470 = vunpack.c.l.b16 %v2299
  %v2471 = vunpack.c.h.b16 %v2299
  %v2472 = vunpack.c.l.b16 %v2300
  %v2473 = vunpack.c.h.b16 %v2300
  %v2474 = vunpack.c.l.b16 %v2301
  %v2475 = vunpack.c.h.b16 %v2301
  %v2476 = vunpack.c.l.b16 %v2302
  %v2477 = vunpack.c.h.b16 %v2302
  %v2478 = vunpack.c.l.b16 %v2303
  %v2479 = vunpack.c.h.b16 %v2303
  %v2480 = vunpack.c.l.b16 %v2304
  %v2481 = vunpack.c.h.b16 %v2304
  %v2482 = vunpack.c.l.b16 %v2305
  %v2483 = vunpack.c.h.b16 %v2305
  %v2484 = vunpack.c.l.b16 %v2306
  %v2485 = vunpack.c.h.b16 %v2306
  %v2486 = vunpack.c.l.b16 %v2307
  %v2487 = vunpack.c.h.b16 %v2307
  %v2488 = vunpack.c.l.b16 %v2308
  %v2489 = vunpack.c.h.b16 %v2308
  %v2490 = vunpack.c.l.b16 %v2309
  %v2491 = vunpack.c.h.b16 %v2309
  %v2492 = vunpack.c.l.b16 %v2310
  %v2493 = vunpack.c.h.b16 %v2310
  %v2494 = vunpack.c.l.b16 %v2311
  %v2495 = vunpack.c.h.b16 %v2311
  %v2496 = vunpack.c.l.b16 %v2312
  %v2497 = vunpack.c.h.b16 %v2312
  %v2498 = vunpack.c.l.b16 %v2313
  %v2499 = vunpack.c.h.b16 %v2313
  %v2500 = vunpack.c.l.b16 %v2314
  %v2501 = vunpack.c.h.b16 %v2314
  %v2502 = vunpack.c.l.b16 %v2315
  %v2503 = vunpack.c.h.b16 %v2315
  %v2504 = vunpack.c.l.b16 %v2316
  %v2505 = vunpack.c.h.b16 %v2316
  %v2506 = vunpack.c.l.b16 %v2317
  %v2507 = vunpack.c.h.b16 %v2317
  %v2508 = vunpack.c.l.b16 %v2318
  %v2509 = vunpack.c.h.b16 %v2318
  %v2510 = vunpack.c.l.b16 %v2319
  %v2511 = vunpack.c.h.b16 %v2319
  %v2512 = vunpack.c.l.b16 %v2320
  %v2513 = vunpack.c.h.b16 %v2320
  %v2514 = vunpack.c.l.b16 %v2321
  %v2515 = vunpack.c.h.b16 %v2321
  %v2516 = vunpack.c.l.b16 %v2322
  %v2517 = vunpack.c.h.b16 %v2322
  %v2518 = vunpack.c.l.b16 %v2323
  %v2519 = vunpack.c.h.b16 %v2323
  %v2520 = vunpack.c.l.b16 %v2324
  %v2521 = vunpack.c.h.b16 %v2324
  %v2522 = vunpack.c.l.b16 %v2325
  %v2523 = vunpack.c.h.b16 %v2325
  %v2524 = vunpack.c.l.b16 %v2326
  %v2525 = vunpack.c.h.b16 %v2326
  %v2526 = vunpack.c.l.b16 %v2327
  %v2527 = vunpack.c.h.b16 %v2327
  %v2528 = vunpack.c.l.b16 %v2328
  %v2529 = vunpack.c.h.b16 %v2328
  %v2530 = vunpack.c.l.b16 %v2329
  %v2531 = vunpack.c.h.b16 %v2329
  %v2532 = vunpack.c.l.b16 %v2330
  %v2533 = vunpack.c.h.b16 %v2330
  %v2534 = vunpack.c.l.b16 %v2331
  %v2535 = vunpack.c.h.b16 %v2331
  %v2536 = vunpack.c.l.b16 %v2332
  %v2537 = vunpack.c.h.b16 %v2332
  %v2538 = vunpack.c.l.b16 %v2333
  %v2539 = vunpack.c.h.b16 %v2333
  %v2540 = vunpack.c.l.b16 %v2334
  %v2541 = vunpack.c.h.b16 %v2334
  %v2542 = vunpack.c.l.b16 %v2335
  %v2543 = vunpack.c.h.b16 %v2335
  %v2544 = vpack.c.b16 %v2418, %v2416
  %v2545 = vpack.c.b16 %v2419, %v2417
  %v2546 = vpack.c.b16 %v2422, %v2420
  %v2547 = vpack.c.b16 %v2423, %v2421
  %v2548 = vpack.c.b16 %v2426, %v2424
  %v2549 = vpack.c.b16 %v2427, %v2425
  %v2550 = vpack.c.b16 %v2430, %v2428
  %v2551 = vpack.c.b16 %v2431, %v2429
  %v2552 = vpack.c.b16 %v2434, %v2432
  %v2553 = vpack.c.b16 %v2435, %v2433
  %v2554 = vpack.c.b16 %v2438, %v2436
  %v2555 = vpack.c.b16 %v2439, %v2437
  %v2556 = vpack.c.b16 %v2442, %v2440
  %v2557 = vpack.c.b16 %v2443, %v2441
  %v2558 = vpack.c.b16 %v2446, %v2444
  %v2559 = vpack.c.b16 %v2447, %v2445
  %v2560 = vpack.c.b16 %v2450, %v2448
  %v2561 = vpack.c.b16 %v2451, %v2449
  %v2562 = vpack.c.b16 %v2454, %v2452
  %v2563 = vpack.c.b16 %v2455, %v2453
  %v2564 = vpack.c.b16 %v2458, %v2456
  %v2565 = vpack.c.b16 %v2459, %v2457
  %v2566 = vpack.c.b16 %v2462, %v2460
  %v2567 = vpack.c.b16 %v2463, %v2461
  %v2568 = vpack.c.b16 %v2466, %v2464
  %v2569 = vpack.c.b16 %v2467, %v2465
  %v2570 = vpack.c.b16 %v2470, %v2468
  %v2571 = vpack.c.b16 %v2471, %v2469
  %v2572 = vpack.c.b16 %v2474, %v2472
  %v2573 = vpack.c.b16 %v2475, %v2473
  %v2574 = vpack.c.b16 %v2478, %v2476
  %v2575 = vpack.c.b16 %v2479, %v2477
  %v2576 = vpack.c.b16 %v2482, %v2480
  %v2577 = vpack.c.b16 %v2483, %v2481
  %v2578 = vpack.c.b16 %v2486, %v2484
  %v2579 = vpack.c.b16 %v2487, %v2485
  %v2580 = vpack.c.b16 %v2490, %v2488
  %v2581 = vpack.c.b16 %v2491, %v2489
  %v2582 = vpack.c.b16 %v2494, %v2492
  %v2583 = vpack.c.b16 %v2495, %v2493
  %v2584 = vpack.c.b16 %v2498, %v2496
  %v2585 = vpack.c.b16 %v2499, %v2497
  %v2586 = vpack.c.b16 %v2502, %v2500
  %v2587 = vpack.c.b16 %v2503, %v2501
  %v2588 = vpack.c.b16 %v2506, %v2504
  %v2589 = vpack.c.b16 %v2507, %v2505
  %v2590 = vpack.c.b16 %v2510, %v2508
  %v2591 = vpack.c.b16 %v2511, %v2509
  %v2592 = vpack.c.b16 %v2514, %v2512
  %v2593 = vpack.c.b16 %v2515, %v2513
  %v2594 = vpack.c.b16 %v2518, %v2516
  %v2595 = vpack.c.b16 %v2519, %v2517
  %v2596 = vpack.c.b16 %v2522, %v2520
  %v2597 = vpack.c.b16 %v2523, %v2521
  %v2598 = vpack.c.b16 %v2526, %v2524
  %v2599 = vpack.c.b16 %v2527, %v2525
  %v2600 = vpack.c.b16 %v2530, %v2528
  %v2601 = vpack.c.b16 %v2531, %v2529
  %v2602 = vpack.c.b16 %v2534, %v2532
  %v2603 = vpack.c.b16 %v2535, %v2533
  %v2604 = vpack.c.b16 %v2538, %v2536
  %v2605 = vpack.c.b16 %v2539, %v2537
  %v2606 = vpack.c.b16 %v2542, %v2540
  %v2607 = vpack.c.b16 %v2543, %v2541
  %2672 = vmatprep.subr.bf16.mxu0 %v2545
  %2673 = vmatpush1.bf16.msra.mxu0 %v2544
  %2674 = vmatprep.subr.bf16.mxu0 %v2547
  %2675 = vmatpush1.bf16.msra.mxu0 %v2546
  %2676 = vmatprep.subr.bf16.mxu0 %v2549
  %2677 = vmatpush1.bf16.msra.mxu0 %v2548
  %2678 = vmatprep.subr.bf16.mxu0 %v2551
  %2679 = vmatpush1.bf16.msra.mxu0 %v2550
  %2680 = vmatprep.subr.bf16.mxu0 %v2553
  %2681 = vmatpush1.bf16.msra.mxu0 %v2552
  %2682 = vmatprep.subr.bf16.mxu0 %v2555
  %2683 = vmatpush1.bf16.msra.mxu0 %v2554
  %2684 = vmatprep.subr.bf16.mxu0 %v2557
  %2685 = vmatpush1.bf16.msra.mxu0 %v2556
  %2686 = vmatprep.subr.bf16.mxu0 %v2559
  %2687 = vmatpush1.bf16.msra.mxu0 %v2558
  %2688 = vmatprep.subr.bf16.mxu0 %v2561
  %2689 = vmatpush1.bf16.msra.mxu0 %v2560
  %2690 = vmatprep.subr.bf16.mxu0 %v2563
  %2691 = vmatpush1.bf16.msra.mxu0 %v2562
  %2692 = vmatprep.subr.bf16.mxu0 %v2565
  %2693 = vmatpush1.bf16.msra.mxu0 %v2564
  %2694 = vmatprep.subr.bf16.mxu0 %v2567
  %2695 = vmatpush1.bf16.msra.mxu0 %v2566
  %2696 = vmatprep.subr.bf16.mxu0 %v2569
  %2697 = vmatpush1.bf16.msra.mxu0 %v2568
  %2698 = vmatprep.subr.bf16.mxu0 %v2571
  %2699 = vmatpush1.bf16.msra.mxu0 %v2570
  %2700 = vmatprep.subr.bf16.mxu0 %v2573
  %2701 = vmatpush1.bf16.msra.mxu0 %v2572
  %2702 = vmatprep.subr.bf16.mxu0 %v2575
  %2703 = vmatpush1.bf16.msra.mxu0 %v2574
  %2704 = vmatprep.mubr.bf16.mxu0 %v2337
  %2705 = vmatmul.mubr.bf16.gmra.mrb[0].mxu0 %v2336
  %v2706 = vpop.f32.mrb[0].mxu0
  %v2707 = vadd.f32 %v2345, %v2706
  %v2708 = vpop.f32.mrb[0].mxu0
  %v2709 = vadd.f32 %v2349, %v2708
  %v2710 = vpop.f32.mrb[0].mxu0
  %v2711 = vpop.f32.mrb[0].mxu0
  %2712 = vdwg.mxu0
  %2713 = vmatprep.subr.bf16.mxu0 %v2577
  %2714 = vmatpush1.bf16.msra.mxu0 %v2576
  %2715 = vmatprep.subr.bf16.mxu0 %v2579
  %2716 = vmatpush1.bf16.msra.mxu0 %v2578
  %2717 = vmatprep.subr.bf16.mxu0 %v2581
  %2718 = vmatpush1.bf16.msra.mxu0 %v2580
  %2719 = vmatprep.subr.bf16.mxu0 %v2583
  %2720 = vmatpush1.bf16.msra.mxu0 %v2582
  %2721 = vmatprep.subr.bf16.mxu0 %v2585
  %2722 = vmatpush1.bf16.msra.mxu0 %v2584
  %2723 = vmatprep.subr.bf16.mxu0 %v2587
  %2724 = vmatpush1.bf16.msra.mxu0 %v2586
  %2725 = vmatprep.subr.bf16.mxu0 %v2589
  %2726 = vmatpush1.bf16.msra.mxu0 %v2588
  %2727 = vmatprep.subr.bf16.mxu0 %v2591
  %2728 = vmatpush1.bf16.msra.mxu0 %v2590
  %2729 = vmatprep.subr.bf16.mxu0 %v2593
  %2730 = vmatpush1.bf16.msra.mxu0 %v2592
  %2731 = vmatprep.subr.bf16.mxu0 %v2595
  %2732 = vmatpush1.bf16.msra.mxu0 %v2594
  %2733 = vmatprep.subr.bf16.mxu0 %v2597
  %2734 = vmatpush1.bf16.msra.mxu0 %v2596
  %2735 = vmatprep.subr.bf16.mxu0 %v2599
  %2736 = vmatpush1.bf16.msra.mxu0 %v2598
  %2737 = vmatprep.subr.bf16.mxu0 %v2601
  %2738 = vmatpush1.bf16.msra.mxu0 %v2600
  %2739 = vmatprep.subr.bf16.mxu0 %v2603
  %2740 = vmatpush1.bf16.msra.mxu0 %v2602
  %2741 = vmatprep.subr.bf16.mxu0 %v2605
  %2742 = vmatpush1.bf16.msra.mxu0 %v2604
  %2743 = vmatprep.subr.bf16.mxu0 %v2607
  %2744 = vmatpush1.bf16.msra.mxu0 %v2606
  %2745 = vmatprep.mubr.bf16.mxu0 %v2339
  %2746 = vmatmul.mubr.bf16.gmra.mrb[0].mxu0 %v2338
  %v2747 = vpop.f32.mrb[0].mxu0
  %v2748 = vadd.f32 %v2707, %v2747
  %v2749 = vpop.f32.mrb[0].mxu0
  %v2750 = vadd.f32 %v2709, %v2749
  %v2751 = vpop.f32.mrb[0].mxu0
  %v2752 = vpop.f32.mrb[0].mxu0
  %2753 = vdwg.mxu0
  %v2754 = vmax.f32 %v2748, 0.0
  %v2755 = vmax.f32 %v2750, 0.0
  %v2756 = vld [vmem:[%s12] sm:$0xf]
  %v2757 = vld [vmem:[%s12 + $0x4] sm:$0xf]
  %v2758 = vld [vmem:[%s12 + $0x8] sm:$0xf]
  %v2759 = vld [vmem:[%s12 + $0xc] sm:$0xf]
  %v2760 = vld [vmem:[%s12 + $0x10] sm:$0xf]
  %v2761 = vld [vmem:[%s12 + $0x14] sm:$0xf]
  %v2762 = vld [vmem:[%s12 + $0x18] sm:$0xf]
  %v2763 = vld [vmem:[%s12 + $0x1c] sm:$0xf]
  %v2764 = vld [vmem:[%s12 + $0x20] sm:$0xf]
  %v2765 = vld [vmem:[%s12 + $0x24] sm:$0xf]
  %v2766 = vld [vmem:[%s12 + $0x28] sm:$0xf]
  %v2767 = vld [vmem:[%s12 + $0x2c] sm:$0xf]
  %v2768 = vld [vmem:[%s12 + $0x30] sm:$0xf]
  %v2769 = vld [vmem:[%s12 + $0x34] sm:$0xf]
  %v2770 = vld [vmem:[%s12 + $0x38] sm:$0xf]
  %v2771 = vld [vmem:[%s12 + $0x3c] sm:$0xf]
  %v2772 = vld [vmem:[%s12 + $0x40] sm:$0xf]
  %v2773 = vld [vmem:[%s12 + $0x44] sm:$0xf]
  %v2774 = vld [vmem:[%s12 + $0x48] sm:$0xf]
  %v2775 = vld [vmem:[%s12 + $0x4c] sm:$0xf]
  %v2776 = vld [vmem:[%s12 + $0x50] sm:$0xf]
  %v2777 = vld [vmem:[%s12 + $0x54] sm:$0xf]
  %v2778 = vld [vmem:[%s12 + $0x58] sm:$0xf]
  %v2779 = vld [vmem:[%s12 + $0x5c] sm:$0xf]
  %v2780 = vld [vmem:[%s12 + $0x60] sm:$0xf]
  %v2781 = vld [vmem:[%s12 + $0x64] sm:$0xf]
  %v2782 = vld [vmem:[%s12 + $0x68] sm:$0xf]
  %v2783 = vld [vmem:[%s12 + $0x6c] sm:$0xf]
  %v2784 = vld [vmem:[%s12 + $0x70] sm:$0xf]
  %v2785 = vld [vmem:[%s12 + $0x74] sm:$0xf]
  %v2786 = vld [vmem:[%s12 + $0x78] sm:$0xf]
  %v2787 = vld [vmem:[%s12 + $0x7c] sm:$0xf]
  %v2788 = vpack.c.bf16 %v2754, %v2754
  %v2789 = vpack.c.bf16 %v2755, %v2755
  %v2790 = vld [vmem:[%s13 + $0x6] sm:$0x1]
  %v2792 = vlaneseq
  %v2793 = vshrl.u32 %v2792, 7
  %v2794 = vsub.s32 0, %v2793
  %v2795 = vrot.slane %v2790, %v2794
  %v2829 = vunpack.c.l.b16 %v2756
  %v2830 = vunpack.c.l.b16 %v2757
  %v2831 = vunpack.c.l.b16 %v2758
  %v2832 = vunpack.c.l.b16 %v2759
  %v2833 = vunpack.c.l.b16 %v2760
  %v2834 = vunpack.c.l.b16 %v2761
  %v2835 = vunpack.c.l.b16 %v2762
  %v2836 = vunpack.c.l.b16 %v2763
  %v2837 = vunpack.c.l.b16 %v2764
  %v2838 = vunpack.c.l.b16 %v2765
  %v2839 = vunpack.c.l.b16 %v2766
  %v2840 = vunpack.c.l.b16 %v2767
  %v2841 = vunpack.c.l.b16 %v2768
  %v2842 = vunpack.c.l.b16 %v2769
  %v2843 = vunpack.c.l.b16 %v2770
  %v2844 = vunpack.c.l.b16 %v2771
  %v2845 = vunpack.c.l.b16 %v2772
  %v2846 = vunpack.c.l.b16 %v2773
  %v2847 = vunpack.c.l.b16 %v2774
  %v2848 = vunpack.c.l.b16 %v2775
  %v2849 = vunpack.c.l.b16 %v2776
  %v2850 = vunpack.c.l.b16 %v2777
  %v2851 = vunpack.c.l.b16 %v2778
  %v2852 = vunpack.c.l.b16 %v2779
  %v2853 = vunpack.c.l.b16 %v2780
  %v2854 = vunpack.c.l.b16 %v2781
  %v2855 = vunpack.c.l.b16 %v2782
  %v2856 = vunpack.c.l.b16 %v2783
  %v2857 = vunpack.c.l.b16 %v2784
  %v2858 = vunpack.c.l.b16 %v2785
  %v2859 = vunpack.c.l.b16 %v2786
  %v2860 = vunpack.c.l.b16 %v2787
  %v2861 = vpack.c.b16 %v2830, %v2829
  %v2862 = vpack.c.b16 %v2832, %v2831
  %v2863 = vpack.c.b16 %v2834, %v2833
  %v2864 = vpack.c.b16 %v2836, %v2835
  %v2865 = vpack.c.b16 %v2838, %v2837
  %v2866 = vpack.c.b16 %v2840, %v2839
  %v2867 = vpack.c.b16 %v2842, %v2841
  %v2868 = vpack.c.b16 %v2844, %v2843
  %v2869 = vpack.c.b16 %v2846, %v2845
  %v2870 = vpack.c.b16 %v2848, %v2847
  %v2871 = vpack.c.b16 %v2850, %v2849
  %v2872 = vpack.c.b16 %v2852, %v2851
  %v2873 = vpack.c.b16 %v2854, %v2853
  %v2874 = vpack.c.b16 %v2856, %v2855
  %v2875 = vpack.c.b16 %v2858, %v2857
  %v2876 = vpack.c.b16 %v2860, %v2859
  %2893 = vmatprep.subr.bf16.mxu0 0
  %2894 = vmatpush1.bf16.msra.mxu0 %v2861
  %2895 = vmatprep.subr.bf16.mxu0 0
  %2896 = vmatpush1.bf16.msra.mxu0 %v2862
  %2897 = vmatprep.subr.bf16.mxu0 0
  %2898 = vmatpush1.bf16.msra.mxu0 %v2863
  %2899 = vmatprep.subr.bf16.mxu0 0
  %2900 = vmatpush1.bf16.msra.mxu0 %v2864
  %2901 = vmatprep.subr.bf16.mxu0 0
  %2902 = vmatpush1.bf16.msra.mxu0 %v2865
  %2903 = vmatprep.subr.bf16.mxu0 0
  %2904 = vmatpush1.bf16.msra.mxu0 %v2866
  %2905 = vmatprep.subr.bf16.mxu0 0
  %2906 = vmatpush1.bf16.msra.mxu0 %v2867
  %2907 = vmatprep.subr.bf16.mxu0 0
  %2908 = vmatpush1.bf16.msra.mxu0 %v2868
  %2909 = vmatprep.subr.bf16.mxu0 0
  %2910 = vmatpush1.bf16.msra.mxu0 %v2869
  %2911 = vmatprep.subr.bf16.mxu0 0
  %2912 = vmatpush1.bf16.msra.mxu0 %v2870
  %2913 = vmatprep.subr.bf16.mxu0 0
  %2914 = vmatpush1.bf16.msra.mxu0 %v2871
  %2915 = vmatprep.subr.bf16.mxu0 0
  %2916 = vmatpush1.bf16.msra.mxu0 %v2872
  %2917 = vmatprep.subr.bf16.mxu0 0
  %2918 = vmatpush1.bf16.msra.mxu0 %v2873
  %2919 = vmatprep.subr.bf16.mxu0 0
  %2920 = vmatpush1.bf16.msra.mxu0 %v2874
  %2921 = vmatprep.subr.bf16.mxu0 0
  %2922 = vmatpush1.bf16.msra.mxu0 %v2875
  %2923 = vmatprep.subr.bf16.mxu0 0
  %2924 = vmatpush1.bf16.msra.mxu0 %v2876
  %2925 = vmatprep.mubr.bf16.mxu0 %v2789
  %2926 = vmatmul.mubr.bf16.gmra.mrb[0].mxu0 %v2788
  %v2927 = vpop.f32.mrb[0].mxu0
  %v2928 = vadd.f32 %v2795, %v2927
  %v2929 = vpop.f32.mrb[0].mxu0
  %v2930 = vpop.f32.mrb[0].mxu0
  %v2931 = vpop.f32.mrb[0].mxu0
  %2932 = vdwg.mxu0
  %2933 = vst [vmem:[%s14] sm:$0xff] %v2928
  // Predicated region
  $region58: #{forward.1} parent=0 // pred_check
    _
  $region59: #{forward.1} parent=0 // pred_check_branch
    %2935 = sbr.rel (0) target = $region61
  $region60: #{forward.1} parent=0 // pred_region
    _
  $region61: #{forward.1} parent=0 // pred_fallthru
    _
  // Predicated region
  $region62: #{forward.1} parent=0 // pred_check
    _
  $region63: #{forward.1} parent=0 // pred_check_branch
    %2937 = sbr.rel (0) target = $region65
  $region64: #{forward.1} parent=0 // pred_region
    _
  $region65: #{forward.1} parent=0 // pred_fallthru
    _

</llo_original>
